<compile_context>
chip_gen: v7x
topology: tpu7x:2x2x1
jax: 0.10.0
libtpu: 0.0.40
codegen_flags: <defaults>
</compile_context>

<pallas_src>
import numpy as np
import jax
import jax.numpy as jnp
from jax import lax
from jax.experimental import pallas as pl
from jax.experimental.pallas import tpu as pltpu


# ----------------------------- schedule (host side, plain numpy) -----------------------------
def cosine_beta_schedule(timesteps, s=0.008):
    steps = timesteps + 1
    x = np.linspace(0, steps, steps)
    alphas_cumprod = np.cos(((x / steps) + s) / (1 + s) * np.pi * 0.5) ** 2
    alphas_cumprod = alphas_cumprod / alphas_cumprod[0]
    betas = 1.0 - (alphas_cumprod[1:] / alphas_cumprod[:-1])
    return np.clip(betas, 0.0, 0.999)


def make_schedule(n_timesteps):
    betas = cosine_beta_schedule(n_timesteps).astype(np.float64)
    alphas = 1.0 - betas
    ac = np.cumprod(alphas)
    ac_prev = np.concatenate([np.ones(1), ac[:-1]])
    post_var = betas * (1.0 - ac_prev) / (1.0 - ac)
    post_logvar = np.log(np.clip(post_var, 1e-20, None))
    # p_sample: x = mean + (t>0) * exp(0.5*logvar) * (0.5 * randn)
    # -> fold the nonzero mask, the 0.5 noise scale and the exp into one table.
    t_idx = np.arange(n_timesteps)
    noise_scale = np.where(t_idx == 0, 0.0, 0.5 * np.exp(0.5 * post_logvar))
    sched = dict(
        sqrt_recip_alphas_cumprod=np.sqrt(1.0 / ac),
        sqrt_recipm1_alphas_cumprod=np.sqrt(1.0 / ac - 1.0),
        posterior_mean_coef1=betas * np.sqrt(ac_prev) / (1.0 - ac),
        posterior_mean_coef2=(1.0 - ac_prev) * np.sqrt(alphas) / (1.0 - ac),
        noise_scale=noise_scale,
    )
    return {k: jnp.asarray(v, jnp.float32) for k, v in sched.items()}


# ----------------------------------- Pallas kernel --------------------------------------------
def p_sample_loop_kernel(
    sra_ref, srm1_ref, c1_ref, c2_ref, nscale_ref,     # SMEM (T,) schedule tables
    x0_ref, cond_ref,                                  # VMEM (B,A), (B,O)
    w1x_ref, w1c_ref, b1t_ref, w2_ref, b2_ref,         # VMEM MLP weights + (T,1,H) bias table
    z_ref,                                             # VMEM (T,B,A) per-step std-normal noise
    out_ref,                                           # VMEM (B,A) final sample
):
    T = z_ref.shape[0]

    # Conditioning contribution is invariant across diffusion steps -> compute once.
    h_cond = jnp.dot(cond_ref[...], w1c_ref[...], preferred_element_type=jnp.float32)
    w1x = w1x_ref[...]
    w2 = w2_ref[...]
    b2 = b2_ref[...]

    def step(k, x):
        t = T - 1 - k                                  # reversed(range(n_timesteps))
        # --- synthetic epsilon model: relu(x@W1x + cond@W1c + b1_t[t]) @ W2 + b2 ---
        h = (jnp.dot(x, w1x, preferred_element_type=jnp.float32)
             + h_cond
             + b1t_ref[t])                             # (1, H) row, broadcasts over batch
        h = jnp.maximum(h, 0.0)
        eps = jnp.dot(h, w2, preferred_element_type=jnp.float32) + b2

        # --- predict_start_from_noise (predict_epsilon=True, clip_denoised=False) ---
        x_recon = sra_ref[t] * x - srm1_ref[t] * eps

        # --- q_posterior mean + p_sample update (mask & 0.5 & exp pre-folded) ---
        mean = c1_ref[t] * x_recon + c2_ref[t] * x
        return mean + nscale_ref[t] * z_ref[t]

    out_ref[...] = lax.fori_loop(0, T, step, x0_ref[...], unroll=True)


# ----------------------------------- wrapper ---------------------------------------------------
def action_diffusion_sample(x_init, cond, weights, schedule, z):
    """Runs the full reverse-diffusion loop for the action vector in one pallas_call."""
    B, A = x_init.shape
    T = z.shape[0]
    H = weights["W1x"].shape[1]

    # Per-timestep first-layer bias table: b1 + sin(0.1 t)*W1t[0] + cos(0.1 t)*W1t[1].
    tt = jnp.arange(T, dtype=jnp.float32) * 0.1
    b1t = (weights["b1"]
           + jnp.sin(tt)[:, None] * weights["W1t"][0:1, :]
           + jnp.cos(tt)[:, None] * weights["W1t"][1:2, :])          # (T, H)
    b1t = b1t.reshape(T, 1, H)   # dynamic index stays on a leading (untiled) dim

    smem = pl.BlockSpec(memory_space=pltpu.MemorySpace.SMEM)
    vmem = pl.BlockSpec(memory_space=pltpu.MemorySpace.VMEM)

    return pl.pallas_call(
        p_sample_loop_kernel,
        out_shape=jax.ShapeDtypeStruct((B, A), jnp.float32),
        in_specs=[smem] * 5 + [vmem] * 8,
        out_specs=vmem,
    )(
        schedule["sqrt_recip_alphas_cumprod"],
        schedule["sqrt_recipm1_alphas_cumprod"],
        schedule["posterior_mean_coef1"],
        schedule["posterior_mean_coef2"],
        schedule["noise_scale"],
        x_init,
        cond,
        weights["W1x"],
        weights["W1c"],
        b1t,
        weights["W2"],
        weights["b2"],
        z,
    )


# ----------------------------------- pure-JAX reference ----------------------------------------
def reference_sample(x_init, cond, weights, schedule, z):
    T = z.shape[0]
    hp = lax.Precision.HIGHEST

    def eps_model(x, t):
        tf = jnp.float32(t) * 0.1
        h = (jnp.dot(x, weights["W1x"], precision=hp)
             + jnp.dot(cond, weights["W1c"], precision=hp)
             + jnp.sin(tf) * weights["W1t"][0:1, :]
             + jnp.cos(tf) * weights["W1t"][1:2, :]
             + weights["b1"])
        h = jnp.maximum(h, 0.0)
        return jnp.dot(h, weights["W2"], precision=hp) + weights["b2"]

    x = x_init
    for t in reversed(range(T)):
        eps = eps_model(x, t)
        x_recon = (schedule["sqrt_recip_alphas_cumprod"][t] * x
                   - schedule["sqrt_recipm1_alphas_cumprod"][t] * eps)
        mean = (schedule["posterior_mean_coef1"][t] * x_recon
                + schedule["posterior_mean_coef2"][t] * x)
        x = mean + schedule["noise_scale"][t] * z[t]
    return x


# ----------------------------------- main --------------------------------------------------------
if __name__ == "__main__":
    # Small, module-consistent shapes.
    B = 8            # batch (len(cond[0]))
    A = 4            # action_dim  -> sample shape (B, action_dim)
    O = 12           # observation_dim (the conditioning state)
    H = 32           # synthetic epsilon-model hidden width
    T = 16           # n_timesteps (kept small for the demo)

    key = jax.random.PRNGKey(0)
    k_x, k_z, k_c, k_w1x, k_w1c, k_w1t, k_w2 = jax.random.split(key, 7)

    # initial sample:  x = 0.5 * randn(shape)   (p_sample_loop)
    x_init = 0.5 * jax.random.normal(k_x, (B, A), dtype=jnp.float32)
    # per-step noise:  raw randn_like(x); the 0.5 scale is folded into noise_scale[t]
    z = jax.random.normal(k_z, (T, B, A), dtype=jnp.float32)
    # conditioning state cond[0] : (B, observation_dim)
    cond = jax.random.normal(k_c, (B, O), dtype=jnp.float32)

    # deterministic synthetic epsilon-model weights
    # TODO(synk): the reference uses an external transformer `self.model`; a small MLP stands in here.
    weights = {
        "W1x": 0.1 * jax.random.normal(k_w1x, (A, H), dtype=jnp.float32),
        "W1c": 0.1 * jax.random.normal(k_w1c, (O, H), dtype=jnp.float32),
        "W1t": 0.1 * jax.random.normal(k_w1t, (2, H), dtype=jnp.float32),
        "b1": jnp.zeros((1, H), dtype=jnp.float32),
        "W2": 0.1 * jax.random.normal(k_w2, (H, A), dtype=jnp.float32),
        "b2": jnp.zeros((1, A), dtype=jnp.float32),
    }

    schedule = make_schedule(T)

    out = action_diffusion_sample(x_init, cond, weights, schedule, z)
    out = jax.block_until_ready(out)

    ref = jax.block_until_ready(reference_sample(x_init, cond, weights, schedule, z))

    assert out.shape == (B, A)
    assert bool(jnp.all(jnp.isfinite(out)))
    assert bool(jnp.allclose(out, ref, atol=5e-3, rtol=5e-3))
    print("KERNEL_OK")
</pallas_src>

<mosaic_0001>
module attributes {stable_mosaic.version = 11 : i64} {
  func.func @p_sample_loop_kernel(%arg0: memref<16xf32, #tpu.memory_space<smem>>, %arg1: memref<16xf32, #tpu.memory_space<smem>>, %arg2: memref<16xf32, #tpu.memory_space<smem>>, %arg3: memref<16xf32, #tpu.memory_space<smem>>, %arg4: memref<16xf32, #tpu.memory_space<smem>>, %arg5: memref<8x4xf32, #tpu.memory_space<vmem>>, %arg6: memref<8x12xf32, #tpu.memory_space<vmem>>, %arg7: memref<4x32xf32, #tpu.memory_space<vmem>>, %arg8: memref<12x32xf32, #tpu.memory_space<vmem>>, %arg9: memref<16x1x32xf32, #tpu.memory_space<vmem>>, %arg10: memref<32x4xf32, #tpu.memory_space<vmem>>, %arg11: memref<1x4xf32, #tpu.memory_space<vmem>>, %arg12: memref<16x8x4xf32, #tpu.memory_space<vmem>>, %arg13: memref<8x4xf32, #tpu.memory_space<vmem>>) attributes {dimension_semantics = [], scalar_prefetch = 0 : i64, scratch_operands = 0 : i64, tpu.core_type = #tpu.core_type<tc>} {
    %c0 = arith.constant 0 : index
    %c0_0 = arith.constant 0 : index
    %0 = vector.load %arg6[%c0, %c0_0] : memref<8x12xf32, #tpu.memory_space<vmem>>, vector<8x12xf32>
    %c0_1 = arith.constant 0 : index
    %c0_2 = arith.constant 0 : index
    %1 = vector.load %arg8[%c0_1, %c0_2] : memref<12x32xf32, #tpu.memory_space<vmem>>, vector<12x32xf32>
    %cst = arith.constant dense<0.000000e+00> : vector<8x32xf32>
    %2 = tpu.matmul %0, %1, %cst {dimension_numbers = #tpu.dot_dimension_numbers<[1], [0], [0], [1], [0, 0, 1, 1], [], []>} : vector<8x12xf32>, vector<12x32xf32>, vector<8x32xf32> -> vector<8x32xf32>
    %c0_3 = arith.constant 0 : index
    %c0_4 = arith.constant 0 : index
    %3 = vector.load %arg7[%c0_3, %c0_4] : memref<4x32xf32, #tpu.memory_space<vmem>>, vector<4x32xf32>
    %c0_5 = arith.constant 0 : index
    %c0_6 = arith.constant 0 : index
    %4 = vector.load %arg10[%c0_5, %c0_6] : memref<32x4xf32, #tpu.memory_space<vmem>>, vector<32x4xf32>
    %c0_7 = arith.constant 0 : index
    %c0_8 = arith.constant 0 : index
    %5 = vector.load %arg11[%c0_7, %c0_8] : memref<1x4xf32, #tpu.memory_space<vmem>>, vector<1x4xf32>
    %c0_9 = arith.constant 0 : index
    %c0_10 = arith.constant 0 : index
    %6 = vector.load %arg5[%c0_9, %c0_10] : memref<8x4xf32, #tpu.memory_space<vmem>>, vector<8x4xf32>
    %c0_i32 = arith.constant 0 : i32
    %c15_i32 = arith.constant 15 : i32
    %7 = arith.subi %c15_i32, %c0_i32 : i32
    %cst_11 = arith.constant dense<0.000000e+00> : vector<8x32xf32>
    %8 = tpu.matmul %6, %3, %cst_11 {dimension_numbers = #tpu.dot_dimension_numbers<[1], [0], [0], [1], [0, 0, 1, 1], [], []>} : vector<8x4xf32>, vector<4x32xf32>, vector<8x32xf32> -> vector<8x32xf32>
    %9 = arith.addf %8, %2 : vector<8x32xf32>
    %10 = arith.index_cast %7 : i32 to index
    %c0_12 = arith.constant 0 : index
    %c0_13 = arith.constant 0 : index
    %11 = vector.load %arg9[%10, %c0_12, %c0_13] : memref<16x1x32xf32, #tpu.memory_space<vmem>>, vector<1x1x32xf32>
    %12 = vector.shape_cast %11 : vector<1x1x32xf32> to vector<1x32xf32>
    %13 = vector.broadcast %12 : vector<1x32xf32> to vector<8x32xf32>
    %14 = arith.addf %9, %13 : vector<8x32xf32>
    %cst_14 = arith.constant 0.000000e+00 : f32
    %15 = vector.broadcast %cst_14 : f32 to vector<8x32xf32>
    %16 = arith.maximumf %14, %15 : vector<8x32xf32>
    %cst_15 = arith.constant dense<0.000000e+00> : vector<8x4xf32>
    %17 = tpu.matmul %16, %4, %cst_15 {dimension_numbers = #tpu.dot_dimension_numbers<[1], [0], [0], [1], [0, 0, 1, 1], [], []>} : vector<8x32xf32>, vector<32x4xf32>, vector<8x4xf32> -> vector<8x4xf32>
    %18 = vector.broadcast %5 : vector<1x4xf32> to vector<8x4xf32>
    %19 = arith.addf %17, %18 : vector<8x4xf32>
    %20 = arith.index_cast %7 : i32 to index
    %21 = memref.load %arg0[%20] : memref<16xf32, #tpu.memory_space<smem>>
    %22 = vector.broadcast %21 : f32 to vector<8x4xf32>
    %23 = arith.mulf %22, %6 : vector<8x4xf32>
    %24 = arith.index_cast %7 : i32 to index
    %25 = memref.load %arg1[%24] : memref<16xf32, #tpu.memory_space<smem>>
    %26 = vector.broadcast %25 : f32 to vector<8x4xf32>
    %27 = arith.mulf %26, %19 : vector<8x4xf32>
    %28 = arith.subf %23, %27 : vector<8x4xf32>
    %29 = arith.index_cast %7 : i32 to index
    %30 = memref.load %arg2[%29] : memref<16xf32, #tpu.memory_space<smem>>
    %31 = vector.broadcast %30 : f32 to vector<8x4xf32>
    %32 = arith.mulf %31, %28 : vector<8x4xf32>
    %33 = arith.index_cast %7 : i32 to index
    %34 = memref.load %arg3[%33] : memref<16xf32, #tpu.memory_space<smem>>
    %35 = vector.broadcast %34 : f32 to vector<8x4xf32>
    %36 = arith.mulf %35, %6 : vector<8x4xf32>
    %37 = arith.addf %32, %36 : vector<8x4xf32>
    %38 = arith.index_cast %7 : i32 to index
    %39 = memref.load %arg4[%38] : memref<16xf32, #tpu.memory_space<smem>>
    %40 = arith.index_cast %7 : i32 to index
    %c0_16 = arith.constant 0 : index
    %c0_17 = arith.constant 0 : index
    %41 = vector.load %arg12[%40, %c0_16, %c0_17] : memref<16x8x4xf32, #tpu.memory_space<vmem>>, vector<1x8x4xf32>
    %42 = vector.shape_cast %41 : vector<1x8x4xf32> to vector<8x4xf32>
    %43 = vector.broadcast %39 : f32 to vector<8x4xf32>
    %44 = arith.mulf %43, %42 : vector<8x4xf32>
    %45 = arith.addf %37, %44 : vector<8x4xf32>
    %c1_i32 = arith.constant 1 : i32
    %c15_i32_18 = arith.constant 15 : i32
    %46 = arith.subi %c15_i32_18, %c1_i32 : i32
    %cst_19 = arith.constant dense<0.000000e+00> : vector<8x32xf32>
    %47 = tpu.matmul %45, %3, %cst_19 {dimension_numbers = #tpu.dot_dimension_numbers<[1], [0], [0], [1], [0, 0, 1, 1], [], []>} : vector<8x4xf32>, vector<4x32xf32>, vector<8x32xf32> -> vector<8x32xf32>
    %48 = arith.addf %47, %2 : vector<8x32xf32>
    %49 = arith.index_cast %46 : i32 to index
    %c0_20 = arith.constant 0 : index
    %c0_21 = arith.constant 0 : index
    %50 = vector.load %arg9[%49, %c0_20, %c0_21] : memref<16x1x32xf32, #tpu.memory_space<vmem>>, vector<1x1x32xf32>
    %51 = vector.shape_cast %50 : vector<1x1x32xf32> to vector<1x32xf32>
    %52 = vector.broadcast %51 : vector<1x32xf32> to vector<8x32xf32>
    %53 = arith.addf %48, %52 : vector<8x32xf32>
    %cst_22 = arith.constant 0.000000e+00 : f32
    %54 = vector.broadcast %cst_22 : f32 to vector<8x32xf32>
    %55 = arith.maximumf %53, %54 : vector<8x32xf32>
    %cst_23 = arith.constant dense<0.000000e+00> : vector<8x4xf32>
    %56 = tpu.matmul %55, %4, %cst_23 {dimension_numbers = #tpu.dot_dimension_numbers<[1], [0], [0], [1], [0, 0, 1, 1], [], []>} : vector<8x32xf32>, vector<32x4xf32>, vector<8x4xf32> -> vector<8x4xf32>
    %57 = vector.broadcast %5 : vector<1x4xf32> to vector<8x4xf32>
    %58 = arith.addf %56, %57 : vector<8x4xf32>
    %59 = arith.index_cast %46 : i32 to index
    %60 = memref.load %arg0[%59] : memref<16xf32, #tpu.memory_space<smem>>
    %61 = vector.broadcast %60 : f32 to vector<8x4xf32>
    %62 = arith.mulf %61, %45 : vector<8x4xf32>
    %63 = arith.index_cast %46 : i32 to index
    %64 = memref.load %arg1[%63] : memref<16xf32, #tpu.memory_space<smem>>
    %65 = vector.broadcast %64 : f32 to vector<8x4xf32>
    %66 = arith.mulf %65, %58 : vector<8x4xf32>
    %67 = arith.subf %62, %66 : vector<8x4xf32>
    %68 = arith.index_cast %46 : i32 to index
    %69 = memref.load %arg2[%68] : memref<16xf32, #tpu.memory_space<smem>>
    %70 = vector.broadcast %69 : f32 to vector<8x4xf32>
    %71 = arith.mulf %70, %67 : vector<8x4xf32>
    %72 = arith.index_cast %46 : i32 to index
    %73 = memref.load %arg3[%72] : memref<16xf32, #tpu.memory_space<smem>>
    %74 = vector.broadcast %73 : f32 to vector<8x4xf32>
    %75 = arith.mulf %74, %45 : vector<8x4xf32>
    %76 = arith.addf %71, %75 : vector<8x4xf32>
    %77 = arith.index_cast %46 : i32 to index
    %78 = memref.load %arg4[%77] : memref<16xf32, #tpu.memory_space<smem>>
    %79 = arith.index_cast %46 : i32 to index
    %c0_24 = arith.constant 0 : index
    %c0_25 = arith.constant 0 : index
    %80 = vector.load %arg12[%79, %c0_24, %c0_25] : memref<16x8x4xf32, #tpu.memory_space<vmem>>, vector<1x8x4xf32>
    %81 = vector.shape_cast %80 : vector<1x8x4xf32> to vector<8x4xf32>
    %82 = vector.broadcast %78 : f32 to vector<8x4xf32>
    %83 = arith.mulf %82, %81 : vector<8x4xf32>
    %84 = arith.addf %76, %83 : vector<8x4xf32>
    %c2_i32 = arith.constant 2 : i32
    %c15_i32_26 = arith.constant 15 : i32
    %85 = arith.subi %c15_i32_26, %c2_i32 : i32
    %cst_27 = arith.constant dense<0.000000e+00> : vector<8x32xf32>
    %86 = tpu.matmul %84, %3, %cst_27 {dimension_numbers = #tpu.dot_dimension_numbers<[1], [0], [0], [1], [0, 0, 1, 1], [], []>} : vector<8x4xf32>, vector<4x32xf32>, vector<8x32xf32> -> vector<8x32xf32>
    %87 = arith.addf %86, %2 : vector<8x32xf32>
    %88 = arith.index_cast %85 : i32 to index
    %c0_28 = arith.constant 0 : index
    %c0_29 = arith.constant 0 : index
    %89 = vector.load %arg9[%88, %c0_28, %c0_29] : memref<16x1x32xf32, #tpu.memory_space<vmem>>, vector<1x1x32xf32>
    %90 = vector.shape_cast %89 : vector<1x1x32xf32> to vector<1x32xf32>
    %91 = vector.broadcast %90 : vector<1x32xf32> to vector<8x32xf32>
    %92 = arith.addf %87, %91 : vector<8x32xf32>
    %cst_30 = arith.constant 0.000000e+00 : f32
    %93 = vector.broadcast %cst_30 : f32 to vector<8x32xf32>
    %94 = arith.maximumf %92, %93 : vector<8x32xf32>
    %cst_31 = arith.constant dense<0.000000e+00> : vector<8x4xf32>
    %95 = tpu.matmul %94, %4, %cst_31 {dimension_numbers = #tpu.dot_dimension_numbers<[1], [0], [0], [1], [0, 0, 1, 1], [], []>} : vector<8x32xf32>, vector<32x4xf32>, vector<8x4xf32> -> vector<8x4xf32>
    %96 = vector.broadcast %5 : vector<1x4xf32> to vector<8x4xf32>
    %97 = arith.addf %95, %96 : vector<8x4xf32>
    %98 = arith.index_cast %85 : i32 to index
    %99 = memref.load %arg0[%98] : memref<16xf32, #tpu.memory_space<smem>>
    %100 = vector.broadcast %99 : f32 to vector<8x4xf32>
    %101 = arith.mulf %100, %84 : vector<8x4xf32>
    %102 = arith.index_cast %85 : i32 to index
    %103 = memref.load %arg1[%102] : memref<16xf32, #tpu.memory_space<smem>>
    %104 = vector.broadcast %103 : f32 to vector<8x4xf32>
    %105 = arith.mulf %104, %97 : vector<8x4xf32>
    %106 = arith.subf %101, %105 : vector<8x4xf32>
    %107 = arith.index_cast %85 : i32 to index
    %108 = memref.load %arg2[%107] : memref<16xf32, #tpu.memory_space<smem>>
    %109 = vector.broadcast %108 : f32 to vector<8x4xf32>
    %110 = arith.mulf %109, %106 : vector<8x4xf32>
    %111 = arith.index_cast %85 : i32 to index
    %112 = memref.load %arg3[%111] : memref<16xf32, #tpu.memory_space<smem>>
    %113 = vector.broadcast %112 : f32 to vector<8x4xf32>
    %114 = arith.mulf %113, %84 : vector<8x4xf32>
    %115 = arith.addf %110, %114 : vector<8x4xf32>
    %116 = arith.index_cast %85 : i32 to index
    %117 = memref.load %arg4[%116] : memref<16xf32, #tpu.memory_space<smem>>
    %118 = arith.index_cast %85 : i32 to index
    %c0_32 = arith.constant 0 : index
    %c0_33 = arith.constant 0 : index
    %119 = vector.load %arg12[%118, %c0_32, %c0_33] : memref<16x8x4xf32, #tpu.memory_space<vmem>>, vector<1x8x4xf32>
    %120 = vector.shape_cast %119 : vector<1x8x4xf32> to vector<8x4xf32>
    %121 = vector.broadcast %117 : f32 to vector<8x4xf32>
    %122 = arith.mulf %121, %120 : vector<8x4xf32>
    %123 = arith.addf %115, %122 : vector<8x4xf32>
    %c3_i32 = arith.constant 3 : i32
    %c15_i32_34 = arith.constant 15 : i32
    %124 = arith.subi %c15_i32_34, %c3_i32 : i32
    %cst_35 = arith.constant dense<0.000000e+00> : vector<8x32xf32>
    %125 = tpu.matmul %123, %3, %cst_35 {dimension_numbers = #tpu.dot_dimension_numbers<[1], [0], [0], [1], [0, 0, 1, 1], [], []>} : vector<8x4xf32>, vector<4x32xf32>, vector<8x32xf32> -> vector<8x32xf32>
    %126 = arith.addf %125, %2 : vector<8x32xf32>
    %127 = arith.index_cast %124 : i32 to index
    %c0_36 = arith.constant 0 : index
    %c0_37 = arith.constant 0 : index
    %128 = vector.load %arg9[%127, %c0_36, %c0_37] : memref<16x1x32xf32, #tpu.memory_space<vmem>>, vector<1x1x32xf32>
    %129 = vector.shape_cast %128 : vector<1x1x32xf32> to vector<1x32xf32>
    %130 = vector.broadcast %129 : vector<1x32xf32> to vector<8x32xf32>
    %131 = arith.addf %126, %130 : vector<8x32xf32>
    %cst_38 = arith.constant 0.000000e+00 : f32
    %132 = vector.broadcast %cst_38 : f32 to vector<8x32xf32>
    %133 = arith.maximumf %131, %132 : vector<8x32xf32>
    %cst_39 = arith.constant dense<0.000000e+00> : vector<8x4xf32>
    %134 = tpu.matmul %133, %4, %cst_39 {dimension_numbers = #tpu.dot_dimension_numbers<[1], [0], [0], [1], [0, 0, 1, 1], [], []>} : vector<8x32xf32>, vector<32x4xf32>, vector<8x4xf32> -> vector<8x4xf32>
    %135 = vector.broadcast %5 : vector<1x4xf32> to vector<8x4xf32>
    %136 = arith.addf %134, %135 : vector<8x4xf32>
    %137 = arith.index_cast %124 : i32 to index
    %138 = memref.load %arg0[%137] : memref<16xf32, #tpu.memory_space<smem>>
    %139 = vector.broadcast %138 : f32 to vector<8x4xf32>
    %140 = arith.mulf %139, %123 : vector<8x4xf32>
    %141 = arith.index_cast %124 : i32 to index
    %142 = memref.load %arg1[%141] : memref<16xf32, #tpu.memory_space<smem>>
    %143 = vector.broadcast %142 : f32 to vector<8x4xf32>
    %144 = arith.mulf %143, %136 : vector<8x4xf32>
    %145 = arith.subf %140, %144 : vector<8x4xf32>
    %146 = arith.index_cast %124 : i32 to index
    %147 = memref.load %arg2[%146] : memref<16xf32, #tpu.memory_space<smem>>
    %148 = vector.broadcast %147 : f32 to vector<8x4xf32>
    %149 = arith.mulf %148, %145 : vector<8x4xf32>
    %150 = arith.index_cast %124 : i32 to index
    %151 = memref.load %arg3[%150] : memref<16xf32, #tpu.memory_space<smem>>
    %152 = vector.broadcast %151 : f32 to vector<8x4xf32>
    %153 = arith.mulf %152, %123 : vector<8x4xf32>
    %154 = arith.addf %149, %153 : vector<8x4xf32>
    %155 = arith.index_cast %124 : i32 to index
    %156 = memref.load %arg4[%155] : memref<16xf32, #tpu.memory_space<smem>>
    %157 = arith.index_cast %124 : i32 to index
    %c0_40 = arith.constant 0 : index
    %c0_41 = arith.constant 0 : index
    %158 = vector.load %arg12[%157, %c0_40, %c0_41] : memref<16x8x4xf32, #tpu.memory_space<vmem>>, vector<1x8x4xf32>
    %159 = vector.shape_cast %158 : vector<1x8x4xf32> to vector<8x4xf32>
    %160 = vector.broadcast %156 : f32 to vector<8x4xf32>
    %161 = arith.mulf %160, %159 : vector<8x4xf32>
    %162 = arith.addf %154, %161 : vector<8x4xf32>
    %c4_i32 = arith.constant 4 : i32
    %c15_i32_42 = arith.constant 15 : i32
    %163 = arith.subi %c15_i32_42, %c4_i32 : i32
    %cst_43 = arith.constant dense<0.000000e+00> : vector<8x32xf32>
    %164 = tpu.matmul %162, %3, %cst_43 {dimension_numbers = #tpu.dot_dimension_numbers<[1], [0], [0], [1], [0, 0, 1, 1], [], []>} : vector<8x4xf32>, vector<4x32xf32>, vector<8x32xf32> -> vector<8x32xf32>
    %165 = arith.addf %164, %2 : vector<8x32xf32>
    %166 = arith.index_cast %163 : i32 to index
    %c0_44 = arith.constant 0 : index
    %c0_45 = arith.constant 0 : index
    %167 = vector.load %arg9[%166, %c0_44, %c0_45] : memref<16x1x32xf32, #tpu.memory_space<vmem>>, vector<1x1x32xf32>
    %168 = vector.shape_cast %167 : vector<1x1x32xf32> to vector<1x32xf32>
    %169 = vector.broadcast %168 : vector<1x32xf32> to vector<8x32xf32>
    %170 = arith.addf %165, %169 : vector<8x32xf32>
    %cst_46 = arith.constant 0.000000e+00 : f32
    %171 = vector.broadcast %cst_46 : f32 to vector<8x32xf32>
    %172 = arith.maximumf %170, %171 : vector<8x32xf32>
    %cst_47 = arith.constant dense<0.000000e+00> : vector<8x4xf32>
    %173 = tpu.matmul %172, %4, %cst_47 {dimension_numbers = #tpu.dot_dimension_numbers<[1], [0], [0], [1], [0, 0, 1, 1], [], []>} : vector<8x32xf32>, vector<32x4xf32>, vector<8x4xf32> -> vector<8x4xf32>
    %174 = vector.broadcast %5 : vector<1x4xf32> to vector<8x4xf32>
    %175 = arith.addf %173, %174 : vector<8x4xf32>
    %176 = arith.index_cast %163 : i32 to index
    %177 = memref.load %arg0[%176] : memref<16xf32, #tpu.memory_space<smem>>
    %178 = vector.broadcast %177 : f32 to vector<8x4xf32>
    %179 = arith.mulf %178, %162 : vector<8x4xf32>
    %180 = arith.index_cast %163 : i32 to index
    %181 = memref.load %arg1[%180] : memref<16xf32, #tpu.memory_space<smem>>
    %182 = vector.broadcast %181 : f32 to vector<8x4xf32>
    %183 = arith.mulf %182, %175 : vector<8x4xf32>
    %184 = arith.subf %179, %183 : vector<8x4xf32>
    %185 = arith.index_cast %163 : i32 to index
    %186 = memref.load %arg2[%185] : memref<16xf32, #tpu.memory_space<smem>>
    %187 = vector.broadcast %186 : f32 to vector<8x4xf32>
    %188 = arith.mulf %187, %184 : vector<8x4xf32>
    %189 = arith.index_cast %163 : i32 to index
    %190 = memref.load %arg3[%189] : memref<16xf32, #tpu.memory_space<smem>>
    %191 = vector.broadcast %190 : f32 to vector<8x4xf32>
    %192 = arith.mulf %191, %162 : vector<8x4xf32>
    %193 = arith.addf %188, %192 : vector<8x4xf32>
    %194 = arith.index_cast %163 : i32 to index
    %195 = memref.load %arg4[%194] : memref<16xf32, #tpu.memory_space<smem>>
    %196 = arith.index_cast %163 : i32 to index
    %c0_48 = arith.constant 0 : index
    %c0_49 = arith.constant 0 : index
    %197 = vector.load %arg12[%196, %c0_48, %c0_49] : memref<16x8x4xf32, #tpu.memory_space<vmem>>, vector<1x8x4xf32>
    %198 = vector.shape_cast %197 : vector<1x8x4xf32> to vector<8x4xf32>
    %199 = vector.broadcast %195 : f32 to vector<8x4xf32>
    %200 = arith.mulf %199, %198 : vector<8x4xf32>
    %201 = arith.addf %193, %200 : vector<8x4xf32>
    %c5_i32 = arith.constant 5 : i32
    %c15_i32_50 = arith.constant 15 : i32
    %202 = arith.subi %c15_i32_50, %c5_i32 : i32
    %cst_51 = arith.constant dense<0.000000e+00> : vector<8x32xf32>
    %203 = tpu.matmul %201, %3, %cst_51 {dimension_numbers = #tpu.dot_dimension_numbers<[1], [0], [0], [1], [0, 0, 1, 1], [], []>} : vector<8x4xf32>, vector<4x32xf32>, vector<8x32xf32> -> vector<8x32xf32>
    %204 = arith.addf %203, %2 : vector<8x32xf32>
    %205 = arith.index_cast %202 : i32 to index
    %c0_52 = arith.constant 0 : index
    %c0_53 = arith.constant 0 : index
    %206 = vector.load %arg9[%205, %c0_52, %c0_53] : memref<16x1x32xf32, #tpu.memory_space<vmem>>, vector<1x1x32xf32>
    %207 = vector.shape_cast %206 : vector<1x1x32xf32> to vector<1x32xf32>
    %208 = vector.broadcast %207 : vector<1x32xf32> to vector<8x32xf32>
    %209 = arith.addf %204, %208 : vector<8x32xf32>
    %cst_54 = arith.constant 0.000000e+00 : f32
    %210 = vector.broadcast %cst_54 : f32 to vector<8x32xf32>
    %211 = arith.maximumf %209, %210 : vector<8x32xf32>
    %cst_55 = arith.constant dense<0.000000e+00> : vector<8x4xf32>
    %212 = tpu.matmul %211, %4, %cst_55 {dimension_numbers = #tpu.dot_dimension_numbers<[1], [0], [0], [1], [0, 0, 1, 1], [], []>} : vector<8x32xf32>, vector<32x4xf32>, vector<8x4xf32> -> vector<8x4xf32>
    %213 = vector.broadcast %5 : vector<1x4xf32> to vector<8x4xf32>
    %214 = arith.addf %212, %213 : vector<8x4xf32>
    %215 = arith.index_cast %202 : i32 to index
    %216 = memref.load %arg0[%215] : memref<16xf32, #tpu.memory_space<smem>>
    %217 = vector.broadcast %216 : f32 to vector<8x4xf32>
    %218 = arith.mulf %217, %201 : vector<8x4xf32>
    %219 = arith.index_cast %202 : i32 to index
    %220 = memref.load %arg1[%219] : memref<16xf32, #tpu.memory_space<smem>>
    %221 = vector.broadcast %220 : f32 to vector<8x4xf32>
    %222 = arith.mulf %221, %214 : vector<8x4xf32>
    %223 = arith.subf %218, %222 : vector<8x4xf32>
    %224 = arith.index_cast %202 : i32 to index
    %225 = memref.load %arg2[%224] : memref<16xf32, #tpu.memory_space<smem>>
    %226 = vector.broadcast %225 : f32 to vector<8x4xf32>
    %227 = arith.mulf %226, %223 : vector<8x4xf32>
    %228 = arith.index_cast %202 : i32 to index
    %229 = memref.load %arg3[%228] : memref<16xf32, #tpu.memory_space<smem>>
    %230 = vector.broadcast %229 : f32 to vector<8x4xf32>
    %231 = arith.mulf %230, %201 : vector<8x4xf32>
    %232 = arith.addf %227, %231 : vector<8x4xf32>
    %233 = arith.index_cast %202 : i32 to index
    %234 = memref.load %arg4[%233] : memref<16xf32, #tpu.memory_space<smem>>
    %235 = arith.index_cast %202 : i32 to index
    %c0_56 = arith.constant 0 : index
    %c0_57 = arith.constant 0 : index
    %236 = vector.load %arg12[%235, %c0_56, %c0_57] : memref<16x8x4xf32, #tpu.memory_space<vmem>>, vector<1x8x4xf32>
    %237 = vector.shape_cast %236 : vector<1x8x4xf32> to vector<8x4xf32>
    %238 = vector.broadcast %234 : f32 to vector<8x4xf32>
    %239 = arith.mulf %238, %237 : vector<8x4xf32>
    %240 = arith.addf %232, %239 : vector<8x4xf32>
    %c6_i32 = arith.constant 6 : i32
    %c15_i32_58 = arith.constant 15 : i32
    %241 = arith.subi %c15_i32_58, %c6_i32 : i32
    %cst_59 = arith.constant dense<0.000000e+00> : vector<8x32xf32>
    %242 = tpu.matmul %240, %3, %cst_59 {dimension_numbers = #tpu.dot_dimension_numbers<[1], [0], [0], [1], [0, 0, 1, 1], [], []>} : vector<8x4xf32>, vector<4x32xf32>, vector<8x32xf32> -> vector<8x32xf32>
    %243 = arith.addf %242, %2 : vector<8x32xf32>
    %244 = arith.index_cast %241 : i32 to index
    %c0_60 = arith.constant 0 : index
    %c0_61 = arith.constant 0 : index
    %245 = vector.load %arg9[%244, %c0_60, %c0_61] : memref<16x1x32xf32, #tpu.memory_space<vmem>>, vector<1x1x32xf32>
    %246 = vector.shape_cast %245 : vector<1x1x32xf32> to vector<1x32xf32>
    %247 = vector.broadcast %246 : vector<1x32xf32> to vector<8x32xf32>
    %248 = arith.addf %243, %247 : vector<8x32xf32>
    %cst_62 = arith.constant 0.000000e+00 : f32
    %249 = vector.broadcast %cst_62 : f32 to vector<8x32xf32>
    %250 = arith.maximumf %248, %249 : vector<8x32xf32>
    %cst_63 = arith.constant dense<0.000000e+00> : vector<8x4xf32>
    %251 = tpu.matmul %250, %4, %cst_63 {dimension_numbers = #tpu.dot_dimension_numbers<[1], [0], [0], [1], [0, 0, 1, 1], [], []>} : vector<8x32xf32>, vector<32x4xf32>, vector<8x4xf32> -> vector<8x4xf32>
    %252 = vector.broadcast %5 : vector<1x4xf32> to vector<8x4xf32>
    %253 = arith.addf %251, %252 : vector<8x4xf32>
    %254 = arith.index_cast %241 : i32 to index
    %255 = memref.load %arg0[%254] : memref<16xf32, #tpu.memory_space<smem>>
    %256 = vector.broadcast %255 : f32 to vector<8x4xf32>
    %257 = arith.mulf %256, %240 : vector<8x4xf32>
    %258 = arith.index_cast %241 : i32 to index
    %259 = memref.load %arg1[%258] : memref<16xf32, #tpu.memory_space<smem>>
    %260 = vector.broadcast %259 : f32 to vector<8x4xf32>
    %261 = arith.mulf %260, %253 : vector<8x4xf32>
    %262 = arith.subf %257, %261 : vector<8x4xf32>
    %263 = arith.index_cast %241 : i32 to index
    %264 = memref.load %arg2[%263] : memref<16xf32, #tpu.memory_space<smem>>
    %265 = vector.broadcast %264 : f32 to vector<8x4xf32>
    %266 = arith.mulf %265, %262 : vector<8x4xf32>
    %267 = arith.index_cast %241 : i32 to index
    %268 = memref.load %arg3[%267] : memref<16xf32, #tpu.memory_space<smem>>
    %269 = vector.broadcast %268 : f32 to vector<8x4xf32>
    %270 = arith.mulf %269, %240 : vector<8x4xf32>
    %271 = arith.addf %266, %270 : vector<8x4xf32>
    %272 = arith.index_cast %241 : i32 to index
    %273 = memref.load %arg4[%272] : memref<16xf32, #tpu.memory_space<smem>>
    %274 = arith.index_cast %241 : i32 to index
    %c0_64 = arith.constant 0 : index
    %c0_65 = arith.constant 0 : index
    %275 = vector.load %arg12[%274, %c0_64, %c0_65] : memref<16x8x4xf32, #tpu.memory_space<vmem>>, vector<1x8x4xf32>
    %276 = vector.shape_cast %275 : vector<1x8x4xf32> to vector<8x4xf32>
    %277 = vector.broadcast %273 : f32 to vector<8x4xf32>
    %278 = arith.mulf %277, %276 : vector<8x4xf32>
    %279 = arith.addf %271, %278 : vector<8x4xf32>
    %c7_i32 = arith.constant 7 : i32
    %c15_i32_66 = arith.constant 15 : i32
    %280 = arith.subi %c15_i32_66, %c7_i32 : i32
    %cst_67 = arith.constant dense<0.000000e+00> : vector<8x32xf32>
    %281 = tpu.matmul %279, %3, %cst_67 {dimension_numbers = #tpu.dot_dimension_numbers<[1], [0], [0], [1], [0, 0, 1, 1], [], []>} : vector<8x4xf32>, vector<4x32xf32>, vector<8x32xf32> -> vector<8x32xf32>
    %282 = arith.addf %281, %2 : vector<8x32xf32>
    %283 = arith.index_cast %280 : i32 to index
    %c0_68 = arith.constant 0 : index
    %c0_69 = arith.constant 0 : index
    %284 = vector.load %arg9[%283, %c0_68, %c0_69] : memref<16x1x32xf32, #tpu.memory_space<vmem>>, vector<1x1x32xf32>
    %285 = vector.shape_cast %284 : vector<1x1x32xf32> to vector<1x32xf32>
    %286 = vector.broadcast %285 : vector<1x32xf32> to vector<8x32xf32>
    %287 = arith.addf %282, %286 : vector<8x32xf32>
    %cst_70 = arith.constant 0.000000e+00 : f32
    %288 = vector.broadcast %cst_70 : f32 to vector<8x32xf32>
    %289 = arith.maximumf %287, %288 : vector<8x32xf32>
    %cst_71 = arith.constant dense<0.000000e+00> : vector<8x4xf32>
    %290 = tpu.matmul %289, %4, %cst_71 {dimension_numbers = #tpu.dot_dimension_numbers<[1], [0], [0], [1], [0, 0, 1, 1], [], []>} : vector<8x32xf32>, vector<32x4xf32>, vector<8x4xf32> -> vector<8x4xf32>
    %291 = vector.broadcast %5 : vector<1x4xf32> to vector<8x4xf32>
    %292 = arith.addf %290, %291 : vector<8x4xf32>
    %293 = arith.index_cast %280 : i32 to index
    %294 = memref.load %arg0[%293] : memref<16xf32, #tpu.memory_space<smem>>
    %295 = vector.broadcast %294 : f32 to vector<8x4xf32>
    %296 = arith.mulf %295, %279 : vector<8x4xf32>
    %297 = arith.index_cast %280 : i32 to index
    %298 = memref.load %arg1[%297] : memref<16xf32, #tpu.memory_space<smem>>
    %299 = vector.broadcast %298 : f32 to vector<8x4xf32>
    %300 = arith.mulf %299, %292 : vector<8x4xf32>
    %301 = arith.subf %296, %300 : vector<8x4xf32>
    %302 = arith.index_cast %280 : i32 to index
    %303 = memref.load %arg2[%302] : memref<16xf32, #tpu.memory_space<smem>>
    %304 = vector.broadcast %303 : f32 to vector<8x4xf32>
    %305 = arith.mulf %304, %301 : vector<8x4xf32>
    %306 = arith.index_cast %280 : i32 to index
    %307 = memref.load %arg3[%306] : memref<16xf32, #tpu.memory_space<smem>>
    %308 = vector.broadcast %307 : f32 to vector<8x4xf32>
    %309 = arith.mulf %308, %279 : vector<8x4xf32>
    %310 = arith.addf %305, %309 : vector<8x4xf32>
    %311 = arith.index_cast %280 : i32 to index
    %312 = memref.load %arg4[%311] : memref<16xf32, #tpu.memory_space<smem>>
    %313 = arith.index_cast %280 : i32 to index
    %c0_72 = arith.constant 0 : index
    %c0_73 = arith.constant 0 : index
    %314 = vector.load %arg12[%313, %c0_72, %c0_73] : memref<16x8x4xf32, #tpu.memory_space<vmem>>, vector<1x8x4xf32>
    %315 = vector.shape_cast %314 : vector<1x8x4xf32> to vector<8x4xf32>
    %316 = vector.broadcast %312 : f32 to vector<8x4xf32>
    %317 = arith.mulf %316, %315 : vector<8x4xf32>
    %318 = arith.addf %310, %317 : vector<8x4xf32>
    %c8_i32 = arith.constant 8 : i32
    %c15_i32_74 = arith.constant 15 : i32
    %319 = arith.subi %c15_i32_74, %c8_i32 : i32
    %cst_75 = arith.constant dense<0.000000e+00> : vector<8x32xf32>
    %320 = tpu.matmul %318, %3, %cst_75 {dimension_numbers = #tpu.dot_dimension_numbers<[1], [0], [0], [1], [0, 0, 1, 1], [], []>} : vector<8x4xf32>, vector<4x32xf32>, vector<8x32xf32> -> vector<8x32xf32>
    %321 = arith.addf %320, %2 : vector<8x32xf32>
    %322 = arith.index_cast %319 : i32 to index
    %c0_76 = arith.constant 0 : index
    %c0_77 = arith.constant 0 : index
    %323 = vector.load %arg9[%322, %c0_76, %c0_77] : memref<16x1x32xf32, #tpu.memory_space<vmem>>, vector<1x1x32xf32>
    %324 = vector.shape_cast %323 : vector<1x1x32xf32> to vector<1x32xf32>
    %325 = vector.broadcast %324 : vector<1x32xf32> to vector<8x32xf32>
    %326 = arith.addf %321, %325 : vector<8x32xf32>
    %cst_78 = arith.constant 0.000000e+00 : f32
    %327 = vector.broadcast %cst_78 : f32 to vector<8x32xf32>
    %328 = arith.maximumf %326, %327 : vector<8x32xf32>
    %cst_79 = arith.constant dense<0.000000e+00> : vector<8x4xf32>
    %329 = tpu.matmul %328, %4, %cst_79 {dimension_numbers = #tpu.dot_dimension_numbers<[1], [0], [0], [1], [0, 0, 1, 1], [], []>} : vector<8x32xf32>, vector<32x4xf32>, vector<8x4xf32> -> vector<8x4xf32>
    %330 = vector.broadcast %5 : vector<1x4xf32> to vector<8x4xf32>
    %331 = arith.addf %329, %330 : vector<8x4xf32>
    %332 = arith.index_cast %319 : i32 to index
    %333 = memref.load %arg0[%332] : memref<16xf32, #tpu.memory_space<smem>>
    %334 = vector.broadcast %333 : f32 to vector<8x4xf32>
    %335 = arith.mulf %334, %318 : vector<8x4xf32>
    %336 = arith.index_cast %319 : i32 to index
    %337 = memref.load %arg1[%336] : memref<16xf32, #tpu.memory_space<smem>>
    %338 = vector.broadcast %337 : f32 to vector<8x4xf32>
    %339 = arith.mulf %338, %331 : vector<8x4xf32>
    %340 = arith.subf %335, %339 : vector<8x4xf32>
    %341 = arith.index_cast %319 : i32 to index
    %342 = memref.load %arg2[%341] : memref<16xf32, #tpu.memory_space<smem>>
    %343 = vector.broadcast %342 : f32 to vector<8x4xf32>
    %344 = arith.mulf %343, %340 : vector<8x4xf32>
    %345 = arith.index_cast %319 : i32 to index
    %346 = memref.load %arg3[%345] : memref<16xf32, #tpu.memory_space<smem>>
    %347 = vector.broadcast %346 : f32 to vector<8x4xf32>
    %348 = arith.mulf %347, %318 : vector<8x4xf32>
    %349 = arith.addf %344, %348 : vector<8x4xf32>
    %350 = arith.index_cast %319 : i32 to index
    %351 = memref.load %arg4[%350] : memref<16xf32, #tpu.memory_space<smem>>
    %352 = arith.index_cast %319 : i32 to index
    %c0_80 = arith.constant 0 : index
    %c0_81 = arith.constant 0 : index
    %353 = vector.load %arg12[%352, %c0_80, %c0_81] : memref<16x8x4xf32, #tpu.memory_space<vmem>>, vector<1x8x4xf32>
    %354 = vector.shape_cast %353 : vector<1x8x4xf32> to vector<8x4xf32>
    %355 = vector.broadcast %351 : f32 to vector<8x4xf32>
    %356 = arith.mulf %355, %354 : vector<8x4xf32>
    %357 = arith.addf %349, %356 : vector<8x4xf32>
    %c9_i32 = arith.constant 9 : i32
    %c15_i32_82 = arith.constant 15 : i32
    %358 = arith.subi %c15_i32_82, %c9_i32 : i32
    %cst_83 = arith.constant dense<0.000000e+00> : vector<8x32xf32>
    %359 = tpu.matmul %357, %3, %cst_83 {dimension_numbers = #tpu.dot_dimension_numbers<[1], [0], [0], [1], [0, 0, 1, 1], [], []>} : vector<8x4xf32>, vector<4x32xf32>, vector<8x32xf32> -> vector<8x32xf32>
    %360 = arith.addf %359, %2 : vector<8x32xf32>
    %361 = arith.index_cast %358 : i32 to index
    %c0_84 = arith.constant 0 : index
    %c0_85 = arith.constant 0 : index
    %362 = vector.load %arg9[%361, %c0_84, %c0_85] : memref<16x1x32xf32, #tpu.memory_space<vmem>>, vector<1x1x32xf32>
    %363 = vector.shape_cast %362 : vector<1x1x32xf32> to vector<1x32xf32>
    %364 = vector.broadcast %363 : vector<1x32xf32> to vector<8x32xf32>
    %365 = arith.addf %360, %364 : vector<8x32xf32>
    %cst_86 = arith.constant 0.000000e+00 : f32
    %366 = vector.broadcast %cst_86 : f32 to vector<8x32xf32>
    %367 = arith.maximumf %365, %366 : vector<8x32xf32>
    %cst_87 = arith.constant dense<0.000000e+00> : vector<8x4xf32>
    %368 = tpu.matmul %367, %4, %cst_87 {dimension_numbers = #tpu.dot_dimension_numbers<[1], [0], [0], [1], [0, 0, 1, 1], [], []>} : vector<8x32xf32>, vector<32x4xf32>, vector<8x4xf32> -> vector<8x4xf32>
    %369 = vector.broadcast %5 : vector<1x4xf32> to vector<8x4xf32>
    %370 = arith.addf %368, %369 : vector<8x4xf32>
    %371 = arith.index_cast %358 : i32 to index
    %372 = memref.load %arg0[%371] : memref<16xf32, #tpu.memory_space<smem>>
    %373 = vector.broadcast %372 : f32 to vector<8x4xf32>
    %374 = arith.mulf %373, %357 : vector<8x4xf32>
    %375 = arith.index_cast %358 : i32 to index
    %376 = memref.load %arg1[%375] : memref<16xf32, #tpu.memory_space<smem>>
    %377 = vector.broadcast %376 : f32 to vector<8x4xf32>
    %378 = arith.mulf %377, %370 : vector<8x4xf32>
    %379 = arith.subf %374, %378 : vector<8x4xf32>
    %380 = arith.index_cast %358 : i32 to index
    %381 = memref.load %arg2[%380] : memref<16xf32, #tpu.memory_space<smem>>
    %382 = vector.broadcast %381 : f32 to vector<8x4xf32>
    %383 = arith.mulf %382, %379 : vector<8x4xf32>
    %384 = arith.index_cast %358 : i32 to index
    %385 = memref.load %arg3[%384] : memref<16xf32, #tpu.memory_space<smem>>
    %386 = vector.broadcast %385 : f32 to vector<8x4xf32>
    %387 = arith.mulf %386, %357 : vector<8x4xf32>
    %388 = arith.addf %383, %387 : vector<8x4xf32>
    %389 = arith.index_cast %358 : i32 to index
    %390 = memref.load %arg4[%389] : memref<16xf32, #tpu.memory_space<smem>>
    %391 = arith.index_cast %358 : i32 to index
    %c0_88 = arith.constant 0 : index
    %c0_89 = arith.constant 0 : index
    %392 = vector.load %arg12[%391, %c0_88, %c0_89] : memref<16x8x4xf32, #tpu.memory_space<vmem>>, vector<1x8x4xf32>
    %393 = vector.shape_cast %392 : vector<1x8x4xf32> to vector<8x4xf32>
    %394 = vector.broadcast %390 : f32 to vector<8x4xf32>
    %395 = arith.mulf %394, %393 : vector<8x4xf32>
    %396 = arith.addf %388, %395 : vector<8x4xf32>
    %c10_i32 = arith.constant 10 : i32
    %c15_i32_90 = arith.constant 15 : i32
    %397 = arith.subi %c15_i32_90, %c10_i32 : i32
    %cst_91 = arith.constant dense<0.000000e+00> : vector<8x32xf32>
    %398 = tpu.matmul %396, %3, %cst_91 {dimension_numbers = #tpu.dot_dimension_numbers<[1], [0], [0], [1], [0, 0, 1, 1], [], []>} : vector<8x4xf32>, vector<4x32xf32>, vector<8x32xf32> -> vector<8x32xf32>
    %399 = arith.addf %398, %2 : vector<8x32xf32>
    %400 = arith.index_cast %397 : i32 to index
    %c0_92 = arith.constant 0 : index
    %c0_93 = arith.constant 0 : index
    %401 = vector.load %arg9[%400, %c0_92, %c0_93] : memref<16x1x32xf32, #tpu.memory_space<vmem>>, vector<1x1x32xf32>
    %402 = vector.shape_cast %401 : vector<1x1x32xf32> to vector<1x32xf32>
    %403 = vector.broadcast %402 : vector<1x32xf32> to vector<8x32xf32>
    %404 = arith.addf %399, %403 : vector<8x32xf32>
    %cst_94 = arith.constant 0.000000e+00 : f32
    %405 = vector.broadcast %cst_94 : f32 to vector<8x32xf32>
    %406 = arith.maximumf %404, %405 : vector<8x32xf32>
    %cst_95 = arith.constant dense<0.000000e+00> : vector<8x4xf32>
    %407 = tpu.matmul %406, %4, %cst_95 {dimension_numbers = #tpu.dot_dimension_numbers<[1], [0], [0], [1], [0, 0, 1, 1], [], []>} : vector<8x32xf32>, vector<32x4xf32>, vector<8x4xf32> -> vector<8x4xf32>
    %408 = vector.broadcast %5 : vector<1x4xf32> to vector<8x4xf32>
    %409 = arith.addf %407, %408 : vector<8x4xf32>
    %410 = arith.index_cast %397 : i32 to index
    %411 = memref.load %arg0[%410] : memref<16xf32, #tpu.memory_space<smem>>
    %412 = vector.broadcast %411 : f32 to vector<8x4xf32>
    %413 = arith.mulf %412, %396 : vector<8x4xf32>
    %414 = arith.index_cast %397 : i32 to index
    %415 = memref.load %arg1[%414] : memref<16xf32, #tpu.memory_space<smem>>
    %416 = vector.broadcast %415 : f32 to vector<8x4xf32>
    %417 = arith.mulf %416, %409 : vector<8x4xf32>
    %418 = arith.subf %413, %417 : vector<8x4xf32>
    %419 = arith.index_cast %397 : i32 to index
    %420 = memref.load %arg2[%419] : memref<16xf32, #tpu.memory_space<smem>>
    %421 = vector.broadcast %420 : f32 to vector<8x4xf32>
    %422 = arith.mulf %421, %418 : vector<8x4xf32>
    %423 = arith.index_cast %397 : i32 to index
    %424 = memref.load %arg3[%423] : memref<16xf32, #tpu.memory_space<smem>>
    %425 = vector.broadcast %424 : f32 to vector<8x4xf32>
    %426 = arith.mulf %425, %396 : vector<8x4xf32>
    %427 = arith.addf %422, %426 : vector<8x4xf32>
    %428 = arith.index_cast %397 : i32 to index
    %429 = memref.load %arg4[%428] : memref<16xf32, #tpu.memory_space<smem>>
    %430 = arith.index_cast %397 : i32 to index
    %c0_96 = arith.constant 0 : index
    %c0_97 = arith.constant 0 : index
    %431 = vector.load %arg12[%430, %c0_96, %c0_97] : memref<16x8x4xf32, #tpu.memory_space<vmem>>, vector<1x8x4xf32>
    %432 = vector.shape_cast %431 : vector<1x8x4xf32> to vector<8x4xf32>
    %433 = vector.broadcast %429 : f32 to vector<8x4xf32>
    %434 = arith.mulf %433, %432 : vector<8x4xf32>
    %435 = arith.addf %427, %434 : vector<8x4xf32>
    %c11_i32 = arith.constant 11 : i32
    %c15_i32_98 = arith.constant 15 : i32
    %436 = arith.subi %c15_i32_98, %c11_i32 : i32
    %cst_99 = arith.constant dense<0.000000e+00> : vector<8x32xf32>
    %437 = tpu.matmul %435, %3, %cst_99 {dimension_numbers = #tpu.dot_dimension_numbers<[1], [0], [0], [1], [0, 0, 1, 1], [], []>} : vector<8x4xf32>, vector<4x32xf32>, vector<8x32xf32> -> vector<8x32xf32>
    %438 = arith.addf %437, %2 : vector<8x32xf32>
    %439 = arith.index_cast %436 : i32 to index
    %c0_100 = arith.constant 0 : index
    %c0_101 = arith.constant 0 : index
    %440 = vector.load %arg9[%439, %c0_100, %c0_101] : memref<16x1x32xf32, #tpu.memory_space<vmem>>, vector<1x1x32xf32>
    %441 = vector.shape_cast %440 : vector<1x1x32xf32> to vector<1x32xf32>
    %442 = vector.broadcast %441 : vector<1x32xf32> to vector<8x32xf32>
    %443 = arith.addf %438, %442 : vector<8x32xf32>
    %cst_102 = arith.constant 0.000000e+00 : f32
    %444 = vector.broadcast %cst_102 : f32 to vector<8x32xf32>
    %445 = arith.maximumf %443, %444 : vector<8x32xf32>
    %cst_103 = arith.constant dense<0.000000e+00> : vector<8x4xf32>
    %446 = tpu.matmul %445, %4, %cst_103 {dimension_numbers = #tpu.dot_dimension_numbers<[1], [0], [0], [1], [0, 0, 1, 1], [], []>} : vector<8x32xf32>, vector<32x4xf32>, vector<8x4xf32> -> vector<8x4xf32>
    %447 = vector.broadcast %5 : vector<1x4xf32> to vector<8x4xf32>
    %448 = arith.addf %446, %447 : vector<8x4xf32>
    %449 = arith.index_cast %436 : i32 to index
    %450 = memref.load %arg0[%449] : memref<16xf32, #tpu.memory_space<smem>>
    %451 = vector.broadcast %450 : f32 to vector<8x4xf32>
    %452 = arith.mulf %451, %435 : vector<8x4xf32>
    %453 = arith.index_cast %436 : i32 to index
    %454 = memref.load %arg1[%453] : memref<16xf32, #tpu.memory_space<smem>>
    %455 = vector.broadcast %454 : f32 to vector<8x4xf32>
    %456 = arith.mulf %455, %448 : vector<8x4xf32>
    %457 = arith.subf %452, %456 : vector<8x4xf32>
    %458 = arith.index_cast %436 : i32 to index
    %459 = memref.load %arg2[%458] : memref<16xf32, #tpu.memory_space<smem>>
    %460 = vector.broadcast %459 : f32 to vector<8x4xf32>
    %461 = arith.mulf %460, %457 : vector<8x4xf32>
    %462 = arith.index_cast %436 : i32 to index
    %463 = memref.load %arg3[%462] : memref<16xf32, #tpu.memory_space<smem>>
    %464 = vector.broadcast %463 : f32 to vector<8x4xf32>
    %465 = arith.mulf %464, %435 : vector<8x4xf32>
    %466 = arith.addf %461, %465 : vector<8x4xf32>
    %467 = arith.index_cast %436 : i32 to index
    %468 = memref.load %arg4[%467] : memref<16xf32, #tpu.memory_space<smem>>
    %469 = arith.index_cast %436 : i32 to index
    %c0_104 = arith.constant 0 : index
    %c0_105 = arith.constant 0 : index
    %470 = vector.load %arg12[%469, %c0_104, %c0_105] : memref<16x8x4xf32, #tpu.memory_space<vmem>>, vector<1x8x4xf32>
    %471 = vector.shape_cast %470 : vector<1x8x4xf32> to vector<8x4xf32>
    %472 = vector.broadcast %468 : f32 to vector<8x4xf32>
    %473 = arith.mulf %472, %471 : vector<8x4xf32>
    %474 = arith.addf %466, %473 : vector<8x4xf32>
    %c12_i32 = arith.constant 12 : i32
    %c15_i32_106 = arith.constant 15 : i32
    %475 = arith.subi %c15_i32_106, %c12_i32 : i32
    %cst_107 = arith.constant dense<0.000000e+00> : vector<8x32xf32>
    %476 = tpu.matmul %474, %3, %cst_107 {dimension_numbers = #tpu.dot_dimension_numbers<[1], [0], [0], [1], [0, 0, 1, 1], [], []>} : vector<8x4xf32>, vector<4x32xf32>, vector<8x32xf32> -> vector<8x32xf32>
    %477 = arith.addf %476, %2 : vector<8x32xf32>
    %478 = arith.index_cast %475 : i32 to index
    %c0_108 = arith.constant 0 : index
    %c0_109 = arith.constant 0 : index
    %479 = vector.load %arg9[%478, %c0_108, %c0_109] : memref<16x1x32xf32, #tpu.memory_space<vmem>>, vector<1x1x32xf32>
    %480 = vector.shape_cast %479 : vector<1x1x32xf32> to vector<1x32xf32>
    %481 = vector.broadcast %480 : vector<1x32xf32> to vector<8x32xf32>
    %482 = arith.addf %477, %481 : vector<8x32xf32>
    %cst_110 = arith.constant 0.000000e+00 : f32
    %483 = vector.broadcast %cst_110 : f32 to vector<8x32xf32>
    %484 = arith.maximumf %482, %483 : vector<8x32xf32>
    %cst_111 = arith.constant dense<0.000000e+00> : vector<8x4xf32>
    %485 = tpu.matmul %484, %4, %cst_111 {dimension_numbers = #tpu.dot_dimension_numbers<[1], [0], [0], [1], [0, 0, 1, 1], [], []>} : vector<8x32xf32>, vector<32x4xf32>, vector<8x4xf32> -> vector<8x4xf32>
    %486 = vector.broadcast %5 : vector<1x4xf32> to vector<8x4xf32>
    %487 = arith.addf %485, %486 : vector<8x4xf32>
    %488 = arith.index_cast %475 : i32 to index
    %489 = memref.load %arg0[%488] : memref<16xf32, #tpu.memory_space<smem>>
    %490 = vector.broadcast %489 : f32 to vector<8x4xf32>
    %491 = arith.mulf %490, %474 : vector<8x4xf32>
    %492 = arith.index_cast %475 : i32 to index
    %493 = memref.load %arg1[%492] : memref<16xf32, #tpu.memory_space<smem>>
    %494 = vector.broadcast %493 : f32 to vector<8x4xf32>
    %495 = arith.mulf %494, %487 : vector<8x4xf32>
    %496 = arith.subf %491, %495 : vector<8x4xf32>
    %497 = arith.index_cast %475 : i32 to index
    %498 = memref.load %arg2[%497] : memref<16xf32, #tpu.memory_space<smem>>
    %499 = vector.broadcast %498 : f32 to vector<8x4xf32>
    %500 = arith.mulf %499, %496 : vector<8x4xf32>
    %501 = arith.index_cast %475 : i32 to index
    %502 = memref.load %arg3[%501] : memref<16xf32, #tpu.memory_space<smem>>
    %503 = vector.broadcast %502 : f32 to vector<8x4xf32>
    %504 = arith.mulf %503, %474 : vector<8x4xf32>
    %505 = arith.addf %500, %504 : vector<8x4xf32>
    %506 = arith.index_cast %475 : i32 to index
    %507 = memref.load %arg4[%506] : memref<16xf32, #tpu.memory_space<smem>>
    %508 = arith.index_cast %475 : i32 to index
    %c0_112 = arith.constant 0 : index
    %c0_113 = arith.constant 0 : index
    %509 = vector.load %arg12[%508, %c0_112, %c0_113] : memref<16x8x4xf32, #tpu.memory_space<vmem>>, vector<1x8x4xf32>
    %510 = vector.shape_cast %509 : vector<1x8x4xf32> to vector<8x4xf32>
    %511 = vector.broadcast %507 : f32 to vector<8x4xf32>
    %512 = arith.mulf %511, %510 : vector<8x4xf32>
    %513 = arith.addf %505, %512 : vector<8x4xf32>
    %c13_i32 = arith.constant 13 : i32
    %c15_i32_114 = arith.constant 15 : i32
    %514 = arith.subi %c15_i32_114, %c13_i32 : i32
    %cst_115 = arith.constant dense<0.000000e+00> : vector<8x32xf32>
    %515 = tpu.matmul %513, %3, %cst_115 {dimension_numbers = #tpu.dot_dimension_numbers<[1], [0], [0], [1], [0, 0, 1, 1], [], []>} : vector<8x4xf32>, vector<4x32xf32>, vector<8x32xf32> -> vector<8x32xf32>
    %516 = arith.addf %515, %2 : vector<8x32xf32>
    %517 = arith.index_cast %514 : i32 to index
    %c0_116 = arith.constant 0 : index
    %c0_117 = arith.constant 0 : index
    %518 = vector.load %arg9[%517, %c0_116, %c0_117] : memref<16x1x32xf32, #tpu.memory_space<vmem>>, vector<1x1x32xf32>
    %519 = vector.shape_cast %518 : vector<1x1x32xf32> to vector<1x32xf32>
    %520 = vector.broadcast %519 : vector<1x32xf32> to vector<8x32xf32>
    %521 = arith.addf %516, %520 : vector<8x32xf32>
    %cst_118 = arith.constant 0.000000e+00 : f32
    %522 = vector.broadcast %cst_118 : f32 to vector<8x32xf32>
    %523 = arith.maximumf %521, %522 : vector<8x32xf32>
    %cst_119 = arith.constant dense<0.000000e+00> : vector<8x4xf32>
    %524 = tpu.matmul %523, %4, %cst_119 {dimension_numbers = #tpu.dot_dimension_numbers<[1], [0], [0], [1], [0, 0, 1, 1], [], []>} : vector<8x32xf32>, vector<32x4xf32>, vector<8x4xf32> -> vector<8x4xf32>
    %525 = vector.broadcast %5 : vector<1x4xf32> to vector<8x4xf32>
    %526 = arith.addf %524, %525 : vector<8x4xf32>
    %527 = arith.index_cast %514 : i32 to index
    %528 = memref.load %arg0[%527] : memref<16xf32, #tpu.memory_space<smem>>
    %529 = vector.broadcast %528 : f32 to vector<8x4xf32>
    %530 = arith.mulf %529, %513 : vector<8x4xf32>
    %531 = arith.index_cast %514 : i32 to index
    %532 = memref.load %arg1[%531] : memref<16xf32, #tpu.memory_space<smem>>
    %533 = vector.broadcast %532 : f32 to vector<8x4xf32>
    %534 = arith.mulf %533, %526 : vector<8x4xf32>
    %535 = arith.subf %530, %534 : vector<8x4xf32>
    %536 = arith.index_cast %514 : i32 to index
    %537 = memref.load %arg2[%536] : memref<16xf32, #tpu.memory_space<smem>>
    %538 = vector.broadcast %537 : f32 to vector<8x4xf32>
    %539 = arith.mulf %538, %535 : vector<8x4xf32>
    %540 = arith.index_cast %514 : i32 to index
    %541 = memref.load %arg3[%540] : memref<16xf32, #tpu.memory_space<smem>>
    %542 = vector.broadcast %541 : f32 to vector<8x4xf32>
    %543 = arith.mulf %542, %513 : vector<8x4xf32>
    %544 = arith.addf %539, %543 : vector<8x4xf32>
    %545 = arith.index_cast %514 : i32 to index
    %546 = memref.load %arg4[%545] : memref<16xf32, #tpu.memory_space<smem>>
    %547 = arith.index_cast %514 : i32 to index
    %c0_120 = arith.constant 0 : index
    %c0_121 = arith.constant 0 : index
    %548 = vector.load %arg12[%547, %c0_120, %c0_121] : memref<16x8x4xf32, #tpu.memory_space<vmem>>, vector<1x8x4xf32>
    %549 = vector.shape_cast %548 : vector<1x8x4xf32> to vector<8x4xf32>
    %550 = vector.broadcast %546 : f32 to vector<8x4xf32>
    %551 = arith.mulf %550, %549 : vector<8x4xf32>
    %552 = arith.addf %544, %551 : vector<8x4xf32>
    %c14_i32 = arith.constant 14 : i32
    %c15_i32_122 = arith.constant 15 : i32
    %553 = arith.subi %c15_i32_122, %c14_i32 : i32
    %cst_123 = arith.constant dense<0.000000e+00> : vector<8x32xf32>
    %554 = tpu.matmul %552, %3, %cst_123 {dimension_numbers = #tpu.dot_dimension_numbers<[1], [0], [0], [1], [0, 0, 1, 1], [], []>} : vector<8x4xf32>, vector<4x32xf32>, vector<8x32xf32> -> vector<8x32xf32>
    %555 = arith.addf %554, %2 : vector<8x32xf32>
    %556 = arith.index_cast %553 : i32 to index
    %c0_124 = arith.constant 0 : index
    %c0_125 = arith.constant 0 : index
    %557 = vector.load %arg9[%556, %c0_124, %c0_125] : memref<16x1x32xf32, #tpu.memory_space<vmem>>, vector<1x1x32xf32>
    %558 = vector.shape_cast %557 : vector<1x1x32xf32> to vector<1x32xf32>
    %559 = vector.broadcast %558 : vector<1x32xf32> to vector<8x32xf32>
    %560 = arith.addf %555, %559 : vector<8x32xf32>
    %cst_126 = arith.constant 0.000000e+00 : f32
    %561 = vector.broadcast %cst_126 : f32 to vector<8x32xf32>
    %562 = arith.maximumf %560, %561 : vector<8x32xf32>
    %cst_127 = arith.constant dense<0.000000e+00> : vector<8x4xf32>
    %563 = tpu.matmul %562, %4, %cst_127 {dimension_numbers = #tpu.dot_dimension_numbers<[1], [0], [0], [1], [0, 0, 1, 1], [], []>} : vector<8x32xf32>, vector<32x4xf32>, vector<8x4xf32> -> vector<8x4xf32>
    %564 = vector.broadcast %5 : vector<1x4xf32> to vector<8x4xf32>
    %565 = arith.addf %563, %564 : vector<8x4xf32>
    %566 = arith.index_cast %553 : i32 to index
    %567 = memref.load %arg0[%566] : memref<16xf32, #tpu.memory_space<smem>>
    %568 = vector.broadcast %567 : f32 to vector<8x4xf32>
    %569 = arith.mulf %568, %552 : vector<8x4xf32>
    %570 = arith.index_cast %553 : i32 to index
    %571 = memref.load %arg1[%570] : memref<16xf32, #tpu.memory_space<smem>>
    %572 = vector.broadcast %571 : f32 to vector<8x4xf32>
    %573 = arith.mulf %572, %565 : vector<8x4xf32>
    %574 = arith.subf %569, %573 : vector<8x4xf32>
    %575 = arith.index_cast %553 : i32 to index
    %576 = memref.load %arg2[%575] : memref<16xf32, #tpu.memory_space<smem>>
    %577 = vector.broadcast %576 : f32 to vector<8x4xf32>
    %578 = arith.mulf %577, %574 : vector<8x4xf32>
    %579 = arith.index_cast %553 : i32 to index
    %580 = memref.load %arg3[%579] : memref<16xf32, #tpu.memory_space<smem>>
    %581 = vector.broadcast %580 : f32 to vector<8x4xf32>
    %582 = arith.mulf %581, %552 : vector<8x4xf32>
    %583 = arith.addf %578, %582 : vector<8x4xf32>
    %584 = arith.index_cast %553 : i32 to index
    %585 = memref.load %arg4[%584] : memref<16xf32, #tpu.memory_space<smem>>
    %586 = arith.index_cast %553 : i32 to index
    %c0_128 = arith.constant 0 : index
    %c0_129 = arith.constant 0 : index
    %587 = vector.load %arg12[%586, %c0_128, %c0_129] : memref<16x8x4xf32, #tpu.memory_space<vmem>>, vector<1x8x4xf32>
    %588 = vector.shape_cast %587 : vector<1x8x4xf32> to vector<8x4xf32>
    %589 = vector.broadcast %585 : f32 to vector<8x4xf32>
    %590 = arith.mulf %589, %588 : vector<8x4xf32>
    %591 = arith.addf %583, %590 : vector<8x4xf32>
    %c15_i32_130 = arith.constant 15 : i32
    %c15_i32_131 = arith.constant 15 : i32
    %592 = arith.subi %c15_i32_131, %c15_i32_130 : i32
    %cst_132 = arith.constant dense<0.000000e+00> : vector<8x32xf32>
    %593 = tpu.matmul %591, %3, %cst_132 {dimension_numbers = #tpu.dot_dimension_numbers<[1], [0], [0], [1], [0, 0, 1, 1], [], []>} : vector<8x4xf32>, vector<4x32xf32>, vector<8x32xf32> -> vector<8x32xf32>
    %594 = arith.addf %593, %2 : vector<8x32xf32>
    %595 = arith.index_cast %592 : i32 to index
    %c0_133 = arith.constant 0 : index
    %c0_134 = arith.constant 0 : index
    %596 = vector.load %arg9[%595, %c0_133, %c0_134] : memref<16x1x32xf32, #tpu.memory_space<vmem>>, vector<1x1x32xf32>
    %597 = vector.shape_cast %596 : vector<1x1x32xf32> to vector<1x32xf32>
    %598 = vector.broadcast %597 : vector<1x32xf32> to vector<8x32xf32>
    %599 = arith.addf %594, %598 : vector<8x32xf32>
    %cst_135 = arith.constant 0.000000e+00 : f32
    %600 = vector.broadcast %cst_135 : f32 to vector<8x32xf32>
    %601 = arith.maximumf %599, %600 : vector<8x32xf32>
    %cst_136 = arith.constant dense<0.000000e+00> : vector<8x4xf32>
    %602 = tpu.matmul %601, %4, %cst_136 {dimension_numbers = #tpu.dot_dimension_numbers<[1], [0], [0], [1], [0, 0, 1, 1], [], []>} : vector<8x32xf32>, vector<32x4xf32>, vector<8x4xf32> -> vector<8x4xf32>
    %603 = vector.broadcast %5 : vector<1x4xf32> to vector<8x4xf32>
    %604 = arith.addf %602, %603 : vector<8x4xf32>
    %605 = arith.index_cast %592 : i32 to index
    %606 = memref.load %arg0[%605] : memref<16xf32, #tpu.memory_space<smem>>
    %607 = vector.broadcast %606 : f32 to vector<8x4xf32>
    %608 = arith.mulf %607, %591 : vector<8x4xf32>
    %609 = arith.index_cast %592 : i32 to index
    %610 = memref.load %arg1[%609] : memref<16xf32, #tpu.memory_space<smem>>
    %611 = vector.broadcast %610 : f32 to vector<8x4xf32>
    %612 = arith.mulf %611, %604 : vector<8x4xf32>
    %613 = arith.subf %608, %612 : vector<8x4xf32>
    %614 = arith.index_cast %592 : i32 to index
    %615 = memref.load %arg2[%614] : memref<16xf32, #tpu.memory_space<smem>>
    %616 = vector.broadcast %615 : f32 to vector<8x4xf32>
    %617 = arith.mulf %616, %613 : vector<8x4xf32>
    %618 = arith.index_cast %592 : i32 to index
    %619 = memref.load %arg3[%618] : memref<16xf32, #tpu.memory_space<smem>>
    %620 = vector.broadcast %619 : f32 to vector<8x4xf32>
    %621 = arith.mulf %620, %591 : vector<8x4xf32>
    %622 = arith.addf %617, %621 : vector<8x4xf32>
    %623 = arith.index_cast %592 : i32 to index
    %624 = memref.load %arg4[%623] : memref<16xf32, #tpu.memory_space<smem>>
    %625 = arith.index_cast %592 : i32 to index
    %c0_137 = arith.constant 0 : index
    %c0_138 = arith.constant 0 : index
    %626 = vector.load %arg12[%625, %c0_137, %c0_138] : memref<16x8x4xf32, #tpu.memory_space<vmem>>, vector<1x8x4xf32>
    %627 = vector.shape_cast %626 : vector<1x8x4xf32> to vector<8x4xf32>
    %628 = vector.broadcast %624 : f32 to vector<8x4xf32>
    %629 = arith.mulf %628, %627 : vector<8x4xf32>
    %630 = arith.addf %622, %629 : vector<8x4xf32>
    %c16_i32 = arith.constant 16 : i32
    %c0_139 = arith.constant 0 : index
    %c0_140 = arith.constant 0 : index
    %631 = vector.load %arg13[%c0_139, %c0_140] : memref<8x4xf32, #tpu.memory_space<vmem>>, vector<8x4xf32>
    tpu.vector_store %arg13[%c0_139, %c0_140], %630 {strides = array<i32>} : memref<8x4xf32, #tpu.memory_space<vmem>>, vector<8x4xf32>,
    return
  }
}

</mosaic_0001>

<llo_original>
// kernel: tpu_custom_call.1
$region0: #{tpu_custom_call.1}
  #allocation0 [shape = 'u32[]', space=smem, size = 0x4, offset = 0x4, fixed_abs, tag = 'smem constant byte address 0x4 - core index']
  #allocation1 [shape = 'u32[144,128]{1,0:T(1,128)}', space=vmem, size = 0x12000, scoped, tag = 'internal scratch']
  %s0 = inlined_call_operand.vmem [shape: f32[16], index: 0, kind: input, shape index: {}]
  %s1 = inlined_call_operand.vmem [shape: f32[16], index: 1, kind: input, shape index: {}]
  %s2 = inlined_call_operand.vmem [shape: f32[16], index: 2, kind: input, shape index: {}]
  %s3 = inlined_call_operand.vmem [shape: f32[16], index: 3, kind: input, shape index: {}]
  %s4 = inlined_call_operand.vmem [shape: f32[16], index: 4, kind: input, shape index: {}]
  %s5 = inlined_call_operand.vmem [shape: f32[8,4], index: 5, kind: input, shape index: {}]
  %s6 = inlined_call_operand.vmem [shape: f32[8,12], index: 6, kind: input, shape index: {}]
  %s7 = inlined_call_operand.vmem [shape: f32[4,32], index: 7, kind: input, shape index: {}]
  %s8 = inlined_call_operand.vmem [shape: f32[12,32], index: 8, kind: input, shape index: {}]
  %s9 = inlined_call_operand.vmem [shape: f32[16,1,32], index: 9, kind: input, shape index: {}]
  %s10 = inlined_call_operand.vmem [shape: f32[32,4], index: 10, kind: input, shape index: {}]
  %s11 = inlined_call_operand.vmem [shape: f32[1,4], index: 11, kind: input, shape index: {}]
  %s12 = inlined_call_operand.vmem [shape: f32[16,8,4], index: 12, kind: input, shape index: {}]
  %s13 = inlined_call_operand.vmem [shape: f32[8,4], index: 13, kind: output, shape index: {}]
  %s14 = sld [smem:[#allocation0]]
  $region82: #{tpu_custom_call.1} parent=0
    _
  %s16 = ssub.s32 1, %s14
  %s17 = scalar_select 0, %s16, %s14
  $region1: #{tpu_custom_call.1} parent=0
    #allocation2 [shape = 'u8[512]{0}', space=smem, size = 0x200, scoped, tag = 'input window, operand 0, single buffered']
    #allocation3 [shape = 's32[1]{0}', space=sflag, size = 0x4, scoped, tag = 'scoped memory for tpu_custom_call.1']
    #allocation4 [shape = 'u8[512]{0}', space=smem, size = 0x200, scoped, tag = 'input window, operand 1, single buffered']
    #allocation5 [shape = 's32[1]{0}', space=sflag, size = 0x4, scoped, tag = 'scoped memory for tpu_custom_call.1']
    #allocation6 [shape = 'u8[512]{0}', space=smem, size = 0x200, scoped, tag = 'input window, operand 2, single buffered']
    #allocation7 [shape = 'u8[512]{0}', space=smem, size = 0x200, scoped, tag = 'input window, operand 3, single buffered']
    #allocation8 [shape = 's32[1]{0}', space=sflag, size = 0x4, scoped, tag = 'scoped memory for tpu_custom_call.1']
    #allocation9 [shape = 'u8[512]{0}', space=smem, size = 0x200, scoped, tag = 'input window, operand 4, single buffered']
    %18 = vsyncpa [#allocation3], 0
    %19 = vsyncpa [#allocation5], 0
    %20 = vsyncpa [#allocation8], 0
    // Predicated region
    $region2: #{tpu_custom_call.1} parent=1 // pred_check
      _
    $region3: #{tpu_custom_call.1} parent=1 // pred_check_branch
      %22 = sbr.rel (0) target = $region5
    $region4: #{tpu_custom_call.1} parent=1 // pred_region
      %s24 = ssub.s32 16, 16
      %25 = vsyncadd [#allocation3], %s24
      %s27 = sshll.u32 %s0, 4
      %s28 = int_to_ptr.vmem [resolvable:$true] %s27
      %30 = dma.vmem_to_smem %s28, 16, [#allocation2], [#allocation3]
    $region5: #{tpu_custom_call.1} parent=1 // pred_fallthru
      _
    // Predicated region
    $region6: #{tpu_custom_call.1} parent=1 // pred_check
      _
    $region7: #{tpu_custom_call.1} parent=1 // pred_check_branch
      %32 = sbr.rel (0) target = $region9
    $region8: #{tpu_custom_call.1} parent=1 // pred_region
      %s34 = ssub.s32 16, 16
      %35 = vsyncadd [#allocation5], %s34
      %s37 = sshll.u32 %s1, 4
      %s38 = int_to_ptr.vmem [resolvable:$true] %s37
      %40 = dma.vmem_to_smem %s38, 16, [#allocation4], [#allocation5]
    $region9: #{tpu_custom_call.1} parent=1 // pred_fallthru
      _
    // Predicated region
    $region10: #{tpu_custom_call.1} parent=1 // pred_check
      _
    $region11: #{tpu_custom_call.1} parent=1 // pred_check_branch
      %42 = sbr.rel (0) target = $region13
    $region12: #{tpu_custom_call.1} parent=1 // pred_region
      %s44 = ssub.s32 16, 16
      %45 = vsyncadd [#allocation5], %s44
      %s47 = sshll.u32 %s2, 4
      %s48 = int_to_ptr.vmem [resolvable:$true] %s47
      %50 = dma.vmem_to_smem %s48, 16, [#allocation6], [#allocation5]
    $region13: #{tpu_custom_call.1} parent=1 // pred_fallthru
      _
    // Predicated region
    $region14: #{tpu_custom_call.1} parent=1 // pred_check
      _
    $region15: #{tpu_custom_call.1} parent=1 // pred_check_branch
      %52 = sbr.rel (0) target = $region17
    $region16: #{tpu_custom_call.1} parent=1 // pred_region
      %s54 = ssub.s32 16, 16
      %55 = vsyncadd [#allocation8], %s54
      %s57 = sshll.u32 %s3, 4
      %s58 = int_to_ptr.vmem [resolvable:$true] %s57
      %60 = dma.vmem_to_smem %s58, 16, [#allocation7], [#allocation8]
    $region17: #{tpu_custom_call.1} parent=1 // pred_fallthru
      _
    // Predicated region
    $region18: #{tpu_custom_call.1} parent=1 // pred_check
      _
    $region19: #{tpu_custom_call.1} parent=1 // pred_check_branch
      %62 = sbr.rel (0) target = $region21
    $region20: #{tpu_custom_call.1} parent=1 // pred_region
      %s64 = ssub.s32 16, 16
      %65 = vsyncadd [#allocation8], %s64
      %s67 = sshll.u32 %s4, 4
      %s68 = int_to_ptr.vmem [resolvable:$true] %s67
      %70 = dma.vmem_to_smem %s68, 16, [#allocation9], [#allocation8]
    $region21: #{tpu_custom_call.1} parent=1 // pred_fallthru
      _
    // Predicated region
    $region22: #{tpu_custom_call.1} parent=1 // pred_check
      _
    $region23: #{tpu_custom_call.1} parent=1 // pred_check_branch
      %72 = sbr.rel (0) target = $region25
    $region24: #{tpu_custom_call.1} parent=1 // pred_region
      _
    $region25: #{tpu_custom_call.1} parent=1 // pred_fallthru
      _
    // Predicated region
    $region26: #{tpu_custom_call.1} parent=1 // pred_check
      _
    $region27: #{tpu_custom_call.1} parent=1 // pred_check_branch
      %74 = sbr.rel (0) target = $region29
    $region28: #{tpu_custom_call.1} parent=1 // pred_region
      _
    $region29: #{tpu_custom_call.1} parent=1 // pred_fallthru
      _
    // Predicated region
    $region30: #{tpu_custom_call.1} parent=1 // pred_check
      _
    $region31: #{tpu_custom_call.1} parent=1 // pred_check_branch
      %76 = sbr.rel (0) target = $region33
    $region32: #{tpu_custom_call.1} parent=1 // pred_region
      _
    $region33: #{tpu_custom_call.1} parent=1 // pred_fallthru
      _
    // Predicated region
    $region34: #{tpu_custom_call.1} parent=1 // pred_check
      _
    $region35: #{tpu_custom_call.1} parent=1 // pred_check_branch
      %78 = sbr.rel (0) target = $region37
    $region36: #{tpu_custom_call.1} parent=1 // pred_region
      _
    $region37: #{tpu_custom_call.1} parent=1 // pred_fallthru
      _
    // Predicated region
    $region38: #{tpu_custom_call.1} parent=1 // pred_check
      _
    $region39: #{tpu_custom_call.1} parent=1 // pred_check_branch
      %80 = sbr.rel (0) target = $region41
    $region40: #{tpu_custom_call.1} parent=1 // pred_region
      _
    $region41: #{tpu_custom_call.1} parent=1 // pred_fallthru
      _
    // Predicated region
    $region42: #{tpu_custom_call.1} parent=1 // pred_check
      _
    $region43: #{tpu_custom_call.1} parent=1 // pred_check_branch
      %82 = sbr.rel (0) target = $region45
    $region44: #{tpu_custom_call.1} parent=1 // pred_region
      _
    $region45: #{tpu_custom_call.1} parent=1 // pred_fallthru
      _
    // Predicated region
    $region46: #{tpu_custom_call.1} parent=1 // pred_check
      _
    $region47: #{tpu_custom_call.1} parent=1 // pred_check_branch
      %84 = sbr.rel (0) target = $region49
    $region48: #{tpu_custom_call.1} parent=1 // pred_region
      _
    $region49: #{tpu_custom_call.1} parent=1 // pred_fallthru
      _
    // Predicated region
    $region50: #{tpu_custom_call.1} parent=1 // pred_check
      _
    $region51: #{tpu_custom_call.1} parent=1 // pred_check_branch
      %86 = sbr.rel (0) target = $region53
    $region52: #{tpu_custom_call.1} parent=1 // pred_region
      _
    $region53: #{tpu_custom_call.1} parent=1 // pred_fallthru
      _
    // Predicated region
    $region54: #{tpu_custom_call.1} parent=1 // pred_check
      _
    $region55: #{tpu_custom_call.1} parent=1 // pred_check_branch
      %88 = sbr.rel (0) target = $region57
    $region56: #{tpu_custom_call.1} parent=1 // pred_region
      %89 = dma.done [#allocation3], 16
    $region57: #{tpu_custom_call.1} parent=1 // pred_fallthru
      _
    // Predicated region
    $region58: #{tpu_custom_call.1} parent=1 // pred_check
      _
    $region59: #{tpu_custom_call.1} parent=1 // pred_check_branch
      %91 = sbr.rel (0) target = $region61
    $region60: #{tpu_custom_call.1} parent=1 // pred_region
      %92 = dma.done [#allocation5], 16
    $region61: #{tpu_custom_call.1} parent=1 // pred_fallthru
      _
    // Predicated region
    $region62: #{tpu_custom_call.1} parent=1 // pred_check
      _
    $region63: #{tpu_custom_call.1} parent=1 // pred_check_branch
      %94 = sbr.rel (0) target = $region65
    $region64: #{tpu_custom_call.1} parent=1 // pred_region
      %95 = dma.done [#allocation5], 16
    $region65: #{tpu_custom_call.1} parent=1 // pred_fallthru
      _
    // Predicated region
    $region66: #{tpu_custom_call.1} parent=1 // pred_check
      _
    $region67: #{tpu_custom_call.1} parent=1 // pred_check_branch
      %97 = sbr.rel (0) target = $region69
    $region68: #{tpu_custom_call.1} parent=1 // pred_region
      %98 = dma.done [#allocation8], 16
    $region69: #{tpu_custom_call.1} parent=1 // pred_fallthru
      _
    // Predicated region
    $region70: #{tpu_custom_call.1} parent=1 // pred_check
      _
    $region71: #{tpu_custom_call.1} parent=1 // pred_check_branch
      %100 = sbr.rel (0) target = $region73
    $region72: #{tpu_custom_call.1} parent=1 // pred_region
      %101 = dma.done [#allocation8], 16
    $region73: #{tpu_custom_call.1} parent=1 // pred_fallthru
      _
    %102 = sfence
    %v103 = vld [vmem:[%s6] sm:$0xff]
    %v104 = vld [vmem:[%s8] sm:$0xff]
    %v105 = vld [vmem:[%s8 + $0x8] sm:$0xf]
    %vm106 = vcmask 97280
    %v108 = vsel %vm106, %v103, 0
    %vm110 = vcmask 1043456
    %v112 = vsel %vm110, %v105, 0
    %114 = vmatprep.subr.mxu0 0.0
    %115 = vmatpush1.msra.mxu0 %v104
    %116 = vmatprep.subr.mxu0 0.0
    %117 = vmatpush1.msra.mxu0 %v112
    %118 = vmatprep.subr.mxu0 0.0
    %119 = vmatpush1.msra.mxu0 0.0
    %120 = vmatprep.subr.mxu0 0.0
    %121 = vmatpush1.msra.mxu0 0.0
    %122 = vmatprep.subr.mxu0 0.0
    %123 = vmatpush1.msra.mxu0 0.0
    %124 = vmatprep.subr.mxu0 0.0
    %125 = vmatpush1.msra.mxu0 0.0
    %126 = vmatprep.subr.mxu0 0.0
    %127 = vmatpush1.msra.mxu0 0.0
    %128 = vmatprep.subr.mxu0 0.0
    %129 = vmatpush1.msra.mxu0 0.0
    %130 = vmatprep.subr.mxu0 0.0
    %131 = vmatpush1.msra.mxu0 0.0
    %132 = vmatprep.subr.mxu0 0.0
    %133 = vmatpush1.msra.mxu0 0.0
    %134 = vmatprep.subr.mxu0 0.0
    %135 = vmatpush1.msra.mxu0 0.0
    %136 = vmatprep.subr.mxu0 0.0
    %137 = vmatpush1.msra.mxu0 0.0
    %138 = vmatprep.subr.mxu0 0.0
    %139 = vmatpush1.msra.mxu0 0.0
    %140 = vmatprep.subr.mxu0 0.0
    %141 = vmatpush1.msra.mxu0 0.0
    %142 = vmatprep.subr.mxu0 0.0
    %143 = vmatpush1.msra.mxu0 0.0
    %144 = vmatprep.subr.mxu0 0.0
    %145 = vmatpush1.msra.mxu0 0.0
    %146 = vmatprep.subr.mxu0 0.0
    %147 = vmatpush1.msra.mxu0 0.0
    %148 = vmatprep.subr.mxu0 0.0
    %149 = vmatpush1.msra.mxu0 0.0
    %150 = vmatprep.subr.mxu0 0.0
    %151 = vmatpush1.msra.mxu0 0.0
    %152 = vmatprep.subr.mxu0 0.0
    %153 = vmatpush1.msra.mxu0 0.0
    %154 = vmatprep.subr.mxu0 0.0
    %155 = vmatpush1.msra.mxu0 0.0
    %156 = vmatprep.subr.mxu0 0.0
    %157 = vmatpush1.msra.mxu0 0.0
    %158 = vmatprep.subr.mxu0 0.0
    %159 = vmatpush1.msra.mxu0 0.0
    %160 = vmatprep.subr.mxu0 0.0
    %161 = vmatpush1.msra.mxu0 0.0
    %162 = vmatprep.subr.mxu0 0.0
    %163 = vmatpush1.msra.mxu0 0.0
    %164 = vmatprep.subr.mxu0 0.0
    %165 = vmatpush1.msra.mxu0 0.0
    %166 = vmatprep.subr.mxu0 0.0
    %167 = vmatpush1.msra.mxu0 0.0
    %168 = vmatprep.subr.mxu0 0.0
    %169 = vmatpush1.msra.mxu0 0.0
    %170 = vmatprep.subr.mxu0 0.0
    %171 = vmatpush1.msra.mxu0 0.0
    %172 = vmatprep.subr.mxu0 0.0
    %173 = vmatpush1.msra.mxu0 0.0
    %174 = vmatprep.subr.mxu0 0.0
    %175 = vmatpush1.msra.mxu0 0.0
    %176 = vmatprep.subr.mxu0 0.0
    %177 = vmatpush1.msra.mxu0 0.0
    %178 = vmatprep.mubr.f32.mxu0 0.0
    %179 = vmatmul.mubr.f32.gmra.mrb[0].mxu0 %v108
    %v180 = vpop.f32.mrb[0].mxu0
    %v181 = vadd.f32 0.0, %v180
    %v182 = vpop.f32.mrb[0].mxu0
    %183 = vdwg.mxu0
    %v184 = vld [vmem:[%s7] sm:$0xf]
    %v185 = vld [vmem:[%s10] sm:$0xff]
    %v186 = vld [vmem:[%s10 + $0x8] sm:$0xff]
    %v187 = vld [vmem:[%s10 + $0x10] sm:$0xff]
    %v188 = vld [vmem:[%s10 + $0x18] sm:$0xff]
    %v189 = vld [vmem:[%s11] sm:$0x1]
    %v190 = vld [vmem:[%s5] sm:$0xff]
    %vm191 = vcmask 31744
    %v193 = vsel %vm191, %v190, 0
    %v196 = vsel %vm110, %v184, 0
    %198 = vmatprep.subr.mxu0 0.0
    %199 = vmatpush1.msra.mxu0 %v196
    %200 = vmatprep.subr.mxu0 0.0
    %201 = vmatpush1.msra.mxu0 0.0
    %202 = vmatprep.subr.mxu0 0.0
    %203 = vmatpush1.msra.mxu0 0.0
    %204 = vmatprep.subr.mxu0 0.0
    %205 = vmatpush1.msra.mxu0 0.0
    %206 = vmatprep.subr.mxu0 0.0
    %207 = vmatpush1.msra.mxu0 0.0
    %208 = vmatprep.subr.mxu0 0.0
    %209 = vmatpush1.msra.mxu0 0.0
    %210 = vmatprep.subr.mxu0 0.0
    %211 = vmatpush1.msra.mxu0 0.0
    %212 = vmatprep.subr.mxu0 0.0
    %213 = vmatpush1.msra.mxu0 0.0
    %214 = vmatprep.subr.mxu0 0.0
    %215 = vmatpush1.msra.mxu0 0.0
    %216 = vmatprep.subr.mxu0 0.0
    %217 = vmatpush1.msra.mxu0 0.0
    %218 = vmatprep.subr.mxu0 0.0
    %219 = vmatpush1.msra.mxu0 0.0
    %220 = vmatprep.subr.mxu0 0.0
    %221 = vmatpush1.msra.mxu0 0.0
    %222 = vmatprep.subr.mxu0 0.0
    %223 = vmatpush1.msra.mxu0 0.0
    %224 = vmatprep.subr.mxu0 0.0
    %225 = vmatpush1.msra.mxu0 0.0
    %226 = vmatprep.subr.mxu0 0.0
    %227 = vmatpush1.msra.mxu0 0.0
    %228 = vmatprep.subr.mxu0 0.0
    %229 = vmatpush1.msra.mxu0 0.0
    %230 = vmatprep.subr.mxu0 0.0
    %231 = vmatpush1.msra.mxu0 0.0
    %232 = vmatprep.subr.mxu0 0.0
    %233 = vmatpush1.msra.mxu0 0.0
    %234 = vmatprep.subr.mxu0 0.0
    %235 = vmatpush1.msra.mxu0 0.0
    %236 = vmatprep.subr.mxu0 0.0
    %237 = vmatpush1.msra.mxu0 0.0
    %238 = vmatprep.subr.mxu0 0.0
    %239 = vmatpush1.msra.mxu0 0.0
    %240 = vmatprep.subr.mxu0 0.0
    %241 = vmatpush1.msra.mxu0 0.0
    %242 = vmatprep.subr.mxu0 0.0
    %243 = vmatpush1.msra.mxu0 0.0
    %244 = vmatprep.subr.mxu0 0.0
    %245 = vmatpush1.msra.mxu0 0.0
    %246 = vmatprep.subr.mxu0 0.0
    %247 = vmatpush1.msra.mxu0 0.0
    %248 = vmatprep.subr.mxu0 0.0
    %249 = vmatpush1.msra.mxu0 0.0
    %250 = vmatprep.subr.mxu0 0.0
    %251 = vmatpush1.msra.mxu0 0.0
    %252 = vmatprep.subr.mxu0 0.0
    %253 = vmatpush1.msra.mxu0 0.0
    %254 = vmatprep.subr.mxu0 0.0
    %255 = vmatpush1.msra.mxu0 0.0
    %256 = vmatprep.subr.mxu0 0.0
    %257 = vmatpush1.msra.mxu0 0.0
    %258 = vmatprep.subr.mxu0 0.0
    %259 = vmatpush1.msra.mxu0 0.0
    %260 = vmatprep.subr.mxu0 0.0
    %261 = vmatpush1.msra.mxu0 0.0
    %262 = vmatprep.mubr.f32.mxu0 0.0
    %263 = vmatmul.mubr.f32.gmra.mrb[0].mxu0 %v193
    %v264 = vpop.f32.mrb[0].mxu0
    %v265 = vadd.f32 %v181, %v264
    %v266 = vpop.f32.mrb[0].mxu0
    %267 = vdwg.mxu0
    %s268 = scalar_lea.vmem %s9, 15
    %v269 = vld [vmem:[%s268] sm:$0x1]
    %v271 = vlaneseq
    %v272 = vshrl.u32 %v271, 7
    %v273 = vsub.s32 0, %v272
    %v274 = vrot.slane %v269, %v273
    %v276 = vadd.f32 %v265, %v274
    %v277 = vmax.f32 %v276, 0.0
    %v279 = vlaneseq
    %v280 = vshrl.u32 %v279, 7
    %v281 = vsub.s32 0, %v280
    %v282 = vrot.slane %v189, %v281
    %vm284 = vcmask 261120
    %v286 = vsel %vm284, %v277, 0
    %288 = vmatprep.subr.mxu0 0.0
    %289 = vmatpush1.msra.mxu0 %v185
    %290 = vmatprep.subr.mxu0 0.0
    %291 = vmatpush1.msra.mxu0 %v186
    %292 = vmatprep.subr.mxu0 0.0
    %293 = vmatpush1.msra.mxu0 %v187
    %294 = vmatprep.subr.mxu0 0.0
    %295 = vmatpush1.msra.mxu0 %v188
    %296 = vmatprep.subr.mxu0 0.0
    %297 = vmatpush1.msra.mxu0 0.0
    %298 = vmatprep.subr.mxu0 0.0
    %299 = vmatpush1.msra.mxu0 0.0
    %300 = vmatprep.subr.mxu0 0.0
    %301 = vmatpush1.msra.mxu0 0.0
    %302 = vmatprep.subr.mxu0 0.0
    %303 = vmatpush1.msra.mxu0 0.0
    %304 = vmatprep.subr.mxu0 0.0
    %305 = vmatpush1.msra.mxu0 0.0
    %306 = vmatprep.subr.mxu0 0.0
    %307 = vmatpush1.msra.mxu0 0.0
    %308 = vmatprep.subr.mxu0 0.0
    %309 = vmatpush1.msra.mxu0 0.0
    %310 = vmatprep.subr.mxu0 0.0
    %311 = vmatpush1.msra.mxu0 0.0
    %312 = vmatprep.subr.mxu0 0.0
    %313 = vmatpush1.msra.mxu0 0.0
    %314 = vmatprep.subr.mxu0 0.0
    %315 = vmatpush1.msra.mxu0 0.0
    %316 = vmatprep.subr.mxu0 0.0
    %317 = vmatpush1.msra.mxu0 0.0
    %318 = vmatprep.subr.mxu0 0.0
    %319 = vmatpush1.msra.mxu0 0.0
    %320 = vmatprep.subr.mxu0 0.0
    %321 = vmatpush1.msra.mxu0 0.0
    %322 = vmatprep.subr.mxu0 0.0
    %323 = vmatpush1.msra.mxu0 0.0
    %324 = vmatprep.subr.mxu0 0.0
    %325 = vmatpush1.msra.mxu0 0.0
    %326 = vmatprep.subr.mxu0 0.0
    %327 = vmatpush1.msra.mxu0 0.0
    %328 = vmatprep.subr.mxu0 0.0
    %329 = vmatpush1.msra.mxu0 0.0
    %330 = vmatprep.subr.mxu0 0.0
    %331 = vmatpush1.msra.mxu0 0.0
    %332 = vmatprep.subr.mxu0 0.0
    %333 = vmatpush1.msra.mxu0 0.0
    %334 = vmatprep.subr.mxu0 0.0
    %335 = vmatpush1.msra.mxu0 0.0
    %336 = vmatprep.subr.mxu0 0.0
    %337 = vmatpush1.msra.mxu0 0.0
    %338 = vmatprep.subr.mxu0 0.0
    %339 = vmatpush1.msra.mxu0 0.0
    %340 = vmatprep.subr.mxu0 0.0
    %341 = vmatpush1.msra.mxu0 0.0
    %342 = vmatprep.subr.mxu0 0.0
    %343 = vmatpush1.msra.mxu0 0.0
    %344 = vmatprep.subr.mxu0 0.0
    %345 = vmatpush1.msra.mxu0 0.0
    %346 = vmatprep.subr.mxu0 0.0
    %347 = vmatpush1.msra.mxu0 0.0
    %348 = vmatprep.subr.mxu0 0.0
    %349 = vmatpush1.msra.mxu0 0.0
    %350 = vmatprep.subr.mxu0 0.0
    %351 = vmatpush1.msra.mxu0 0.0
    %352 = vmatprep.mubr.f32.mxu0 0.0
    %353 = vmatmul.mubr.f32.gmra.mrb[0].mxu0 %v286
    %v354 = vpop.f32.mrb[0].mxu0
    %v355 = vadd.f32 %v282, %v354
    %v356 = vpop.f32.mrb[0].mxu0
    %357 = vdwg.mxu0
    %s358 = sld [smem:[#allocation2 + $0xf]]
    %v359 = vstv %s358
    %v360 = vmul.f32 %v359, %v190
    %s361 = sld [smem:[#allocation4 + $0xf]]
    %v362 = vstv %s361
    %v363 = vmul.f32 %v362, %v355
    %v364 = vsub.f32 %v360, %v363
    %s365 = sld [smem:[#allocation6 + $0xf]]
    %v366 = vstv %s365
    %v367 = vmul.f32 %v366, %v364
    %s368 = sld [smem:[#allocation7 + $0xf]]
    %v369 = vstv %s368
    %v370 = vmul.f32 %v369, %v190
    %v371 = vadd.f32 %v367, %v370
    %s372 = sld [smem:[#allocation9 + $0xf]]
    %s373 = scalar_lea.vmem %s12, 120
    %v374 = vld [vmem:[%s373] sm:$0xff]
    %v375 = vstv %s372
    %v376 = vmul.f32 %v375, %v374
    %v377 = vadd.f32 %v371, %v376
    %v379 = vsel %vm191, %v377, 0
    %381 = vmatprep.subr.mxu0 0.0
    %382 = vmatpush1.msra.mxu0 %v196
    %383 = vmatprep.subr.mxu0 0.0
    %384 = vmatpush1.msra.mxu0 0.0
    %385 = vmatprep.subr.mxu0 0.0
    %386 = vmatpush1.msra.mxu0 0.0
    %387 = vmatprep.subr.mxu0 0.0
    %388 = vmatpush1.msra.mxu0 0.0
    %389 = vmatprep.subr.mxu0 0.0
    %390 = vmatpush1.msra.mxu0 0.0
    %391 = vmatprep.subr.mxu0 0.0
    %392 = vmatpush1.msra.mxu0 0.0
    %393 = vmatprep.subr.mxu0 0.0
    %394 = vmatpush1.msra.mxu0 0.0
    %395 = vmatprep.subr.mxu0 0.0
    %396 = vmatpush1.msra.mxu0 0.0
    %397 = vmatprep.subr.mxu0 0.0
    %398 = vmatpush1.msra.mxu0 0.0
    %399 = vmatprep.subr.mxu0 0.0
    %400 = vmatpush1.msra.mxu0 0.0
    %401 = vmatprep.subr.mxu0 0.0
    %402 = vmatpush1.msra.mxu0 0.0
    %403 = vmatprep.subr.mxu0 0.0
    %404 = vmatpush1.msra.mxu0 0.0
    %405 = vmatprep.subr.mxu0 0.0
    %406 = vmatpush1.msra.mxu0 0.0
    %407 = vmatprep.subr.mxu0 0.0
    %408 = vmatpush1.msra.mxu0 0.0
    %409 = vmatprep.subr.mxu0 0.0
    %410 = vmatpush1.msra.mxu0 0.0
    %411 = vmatprep.subr.mxu0 0.0
    %412 = vmatpush1.msra.mxu0 0.0
    %413 = vmatprep.subr.mxu0 0.0
    %414 = vmatpush1.msra.mxu0 0.0
    %415 = vmatprep.subr.mxu0 0.0
    %416 = vmatpush1.msra.mxu0 0.0
    %417 = vmatprep.subr.mxu0 0.0
    %418 = vmatpush1.msra.mxu0 0.0
    %419 = vmatprep.subr.mxu0 0.0
    %420 = vmatpush1.msra.mxu0 0.0
    %421 = vmatprep.subr.mxu0 0.0
    %422 = vmatpush1.msra.mxu0 0.0
    %423 = vmatprep.subr.mxu0 0.0
    %424 = vmatpush1.msra.mxu0 0.0
    %425 = vmatprep.subr.mxu0 0.0
    %426 = vmatpush1.msra.mxu0 0.0
    %427 = vmatprep.subr.mxu0 0.0
    %428 = vmatpush1.msra.mxu0 0.0
    %429 = vmatprep.subr.mxu0 0.0
    %430 = vmatpush1.msra.mxu0 0.0
    %431 = vmatprep.subr.mxu0 0.0
    %432 = vmatpush1.msra.mxu0 0.0
    %433 = vmatprep.subr.mxu0 0.0
    %434 = vmatpush1.msra.mxu0 0.0
    %435 = vmatprep.subr.mxu0 0.0
    %436 = vmatpush1.msra.mxu0 0.0
    %437 = vmatprep.subr.mxu0 0.0
    %438 = vmatpush1.msra.mxu0 0.0
    %439 = vmatprep.subr.mxu0 0.0
    %440 = vmatpush1.msra.mxu0 0.0
    %441 = vmatprep.subr.mxu0 0.0
    %442 = vmatpush1.msra.mxu0 0.0
    %443 = vmatprep.subr.mxu0 0.0
    %444 = vmatpush1.msra.mxu0 0.0
    %445 = vmatprep.mubr.f32.mxu0 0.0
    %446 = vmatmul.mubr.f32.gmra.mrb[0].mxu0 %v379
    %v447 = vpop.f32.mrb[0].mxu0
    %v448 = vadd.f32 %v181, %v447
    %v449 = vpop.f32.mrb[0].mxu0
    %450 = vdwg.mxu0
    %s451 = scalar_lea.vmem %s9, 14
    %v452 = vld [vmem:[%s451] sm:$0x1]
    %v454 = vlaneseq
    %v455 = vshrl.u32 %v454, 7
    %v456 = vsub.s32 0, %v455
    %v457 = vrot.slane %v452, %v456
    %v459 = vadd.f32 %v448, %v457
    %v460 = vmax.f32 %v459, 0.0
    %v462 = vsel %vm284, %v460, 0
    %464 = vmatprep.subr.mxu0 0.0
    %465 = vmatpush1.msra.mxu0 %v185
    %466 = vmatprep.subr.mxu0 0.0
    %467 = vmatpush1.msra.mxu0 %v186
    %468 = vmatprep.subr.mxu0 0.0
    %469 = vmatpush1.msra.mxu0 %v187
    %470 = vmatprep.subr.mxu0 0.0
    %471 = vmatpush1.msra.mxu0 %v188
    %472 = vmatprep.subr.mxu0 0.0
    %473 = vmatpush1.msra.mxu0 0.0
    %474 = vmatprep.subr.mxu0 0.0
    %475 = vmatpush1.msra.mxu0 0.0
    %476 = vmatprep.subr.mxu0 0.0
    %477 = vmatpush1.msra.mxu0 0.0
    %478 = vmatprep.subr.mxu0 0.0
    %479 = vmatpush1.msra.mxu0 0.0
    %480 = vmatprep.subr.mxu0 0.0
    %481 = vmatpush1.msra.mxu0 0.0
    %482 = vmatprep.subr.mxu0 0.0
    %483 = vmatpush1.msra.mxu0 0.0
    %484 = vmatprep.subr.mxu0 0.0
    %485 = vmatpush1.msra.mxu0 0.0
    %486 = vmatprep.subr.mxu0 0.0
    %487 = vmatpush1.msra.mxu0 0.0
    %488 = vmatprep.subr.mxu0 0.0
    %489 = vmatpush1.msra.mxu0 0.0
    %490 = vmatprep.subr.mxu0 0.0
    %491 = vmatpush1.msra.mxu0 0.0
    %492 = vmatprep.subr.mxu0 0.0
    %493 = vmatpush1.msra.mxu0 0.0
    %494 = vmatprep.subr.mxu0 0.0
    %495 = vmatpush1.msra.mxu0 0.0
    %496 = vmatprep.subr.mxu0 0.0
    %497 = vmatpush1.msra.mxu0 0.0
    %498 = vmatprep.subr.mxu0 0.0
    %499 = vmatpush1.msra.mxu0 0.0
    %500 = vmatprep.subr.mxu0 0.0
    %501 = vmatpush1.msra.mxu0 0.0
    %502 = vmatprep.subr.mxu0 0.0
    %503 = vmatpush1.msra.mxu0 0.0
    %504 = vmatprep.subr.mxu0 0.0
    %505 = vmatpush1.msra.mxu0 0.0
    %506 = vmatprep.subr.mxu0 0.0
    %507 = vmatpush1.msra.mxu0 0.0
    %508 = vmatprep.subr.mxu0 0.0
    %509 = vmatpush1.msra.mxu0 0.0
    %510 = vmatprep.subr.mxu0 0.0
    %511 = vmatpush1.msra.mxu0 0.0
    %512 = vmatprep.subr.mxu0 0.0
    %513 = vmatpush1.msra.mxu0 0.0
    %514 = vmatprep.subr.mxu0 0.0
    %515 = vmatpush1.msra.mxu0 0.0
    %516 = vmatprep.subr.mxu0 0.0
    %517 = vmatpush1.msra.mxu0 0.0
    %518 = vmatprep.subr.mxu0 0.0
    %519 = vmatpush1.msra.mxu0 0.0
    %520 = vmatprep.subr.mxu0 0.0
    %521 = vmatpush1.msra.mxu0 0.0
    %522 = vmatprep.subr.mxu0 0.0
    %523 = vmatpush1.msra.mxu0 0.0
    %524 = vmatprep.subr.mxu0 0.0
    %525 = vmatpush1.msra.mxu0 0.0
    %526 = vmatprep.subr.mxu0 0.0
    %527 = vmatpush1.msra.mxu0 0.0
    %528 = vmatprep.mubr.f32.mxu0 0.0
    %529 = vmatmul.mubr.f32.gmra.mrb[0].mxu0 %v462
    %v530 = vpop.f32.mrb[0].mxu0
    %v531 = vadd.f32 %v282, %v530
    %v532 = vpop.f32.mrb[0].mxu0
    %533 = vdwg.mxu0
    %s534 = sld [smem:[#allocation2 + $0xe]]
    %v535 = vstv %s534
    %v536 = vmul.f32 %v535, %v377
    %s537 = sld [smem:[#allocation4 + $0xe]]
    %v538 = vstv %s537
    %v539 = vmul.f32 %v538, %v531
    %v540 = vsub.f32 %v536, %v539
    %s541 = sld [smem:[#allocation6 + $0xe]]
    %v542 = vstv %s541
    %v543 = vmul.f32 %v542, %v540
    %s544 = sld [smem:[#allocation7 + $0xe]]
    %v545 = vstv %s544
    %v546 = vmul.f32 %v545, %v377
    %v547 = vadd.f32 %v543, %v546
    %s548 = sld [smem:[#allocation9 + $0xe]]
    %s549 = scalar_lea.vmem %s12, 112
    %v550 = vld [vmem:[%s549] sm:$0xff]
    %v551 = vstv %s548
    %v552 = vmul.f32 %v551, %v550
    %v553 = vadd.f32 %v547, %v552
    %v555 = vsel %vm191, %v553, 0
    %557 = vmatprep.subr.mxu0 0.0
    %558 = vmatpush1.msra.mxu0 %v196
    %559 = vmatprep.subr.mxu0 0.0
    %560 = vmatpush1.msra.mxu0 0.0
    %561 = vmatprep.subr.mxu0 0.0
    %562 = vmatpush1.msra.mxu0 0.0
    %563 = vmatprep.subr.mxu0 0.0
    %564 = vmatpush1.msra.mxu0 0.0
    %565 = vmatprep.subr.mxu0 0.0
    %566 = vmatpush1.msra.mxu0 0.0
    %567 = vmatprep.subr.mxu0 0.0
    %568 = vmatpush1.msra.mxu0 0.0
    %569 = vmatprep.subr.mxu0 0.0
    %570 = vmatpush1.msra.mxu0 0.0
    %571 = vmatprep.subr.mxu0 0.0
    %572 = vmatpush1.msra.mxu0 0.0
    %573 = vmatprep.subr.mxu0 0.0
    %574 = vmatpush1.msra.mxu0 0.0
    %575 = vmatprep.subr.mxu0 0.0
    %576 = vmatpush1.msra.mxu0 0.0
    %577 = vmatprep.subr.mxu0 0.0
    %578 = vmatpush1.msra.mxu0 0.0
    %579 = vmatprep.subr.mxu0 0.0
    %580 = vmatpush1.msra.mxu0 0.0
    %581 = vmatprep.subr.mxu0 0.0
    %582 = vmatpush1.msra.mxu0 0.0
    %583 = vmatprep.subr.mxu0 0.0
    %584 = vmatpush1.msra.mxu0 0.0
    %585 = vmatprep.subr.mxu0 0.0
    %586 = vmatpush1.msra.mxu0 0.0
    %587 = vmatprep.subr.mxu0 0.0
    %588 = vmatpush1.msra.mxu0 0.0
    %589 = vmatprep.subr.mxu0 0.0
    %590 = vmatpush1.msra.mxu0 0.0
    %591 = vmatprep.subr.mxu0 0.0
    %592 = vmatpush1.msra.mxu0 0.0
    %593 = vmatprep.subr.mxu0 0.0
    %594 = vmatpush1.msra.mxu0 0.0
    %595 = vmatprep.subr.mxu0 0.0
    %596 = vmatpush1.msra.mxu0 0.0
    %597 = vmatprep.subr.mxu0 0.0
    %598 = vmatpush1.msra.mxu0 0.0
    %599 = vmatprep.subr.mxu0 0.0
    %600 = vmatpush1.msra.mxu0 0.0
    %601 = vmatprep.subr.mxu0 0.0
    %602 = vmatpush1.msra.mxu0 0.0
    %603 = vmatprep.subr.mxu0 0.0
    %604 = vmatpush1.msra.mxu0 0.0
    %605 = vmatprep.subr.mxu0 0.0
    %606 = vmatpush1.msra.mxu0 0.0
    %607 = vmatprep.subr.mxu0 0.0
    %608 = vmatpush1.msra.mxu0 0.0
    %609 = vmatprep.subr.mxu0 0.0
    %610 = vmatpush1.msra.mxu0 0.0
    %611 = vmatprep.subr.mxu0 0.0
    %612 = vmatpush1.msra.mxu0 0.0
    %613 = vmatprep.subr.mxu0 0.0
    %614 = vmatpush1.msra.mxu0 0.0
    %615 = vmatprep.subr.mxu0 0.0
    %616 = vmatpush1.msra.mxu0 0.0
    %617 = vmatprep.subr.mxu0 0.0
    %618 = vmatpush1.msra.mxu0 0.0
    %619 = vmatprep.subr.mxu0 0.0
    %620 = vmatpush1.msra.mxu0 0.0
    %621 = vmatprep.mubr.f32.mxu0 0.0
    %622 = vmatmul.mubr.f32.gmra.mrb[0].mxu0 %v555
    %v623 = vpop.f32.mrb[0].mxu0
    %v624 = vadd.f32 %v181, %v623
    %v625 = vpop.f32.mrb[0].mxu0
    %626 = vdwg.mxu0
    %s627 = scalar_lea.vmem %s9, 13
    %v628 = vld [vmem:[%s627] sm:$0x1]
    %v630 = vlaneseq
    %v631 = vshrl.u32 %v630, 7
    %v632 = vsub.s32 0, %v631
    %v633 = vrot.slane %v628, %v632
    %v635 = vadd.f32 %v624, %v633
    %v636 = vmax.f32 %v635, 0.0
    %v638 = vsel %vm284, %v636, 0
    %640 = vmatprep.subr.mxu0 0.0
    %641 = vmatpush1.msra.mxu0 %v185
    %642 = vmatprep.subr.mxu0 0.0
    %643 = vmatpush1.msra.mxu0 %v186
    %644 = vmatprep.subr.mxu0 0.0
    %645 = vmatpush1.msra.mxu0 %v187
    %646 = vmatprep.subr.mxu0 0.0
    %647 = vmatpush1.msra.mxu0 %v188
    %648 = vmatprep.subr.mxu0 0.0
    %649 = vmatpush1.msra.mxu0 0.0
    %650 = vmatprep.subr.mxu0 0.0
    %651 = vmatpush1.msra.mxu0 0.0
    %652 = vmatprep.subr.mxu0 0.0
    %653 = vmatpush1.msra.mxu0 0.0
    %654 = vmatprep.subr.mxu0 0.0
    %655 = vmatpush1.msra.mxu0 0.0
    %656 = vmatprep.subr.mxu0 0.0
    %657 = vmatpush1.msra.mxu0 0.0
    %658 = vmatprep.subr.mxu0 0.0
    %659 = vmatpush1.msra.mxu0 0.0
    %660 = vmatprep.subr.mxu0 0.0
    %661 = vmatpush1.msra.mxu0 0.0
    %662 = vmatprep.subr.mxu0 0.0
    %663 = vmatpush1.msra.mxu0 0.0
    %664 = vmatprep.subr.mxu0 0.0
    %665 = vmatpush1.msra.mxu0 0.0
    %666 = vmatprep.subr.mxu0 0.0
    %667 = vmatpush1.msra.mxu0 0.0
    %668 = vmatprep.subr.mxu0 0.0
    %669 = vmatpush1.msra.mxu0 0.0
    %670 = vmatprep.subr.mxu0 0.0
    %671 = vmatpush1.msra.mxu0 0.0
    %672 = vmatprep.subr.mxu0 0.0
    %673 = vmatpush1.msra.mxu0 0.0
    %674 = vmatprep.subr.mxu0 0.0
    %675 = vmatpush1.msra.mxu0 0.0
    %676 = vmatprep.subr.mxu0 0.0
    %677 = vmatpush1.msra.mxu0 0.0
    %678 = vmatprep.subr.mxu0 0.0
    %679 = vmatpush1.msra.mxu0 0.0
    %680 = vmatprep.subr.mxu0 0.0
    %681 = vmatpush1.msra.mxu0 0.0
    %682 = vmatprep.subr.mxu0 0.0
    %683 = vmatpush1.msra.mxu0 0.0
    %684 = vmatprep.subr.mxu0 0.0
    %685 = vmatpush1.msra.mxu0 0.0
    %686 = vmatprep.subr.mxu0 0.0
    %687 = vmatpush1.msra.mxu0 0.0
    %688 = vmatprep.subr.mxu0 0.0
    %689 = vmatpush1.msra.mxu0 0.0
    %690 = vmatprep.subr.mxu0 0.0
    %691 = vmatpush1.msra.mxu0 0.0
    %692 = vmatprep.subr.mxu0 0.0
    %693 = vmatpush1.msra.mxu0 0.0
    %694 = vmatprep.subr.mxu0 0.0
    %695 = vmatpush1.msra.mxu0 0.0
    %696 = vmatprep.subr.mxu0 0.0
    %697 = vmatpush1.msra.mxu0 0.0
    %698 = vmatprep.subr.mxu0 0.0
    %699 = vmatpush1.msra.mxu0 0.0
    %700 = vmatprep.subr.mxu0 0.0
    %701 = vmatpush1.msra.mxu0 0.0
    %702 = vmatprep.subr.mxu0 0.0
    %703 = vmatpush1.msra.mxu0 0.0
    %704 = vmatprep.mubr.f32.mxu0 0.0
    %705 = vmatmul.mubr.f32.gmra.mrb[0].mxu0 %v638
    %v706 = vpop.f32.mrb[0].mxu0
    %v707 = vadd.f32 %v282, %v706
    %v708 = vpop.f32.mrb[0].mxu0
    %709 = vdwg.mxu0
    %s710 = sld [smem:[#allocation2 + $0xd]]
    %v711 = vstv %s710
    %v712 = vmul.f32 %v711, %v553
    %s713 = sld [smem:[#allocation4 + $0xd]]
    %v714 = vstv %s713
    %v715 = vmul.f32 %v714, %v707
    %v716 = vsub.f32 %v712, %v715
    %s717 = sld [smem:[#allocation6 + $0xd]]
    %v718 = vstv %s717
    %v719 = vmul.f32 %v718, %v716
    %s720 = sld [smem:[#allocation7 + $0xd]]
    %v721 = vstv %s720
    %v722 = vmul.f32 %v721, %v553
    %v723 = vadd.f32 %v719, %v722
    %s724 = sld [smem:[#allocation9 + $0xd]]
    %s725 = scalar_lea.vmem %s12, 104
    %v726 = vld [vmem:[%s725] sm:$0xff]
    %v727 = vstv %s724
    %v728 = vmul.f32 %v727, %v726
    %v729 = vadd.f32 %v723, %v728
    %v731 = vsel %vm191, %v729, 0
    %733 = vmatprep.subr.mxu0 0.0
    %734 = vmatpush1.msra.mxu0 %v196
    %735 = vmatprep.subr.mxu0 0.0
    %736 = vmatpush1.msra.mxu0 0.0
    %737 = vmatprep.subr.mxu0 0.0
    %738 = vmatpush1.msra.mxu0 0.0
    %739 = vmatprep.subr.mxu0 0.0
    %740 = vmatpush1.msra.mxu0 0.0
    %741 = vmatprep.subr.mxu0 0.0
    %742 = vmatpush1.msra.mxu0 0.0
    %743 = vmatprep.subr.mxu0 0.0
    %744 = vmatpush1.msra.mxu0 0.0
    %745 = vmatprep.subr.mxu0 0.0
    %746 = vmatpush1.msra.mxu0 0.0
    %747 = vmatprep.subr.mxu0 0.0
    %748 = vmatpush1.msra.mxu0 0.0
    %749 = vmatprep.subr.mxu0 0.0
    %750 = vmatpush1.msra.mxu0 0.0
    %751 = vmatprep.subr.mxu0 0.0
    %752 = vmatpush1.msra.mxu0 0.0
    %753 = vmatprep.subr.mxu0 0.0
    %754 = vmatpush1.msra.mxu0 0.0
    %755 = vmatprep.subr.mxu0 0.0
    %756 = vmatpush1.msra.mxu0 0.0
    %757 = vmatprep.subr.mxu0 0.0
    %758 = vmatpush1.msra.mxu0 0.0
    %759 = vmatprep.subr.mxu0 0.0
    %760 = vmatpush1.msra.mxu0 0.0
    %761 = vmatprep.subr.mxu0 0.0
    %762 = vmatpush1.msra.mxu0 0.0
    %763 = vmatprep.subr.mxu0 0.0
    %764 = vmatpush1.msra.mxu0 0.0
    %765 = vmatprep.subr.mxu0 0.0
    %766 = vmatpush1.msra.mxu0 0.0
    %767 = vmatprep.subr.mxu0 0.0
    %768 = vmatpush1.msra.mxu0 0.0
    %769 = vmatprep.subr.mxu0 0.0
    %770 = vmatpush1.msra.mxu0 0.0
    %771 = vmatprep.subr.mxu0 0.0
    %772 = vmatpush1.msra.mxu0 0.0
    %773 = vmatprep.subr.mxu0 0.0
    %774 = vmatpush1.msra.mxu0 0.0
    %775 = vmatprep.subr.mxu0 0.0
    %776 = vmatpush1.msra.mxu0 0.0
    %777 = vmatprep.subr.mxu0 0.0
    %778 = vmatpush1.msra.mxu0 0.0
    %779 = vmatprep.subr.mxu0 0.0
    %780 = vmatpush1.msra.mxu0 0.0
    %781 = vmatprep.subr.mxu0 0.0
    %782 = vmatpush1.msra.mxu0 0.0
    %783 = vmatprep.subr.mxu0 0.0
    %784 = vmatpush1.msra.mxu0 0.0
    %785 = vmatprep.subr.mxu0 0.0
    %786 = vmatpush1.msra.mxu0 0.0
    %787 = vmatprep.subr.mxu0 0.0
    %788 = vmatpush1.msra.mxu0 0.0
    %789 = vmatprep.subr.mxu0 0.0
    %790 = vmatpush1.msra.mxu0 0.0
    %791 = vmatprep.subr.mxu0 0.0
    %792 = vmatpush1.msra.mxu0 0.0
    %793 = vmatprep.subr.mxu0 0.0
    %794 = vmatpush1.msra.mxu0 0.0
    %795 = vmatprep.subr.mxu0 0.0
    %796 = vmatpush1.msra.mxu0 0.0
    %797 = vmatprep.mubr.f32.mxu0 0.0
    %798 = vmatmul.mubr.f32.gmra.mrb[0].mxu0 %v731
    %v799 = vpop.f32.mrb[0].mxu0
    %v800 = vadd.f32 %v181, %v799
    %v801 = vpop.f32.mrb[0].mxu0
    %802 = vdwg.mxu0
    %s803 = scalar_lea.vmem %s9, 12
    %v804 = vld [vmem:[%s803] sm:$0x1]
    %v806 = vlaneseq
    %v807 = vshrl.u32 %v806, 7
    %v808 = vsub.s32 0, %v807
    %v809 = vrot.slane %v804, %v808
    %v811 = vadd.f32 %v800, %v809
    %v812 = vmax.f32 %v811, 0.0
    %v814 = vsel %vm284, %v812, 0
    %816 = vmatprep.subr.mxu0 0.0
    %817 = vmatpush1.msra.mxu0 %v185
    %818 = vmatprep.subr.mxu0 0.0
    %819 = vmatpush1.msra.mxu0 %v186
    %820 = vmatprep.subr.mxu0 0.0
    %821 = vmatpush1.msra.mxu0 %v187
    %822 = vmatprep.subr.mxu0 0.0
    %823 = vmatpush1.msra.mxu0 %v188
    %824 = vmatprep.subr.mxu0 0.0
    %825 = vmatpush1.msra.mxu0 0.0
    %826 = vmatprep.subr.mxu0 0.0
    %827 = vmatpush1.msra.mxu0 0.0
    %828 = vmatprep.subr.mxu0 0.0
    %829 = vmatpush1.msra.mxu0 0.0
    %830 = vmatprep.subr.mxu0 0.0
    %831 = vmatpush1.msra.mxu0 0.0
    %832 = vmatprep.subr.mxu0 0.0
    %833 = vmatpush1.msra.mxu0 0.0
    %834 = vmatprep.subr.mxu0 0.0
    %835 = vmatpush1.msra.mxu0 0.0
    %836 = vmatprep.subr.mxu0 0.0
    %837 = vmatpush1.msra.mxu0 0.0
    %838 = vmatprep.subr.mxu0 0.0
    %839 = vmatpush1.msra.mxu0 0.0
    %840 = vmatprep.subr.mxu0 0.0
    %841 = vmatpush1.msra.mxu0 0.0
    %842 = vmatprep.subr.mxu0 0.0
    %843 = vmatpush1.msra.mxu0 0.0
    %844 = vmatprep.subr.mxu0 0.0
    %845 = vmatpush1.msra.mxu0 0.0
    %846 = vmatprep.subr.mxu0 0.0
    %847 = vmatpush1.msra.mxu0 0.0
    %848 = vmatprep.subr.mxu0 0.0
    %849 = vmatpush1.msra.mxu0 0.0
    %850 = vmatprep.subr.mxu0 0.0
    %851 = vmatpush1.msra.mxu0 0.0
    %852 = vmatprep.subr.mxu0 0.0
    %853 = vmatpush1.msra.mxu0 0.0
    %854 = vmatprep.subr.mxu0 0.0
    %855 = vmatpush1.msra.mxu0 0.0
    %856 = vmatprep.subr.mxu0 0.0
    %857 = vmatpush1.msra.mxu0 0.0
    %858 = vmatprep.subr.mxu0 0.0
    %859 = vmatpush1.msra.mxu0 0.0
    %860 = vmatprep.subr.mxu0 0.0
    %861 = vmatpush1.msra.mxu0 0.0
    %862 = vmatprep.subr.mxu0 0.0
    %863 = vmatpush1.msra.mxu0 0.0
    %864 = vmatprep.subr.mxu0 0.0
    %865 = vmatpush1.msra.mxu0 0.0
    %866 = vmatprep.subr.mxu0 0.0
    %867 = vmatpush1.msra.mxu0 0.0
    %868 = vmatprep.subr.mxu0 0.0
    %869 = vmatpush1.msra.mxu0 0.0
    %870 = vmatprep.subr.mxu0 0.0
    %871 = vmatpush1.msra.mxu0 0.0
    %872 = vmatprep.subr.mxu0 0.0
    %873 = vmatpush1.msra.mxu0 0.0
    %874 = vmatprep.subr.mxu0 0.0
    %875 = vmatpush1.msra.mxu0 0.0
    %876 = vmatprep.subr.mxu0 0.0
    %877 = vmatpush1.msra.mxu0 0.0
    %878 = vmatprep.subr.mxu0 0.0
    %879 = vmatpush1.msra.mxu0 0.0
    %880 = vmatprep.mubr.f32.mxu0 0.0
    %881 = vmatmul.mubr.f32.gmra.mrb[0].mxu0 %v814
    %v882 = vpop.f32.mrb[0].mxu0
    %v883 = vadd.f32 %v282, %v882
    %v884 = vpop.f32.mrb[0].mxu0
    %885 = vdwg.mxu0
    %s886 = sld [smem:[#allocation2 + $0xc]]
    %v887 = vstv %s886
    %v888 = vmul.f32 %v887, %v729
    %s889 = sld [smem:[#allocation4 + $0xc]]
    %v890 = vstv %s889
    %v891 = vmul.f32 %v890, %v883
    %v892 = vsub.f32 %v888, %v891
    %s893 = sld [smem:[#allocation6 + $0xc]]
    %v894 = vstv %s893
    %v895 = vmul.f32 %v894, %v892
    %s896 = sld [smem:[#allocation7 + $0xc]]
    %v897 = vstv %s896
    %v898 = vmul.f32 %v897, %v729
    %v899 = vadd.f32 %v895, %v898
    %s900 = sld [smem:[#allocation9 + $0xc]]
    %s901 = scalar_lea.vmem %s12, 96
    %v902 = vld [vmem:[%s901] sm:$0xff]
    %v903 = vstv %s900
    %v904 = vmul.f32 %v903, %v902
    %v905 = vadd.f32 %v899, %v904
    %v907 = vsel %vm191, %v905, 0
    %909 = vmatprep.subr.mxu0 0.0
    %910 = vmatpush1.msra.mxu0 %v196
    %911 = vmatprep.subr.mxu0 0.0
    %912 = vmatpush1.msra.mxu0 0.0
    %913 = vmatprep.subr.mxu0 0.0
    %914 = vmatpush1.msra.mxu0 0.0
    %915 = vmatprep.subr.mxu0 0.0
    %916 = vmatpush1.msra.mxu0 0.0
    %917 = vmatprep.subr.mxu0 0.0
    %918 = vmatpush1.msra.mxu0 0.0
    %919 = vmatprep.subr.mxu0 0.0
    %920 = vmatpush1.msra.mxu0 0.0
    %921 = vmatprep.subr.mxu0 0.0
    %922 = vmatpush1.msra.mxu0 0.0
    %923 = vmatprep.subr.mxu0 0.0
    %924 = vmatpush1.msra.mxu0 0.0
    %925 = vmatprep.subr.mxu0 0.0
    %926 = vmatpush1.msra.mxu0 0.0
    %927 = vmatprep.subr.mxu0 0.0
    %928 = vmatpush1.msra.mxu0 0.0
    %929 = vmatprep.subr.mxu0 0.0
    %930 = vmatpush1.msra.mxu0 0.0
    %931 = vmatprep.subr.mxu0 0.0
    %932 = vmatpush1.msra.mxu0 0.0
    %933 = vmatprep.subr.mxu0 0.0
    %934 = vmatpush1.msra.mxu0 0.0
    %935 = vmatprep.subr.mxu0 0.0
    %936 = vmatpush1.msra.mxu0 0.0
    %937 = vmatprep.subr.mxu0 0.0
    %938 = vmatpush1.msra.mxu0 0.0
    %939 = vmatprep.subr.mxu0 0.0
    %940 = vmatpush1.msra.mxu0 0.0
    %941 = vmatprep.subr.mxu0 0.0
    %942 = vmatpush1.msra.mxu0 0.0
    %943 = vmatprep.subr.mxu0 0.0
    %944 = vmatpush1.msra.mxu0 0.0
    %945 = vmatprep.subr.mxu0 0.0
    %946 = vmatpush1.msra.mxu0 0.0
    %947 = vmatprep.subr.mxu0 0.0
    %948 = vmatpush1.msra.mxu0 0.0
    %949 = vmatprep.subr.mxu0 0.0
    %950 = vmatpush1.msra.mxu0 0.0
    %951 = vmatprep.subr.mxu0 0.0
    %952 = vmatpush1.msra.mxu0 0.0
    %953 = vmatprep.subr.mxu0 0.0
    %954 = vmatpush1.msra.mxu0 0.0
    %955 = vmatprep.subr.mxu0 0.0
    %956 = vmatpush1.msra.mxu0 0.0
    %957 = vmatprep.subr.mxu0 0.0
    %958 = vmatpush1.msra.mxu0 0.0
    %959 = vmatprep.subr.mxu0 0.0
    %960 = vmatpush1.msra.mxu0 0.0
    %961 = vmatprep.subr.mxu0 0.0
    %962 = vmatpush1.msra.mxu0 0.0
    %963 = vmatprep.subr.mxu0 0.0
    %964 = vmatpush1.msra.mxu0 0.0
    %965 = vmatprep.subr.mxu0 0.0
    %966 = vmatpush1.msra.mxu0 0.0
    %967 = vmatprep.subr.mxu0 0.0
    %968 = vmatpush1.msra.mxu0 0.0
    %969 = vmatprep.subr.mxu0 0.0
    %970 = vmatpush1.msra.mxu0 0.0
    %971 = vmatprep.subr.mxu0 0.0
    %972 = vmatpush1.msra.mxu0 0.0
    %973 = vmatprep.mubr.f32.mxu0 0.0
    %974 = vmatmul.mubr.f32.gmra.mrb[0].mxu0 %v907
    %v975 = vpop.f32.mrb[0].mxu0
    %v976 = vadd.f32 %v181, %v975
    %v977 = vpop.f32.mrb[0].mxu0
    %978 = vdwg.mxu0
    %s979 = scalar_lea.vmem %s9, 11
    %v980 = vld [vmem:[%s979] sm:$0x1]
    %v982 = vlaneseq
    %v983 = vshrl.u32 %v982, 7
    %v984 = vsub.s32 0, %v983
    %v985 = vrot.slane %v980, %v984
    %v987 = vadd.f32 %v976, %v985
    %v988 = vmax.f32 %v987, 0.0
    %v990 = vsel %vm284, %v988, 0
    %992 = vmatprep.subr.mxu0 0.0
    %993 = vmatpush1.msra.mxu0 %v185
    %994 = vmatprep.subr.mxu0 0.0
    %995 = vmatpush1.msra.mxu0 %v186
    %996 = vmatprep.subr.mxu0 0.0
    %997 = vmatpush1.msra.mxu0 %v187
    %998 = vmatprep.subr.mxu0 0.0
    %999 = vmatpush1.msra.mxu0 %v188
    %1000 = vmatprep.subr.mxu0 0.0
    %1001 = vmatpush1.msra.mxu0 0.0
    %1002 = vmatprep.subr.mxu0 0.0
    %1003 = vmatpush1.msra.mxu0 0.0
    %1004 = vmatprep.subr.mxu0 0.0
    %1005 = vmatpush1.msra.mxu0 0.0
    %1006 = vmatprep.subr.mxu0 0.0
    %1007 = vmatpush1.msra.mxu0 0.0
    %1008 = vmatprep.subr.mxu0 0.0
    %1009 = vmatpush1.msra.mxu0 0.0
    %1010 = vmatprep.subr.mxu0 0.0
    %1011 = vmatpush1.msra.mxu0 0.0
    %1012 = vmatprep.subr.mxu0 0.0
    %1013 = vmatpush1.msra.mxu0 0.0
    %1014 = vmatprep.subr.mxu0 0.0
    %1015 = vmatpush1.msra.mxu0 0.0
    %1016 = vmatprep.subr.mxu0 0.0
    %1017 = vmatpush1.msra.mxu0 0.0
    %1018 = vmatprep.subr.mxu0 0.0
    %1019 = vmatpush1.msra.mxu0 0.0
    %1020 = vmatprep.subr.mxu0 0.0
    %1021 = vmatpush1.msra.mxu0 0.0
    %1022 = vmatprep.subr.mxu0 0.0
    %1023 = vmatpush1.msra.mxu0 0.0
    %1024 = vmatprep.subr.mxu0 0.0
    %1025 = vmatpush1.msra.mxu0 0.0
    %1026 = vmatprep.subr.mxu0 0.0
    %1027 = vmatpush1.msra.mxu0 0.0
    %1028 = vmatprep.subr.mxu0 0.0
    %1029 = vmatpush1.msra.mxu0 0.0
    %1030 = vmatprep.subr.mxu0 0.0
    %1031 = vmatpush1.msra.mxu0 0.0
    %1032 = vmatprep.subr.mxu0 0.0
    %1033 = vmatpush1.msra.mxu0 0.0
    %1034 = vmatprep.subr.mxu0 0.0
    %1035 = vmatpush1.msra.mxu0 0.0
    %1036 = vmatprep.subr.mxu0 0.0
    %1037 = vmatpush1.msra.mxu0 0.0
    %1038 = vmatprep.subr.mxu0 0.0
    %1039 = vmatpush1.msra.mxu0 0.0
    %1040 = vmatprep.subr.mxu0 0.0
    %1041 = vmatpush1.msra.mxu0 0.0
    %1042 = vmatprep.subr.mxu0 0.0
    %1043 = vmatpush1.msra.mxu0 0.0
    %1044 = vmatprep.subr.mxu0 0.0
    %1045 = vmatpush1.msra.mxu0 0.0
    %1046 = vmatprep.subr.mxu0 0.0
    %1047 = vmatpush1.msra.mxu0 0.0
    %1048 = vmatprep.subr.mxu0 0.0
    %1049 = vmatpush1.msra.mxu0 0.0
    %1050 = vmatprep.subr.mxu0 0.0
    %1051 = vmatpush1.msra.mxu0 0.0
    %1052 = vmatprep.subr.mxu0 0.0
    %1053 = vmatpush1.msra.mxu0 0.0
    %1054 = vmatprep.subr.mxu0 0.0
    %1055 = vmatpush1.msra.mxu0 0.0
    %1056 = vmatprep.mubr.f32.mxu0 0.0
    %1057 = vmatmul.mubr.f32.gmra.mrb[0].mxu0 %v990
    %v1058 = vpop.f32.mrb[0].mxu0
    %v1059 = vadd.f32 %v282, %v1058
    %v1060 = vpop.f32.mrb[0].mxu0
    %1061 = vdwg.mxu0
    %s1062 = sld [smem:[#allocation2 + $0xb]]
    %v1063 = vstv %s1062
    %v1064 = vmul.f32 %v1063, %v905
    %s1065 = sld [smem:[#allocation4 + $0xb]]
    %v1066 = vstv %s1065
    %v1067 = vmul.f32 %v1066, %v1059
    %v1068 = vsub.f32 %v1064, %v1067
    %s1069 = sld [smem:[#allocation6 + $0xb]]
    %v1070 = vstv %s1069
    %v1071 = vmul.f32 %v1070, %v1068
    %s1072 = sld [smem:[#allocation7 + $0xb]]
    %v1073 = vstv %s1072
    %v1074 = vmul.f32 %v1073, %v905
    %v1075 = vadd.f32 %v1071, %v1074
    %s1076 = sld [smem:[#allocation9 + $0xb]]
    %s1077 = scalar_lea.vmem %s12, 88
    %v1078 = vld [vmem:[%s1077] sm:$0xff]
    %v1079 = vstv %s1076
    %v1080 = vmul.f32 %v1079, %v1078
    %v1081 = vadd.f32 %v1075, %v1080
    %v1083 = vsel %vm191, %v1081, 0
    %1085 = vmatprep.subr.mxu0 0.0
    %1086 = vmatpush1.msra.mxu0 %v196
    %1087 = vmatprep.subr.mxu0 0.0
    %1088 = vmatpush1.msra.mxu0 0.0
    %1089 = vmatprep.subr.mxu0 0.0
    %1090 = vmatpush1.msra.mxu0 0.0
    %1091 = vmatprep.subr.mxu0 0.0
    %1092 = vmatpush1.msra.mxu0 0.0
    %1093 = vmatprep.subr.mxu0 0.0
    %1094 = vmatpush1.msra.mxu0 0.0
    %1095 = vmatprep.subr.mxu0 0.0
    %1096 = vmatpush1.msra.mxu0 0.0
    %1097 = vmatprep.subr.mxu0 0.0
    %1098 = vmatpush1.msra.mxu0 0.0
    %1099 = vmatprep.subr.mxu0 0.0
    %1100 = vmatpush1.msra.mxu0 0.0
    %1101 = vmatprep.subr.mxu0 0.0
    %1102 = vmatpush1.msra.mxu0 0.0
    %1103 = vmatprep.subr.mxu0 0.0
    %1104 = vmatpush1.msra.mxu0 0.0
    %1105 = vmatprep.subr.mxu0 0.0
    %1106 = vmatpush1.msra.mxu0 0.0
    %1107 = vmatprep.subr.mxu0 0.0
    %1108 = vmatpush1.msra.mxu0 0.0
    %1109 = vmatprep.subr.mxu0 0.0
    %1110 = vmatpush1.msra.mxu0 0.0
    %1111 = vmatprep.subr.mxu0 0.0
    %1112 = vmatpush1.msra.mxu0 0.0
    %1113 = vmatprep.subr.mxu0 0.0
    %1114 = vmatpush1.msra.mxu0 0.0
    %1115 = vmatprep.subr.mxu0 0.0
    %1116 = vmatpush1.msra.mxu0 0.0
    %1117 = vmatprep.subr.mxu0 0.0
    %1118 = vmatpush1.msra.mxu0 0.0
    %1119 = vmatprep.subr.mxu0 0.0
    %1120 = vmatpush1.msra.mxu0 0.0
    %1121 = vmatprep.subr.mxu0 0.0
    %1122 = vmatpush1.msra.mxu0 0.0
    %1123 = vmatprep.subr.mxu0 0.0
    %1124 = vmatpush1.msra.mxu0 0.0
    %1125 = vmatprep.subr.mxu0 0.0
    %1126 = vmatpush1.msra.mxu0 0.0
    %1127 = vmatprep.subr.mxu0 0.0
    %1128 = vmatpush1.msra.mxu0 0.0
    %1129 = vmatprep.subr.mxu0 0.0
    %1130 = vmatpush1.msra.mxu0 0.0
    %1131 = vmatprep.subr.mxu0 0.0
    %1132 = vmatpush1.msra.mxu0 0.0
    %1133 = vmatprep.subr.mxu0 0.0
    %1134 = vmatpush1.msra.mxu0 0.0
    %1135 = vmatprep.subr.mxu0 0.0
    %1136 = vmatpush1.msra.mxu0 0.0
    %1137 = vmatprep.subr.mxu0 0.0
    %1138 = vmatpush1.msra.mxu0 0.0
    %1139 = vmatprep.subr.mxu0 0.0
    %1140 = vmatpush1.msra.mxu0 0.0
    %1141 = vmatprep.subr.mxu0 0.0
    %1142 = vmatpush1.msra.mxu0 0.0
    %1143 = vmatprep.subr.mxu0 0.0
    %1144 = vmatpush1.msra.mxu0 0.0
    %1145 = vmatprep.subr.mxu0 0.0
    %1146 = vmatpush1.msra.mxu0 0.0
    %1147 = vmatprep.subr.mxu0 0.0
    %1148 = vmatpush1.msra.mxu0 0.0
    %1149 = vmatprep.mubr.f32.mxu0 0.0
    %1150 = vmatmul.mubr.f32.gmra.mrb[0].mxu0 %v1083
    %v1151 = vpop.f32.mrb[0].mxu0
    %v1152 = vadd.f32 %v181, %v1151
    %v1153 = vpop.f32.mrb[0].mxu0
    %1154 = vdwg.mxu0
    %s1155 = scalar_lea.vmem %s9, 10
    %v1156 = vld [vmem:[%s1155] sm:$0x1]
    %v1158 = vlaneseq
    %v1159 = vshrl.u32 %v1158, 7
    %v1160 = vsub.s32 0, %v1159
    %v1161 = vrot.slane %v1156, %v1160
    %v1163 = vadd.f32 %v1152, %v1161
    %v1164 = vmax.f32 %v1163, 0.0
    %v1166 = vsel %vm284, %v1164, 0
    %1168 = vmatprep.subr.mxu0 0.0
    %1169 = vmatpush1.msra.mxu0 %v185
    %1170 = vmatprep.subr.mxu0 0.0
    %1171 = vmatpush1.msra.mxu0 %v186
    %1172 = vmatprep.subr.mxu0 0.0
    %1173 = vmatpush1.msra.mxu0 %v187
    %1174 = vmatprep.subr.mxu0 0.0
    %1175 = vmatpush1.msra.mxu0 %v188
    %1176 = vmatprep.subr.mxu0 0.0
    %1177 = vmatpush1.msra.mxu0 0.0
    %1178 = vmatprep.subr.mxu0 0.0
    %1179 = vmatpush1.msra.mxu0 0.0
    %1180 = vmatprep.subr.mxu0 0.0
    %1181 = vmatpush1.msra.mxu0 0.0
    %1182 = vmatprep.subr.mxu0 0.0
    %1183 = vmatpush1.msra.mxu0 0.0
    %1184 = vmatprep.subr.mxu0 0.0
    %1185 = vmatpush1.msra.mxu0 0.0
    %1186 = vmatprep.subr.mxu0 0.0
    %1187 = vmatpush1.msra.mxu0 0.0
    %1188 = vmatprep.subr.mxu0 0.0
    %1189 = vmatpush1.msra.mxu0 0.0
    %1190 = vmatprep.subr.mxu0 0.0
    %1191 = vmatpush1.msra.mxu0 0.0
    %1192 = vmatprep.subr.mxu0 0.0
    %1193 = vmatpush1.msra.mxu0 0.0
    %1194 = vmatprep.subr.mxu0 0.0
    %1195 = vmatpush1.msra.mxu0 0.0
    %1196 = vmatprep.subr.mxu0 0.0
    %1197 = vmatpush1.msra.mxu0 0.0
    %1198 = vmatprep.subr.mxu0 0.0
    %1199 = vmatpush1.msra.mxu0 0.0
    %1200 = vmatprep.subr.mxu0 0.0
    %1201 = vmatpush1.msra.mxu0 0.0
    %1202 = vmatprep.subr.mxu0 0.0
    %1203 = vmatpush1.msra.mxu0 0.0
    %1204 = vmatprep.subr.mxu0 0.0
    %1205 = vmatpush1.msra.mxu0 0.0
    %1206 = vmatprep.subr.mxu0 0.0
    %1207 = vmatpush1.msra.mxu0 0.0
    %1208 = vmatprep.subr.mxu0 0.0
    %1209 = vmatpush1.msra.mxu0 0.0
    %1210 = vmatprep.subr.mxu0 0.0
    %1211 = vmatpush1.msra.mxu0 0.0
    %1212 = vmatprep.subr.mxu0 0.0
    %1213 = vmatpush1.msra.mxu0 0.0
    %1214 = vmatprep.subr.mxu0 0.0
    %1215 = vmatpush1.msra.mxu0 0.0
    %1216 = vmatprep.subr.mxu0 0.0
    %1217 = vmatpush1.msra.mxu0 0.0
    %1218 = vmatprep.subr.mxu0 0.0
    %1219 = vmatpush1.msra.mxu0 0.0
    %1220 = vmatprep.subr.mxu0 0.0
    %1221 = vmatpush1.msra.mxu0 0.0
    %1222 = vmatprep.subr.mxu0 0.0
    %1223 = vmatpush1.msra.mxu0 0.0
    %1224 = vmatprep.subr.mxu0 0.0
    %1225 = vmatpush1.msra.mxu0 0.0
    %1226 = vmatprep.subr.mxu0 0.0
    %1227 = vmatpush1.msra.mxu0 0.0
    %1228 = vmatprep.subr.mxu0 0.0
    %1229 = vmatpush1.msra.mxu0 0.0
    %1230 = vmatprep.subr.mxu0 0.0
    %1231 = vmatpush1.msra.mxu0 0.0
    %1232 = vmatprep.mubr.f32.mxu0 0.0
    %1233 = vmatmul.mubr.f32.gmra.mrb[0].mxu0 %v1166
    %v1234 = vpop.f32.mrb[0].mxu0
    %v1235 = vadd.f32 %v282, %v1234
    %v1236 = vpop.f32.mrb[0].mxu0
    %1237 = vdwg.mxu0
    %s1238 = sld [smem:[#allocation2 + $0xa]]
    %v1239 = vstv %s1238
    %v1240 = vmul.f32 %v1239, %v1081
    %s1241 = sld [smem:[#allocation4 + $0xa]]
    %v1242 = vstv %s1241
    %v1243 = vmul.f32 %v1242, %v1235
    %v1244 = vsub.f32 %v1240, %v1243
    %s1245 = sld [smem:[#allocation6 + $0xa]]
    %v1246 = vstv %s1245
    %v1247 = vmul.f32 %v1246, %v1244
    %s1248 = sld [smem:[#allocation7 + $0xa]]
    %v1249 = vstv %s1248
    %v1250 = vmul.f32 %v1249, %v1081
    %v1251 = vadd.f32 %v1247, %v1250
    %s1252 = sld [smem:[#allocation9 + $0xa]]
    %s1253 = scalar_lea.vmem %s12, 80
    %v1254 = vld [vmem:[%s1253] sm:$0xff]
    %v1255 = vstv %s1252
    %v1256 = vmul.f32 %v1255, %v1254
    %v1257 = vadd.f32 %v1251, %v1256
    %v1259 = vsel %vm191, %v1257, 0
    %1261 = vmatprep.subr.mxu0 0.0
    %1262 = vmatpush1.msra.mxu0 %v196
    %1263 = vmatprep.subr.mxu0 0.0
    %1264 = vmatpush1.msra.mxu0 0.0
    %1265 = vmatprep.subr.mxu0 0.0
    %1266 = vmatpush1.msra.mxu0 0.0
    %1267 = vmatprep.subr.mxu0 0.0
    %1268 = vmatpush1.msra.mxu0 0.0
    %1269 = vmatprep.subr.mxu0 0.0
    %1270 = vmatpush1.msra.mxu0 0.0
    %1271 = vmatprep.subr.mxu0 0.0
    %1272 = vmatpush1.msra.mxu0 0.0
    %1273 = vmatprep.subr.mxu0 0.0
    %1274 = vmatpush1.msra.mxu0 0.0
    %1275 = vmatprep.subr.mxu0 0.0
    %1276 = vmatpush1.msra.mxu0 0.0
    %1277 = vmatprep.subr.mxu0 0.0
    %1278 = vmatpush1.msra.mxu0 0.0
    %1279 = vmatprep.subr.mxu0 0.0
    %1280 = vmatpush1.msra.mxu0 0.0
    %1281 = vmatprep.subr.mxu0 0.0
    %1282 = vmatpush1.msra.mxu0 0.0
    %1283 = vmatprep.subr.mxu0 0.0
    %1284 = vmatpush1.msra.mxu0 0.0
    %1285 = vmatprep.subr.mxu0 0.0
    %1286 = vmatpush1.msra.mxu0 0.0
    %1287 = vmatprep.subr.mxu0 0.0
    %1288 = vmatpush1.msra.mxu0 0.0
    %1289 = vmatprep.subr.mxu0 0.0
    %1290 = vmatpush1.msra.mxu0 0.0
    %1291 = vmatprep.subr.mxu0 0.0
    %1292 = vmatpush1.msra.mxu0 0.0
    %1293 = vmatprep.subr.mxu0 0.0
    %1294 = vmatpush1.msra.mxu0 0.0
    %1295 = vmatprep.subr.mxu0 0.0
    %1296 = vmatpush1.msra.mxu0 0.0
    %1297 = vmatprep.subr.mxu0 0.0
    %1298 = vmatpush1.msra.mxu0 0.0
    %1299 = vmatprep.subr.mxu0 0.0
    %1300 = vmatpush1.msra.mxu0 0.0
    %1301 = vmatprep.subr.mxu0 0.0
    %1302 = vmatpush1.msra.mxu0 0.0
    %1303 = vmatprep.subr.mxu0 0.0
    %1304 = vmatpush1.msra.mxu0 0.0
    %1305 = vmatprep.subr.mxu0 0.0
    %1306 = vmatpush1.msra.mxu0 0.0
    %1307 = vmatprep.subr.mxu0 0.0
    %1308 = vmatpush1.msra.mxu0 0.0
    %1309 = vmatprep.subr.mxu0 0.0
    %1310 = vmatpush1.msra.mxu0 0.0
    %1311 = vmatprep.subr.mxu0 0.0
    %1312 = vmatpush1.msra.mxu0 0.0
    %1313 = vmatprep.subr.mxu0 0.0
    %1314 = vmatpush1.msra.mxu0 0.0
    %1315 = vmatprep.subr.mxu0 0.0
    %1316 = vmatpush1.msra.mxu0 0.0
    %1317 = vmatprep.subr.mxu0 0.0
    %1318 = vmatpush1.msra.mxu0 0.0
    %1319 = vmatprep.subr.mxu0 0.0
    %1320 = vmatpush1.msra.mxu0 0.0
    %1321 = vmatprep.subr.mxu0 0.0
    %1322 = vmatpush1.msra.mxu0 0.0
    %1323 = vmatprep.subr.mxu0 0.0
    %1324 = vmatpush1.msra.mxu0 0.0
    %1325 = vmatprep.mubr.f32.mxu0 0.0
    %1326 = vmatmul.mubr.f32.gmra.mrb[0].mxu0 %v1259
    %v1327 = vpop.f32.mrb[0].mxu0
    %v1328 = vadd.f32 %v181, %v1327
    %v1329 = vpop.f32.mrb[0].mxu0
    %1330 = vdwg.mxu0
    %s1331 = scalar_lea.vmem %s9, 9
    %v1332 = vld [vmem:[%s1331] sm:$0x1]
    %v1334 = vlaneseq
    %v1335 = vshrl.u32 %v1334, 7
    %v1336 = vsub.s32 0, %v1335
    %v1337 = vrot.slane %v1332, %v1336
    %v1339 = vadd.f32 %v1328, %v1337
    %v1340 = vmax.f32 %v1339, 0.0
    %v1342 = vsel %vm284, %v1340, 0
    %1344 = vmatprep.subr.mxu0 0.0
    %1345 = vmatpush1.msra.mxu0 %v185
    %1346 = vmatprep.subr.mxu0 0.0
    %1347 = vmatpush1.msra.mxu0 %v186
    %1348 = vmatprep.subr.mxu0 0.0
    %1349 = vmatpush1.msra.mxu0 %v187
    %1350 = vmatprep.subr.mxu0 0.0
    %1351 = vmatpush1.msra.mxu0 %v188
    %1352 = vmatprep.subr.mxu0 0.0
    %1353 = vmatpush1.msra.mxu0 0.0
    %1354 = vmatprep.subr.mxu0 0.0
    %1355 = vmatpush1.msra.mxu0 0.0
    %1356 = vmatprep.subr.mxu0 0.0
    %1357 = vmatpush1.msra.mxu0 0.0
    %1358 = vmatprep.subr.mxu0 0.0
    %1359 = vmatpush1.msra.mxu0 0.0
    %1360 = vmatprep.subr.mxu0 0.0
    %1361 = vmatpush1.msra.mxu0 0.0
    %1362 = vmatprep.subr.mxu0 0.0
    %1363 = vmatpush1.msra.mxu0 0.0
    %1364 = vmatprep.subr.mxu0 0.0
    %1365 = vmatpush1.msra.mxu0 0.0
    %1366 = vmatprep.subr.mxu0 0.0
    %1367 = vmatpush1.msra.mxu0 0.0
    %1368 = vmatprep.subr.mxu0 0.0
    %1369 = vmatpush1.msra.mxu0 0.0
    %1370 = vmatprep.subr.mxu0 0.0
    %1371 = vmatpush1.msra.mxu0 0.0
    %1372 = vmatprep.subr.mxu0 0.0
    %1373 = vmatpush1.msra.mxu0 0.0
    %1374 = vmatprep.subr.mxu0 0.0
    %1375 = vmatpush1.msra.mxu0 0.0
    %1376 = vmatprep.subr.mxu0 0.0
    %1377 = vmatpush1.msra.mxu0 0.0
    %1378 = vmatprep.subr.mxu0 0.0
    %1379 = vmatpush1.msra.mxu0 0.0
    %1380 = vmatprep.subr.mxu0 0.0
    %1381 = vmatpush1.msra.mxu0 0.0
    %1382 = vmatprep.subr.mxu0 0.0
    %1383 = vmatpush1.msra.mxu0 0.0
    %1384 = vmatprep.subr.mxu0 0.0
    %1385 = vmatpush1.msra.mxu0 0.0
    %1386 = vmatprep.subr.mxu0 0.0
    %1387 = vmatpush1.msra.mxu0 0.0
    %1388 = vmatprep.subr.mxu0 0.0
    %1389 = vmatpush1.msra.mxu0 0.0
    %1390 = vmatprep.subr.mxu0 0.0
    %1391 = vmatpush1.msra.mxu0 0.0
    %1392 = vmatprep.subr.mxu0 0.0
    %1393 = vmatpush1.msra.mxu0 0.0
    %1394 = vmatprep.subr.mxu0 0.0
    %1395 = vmatpush1.msra.mxu0 0.0
    %1396 = vmatprep.subr.mxu0 0.0
    %1397 = vmatpush1.msra.mxu0 0.0
    %1398 = vmatprep.subr.mxu0 0.0
    %1399 = vmatpush1.msra.mxu0 0.0
    %1400 = vmatprep.subr.mxu0 0.0
    %1401 = vmatpush1.msra.mxu0 0.0
    %1402 = vmatprep.subr.mxu0 0.0
    %1403 = vmatpush1.msra.mxu0 0.0
    %1404 = vmatprep.subr.mxu0 0.0
    %1405 = vmatpush1.msra.mxu0 0.0
    %1406 = vmatprep.subr.mxu0 0.0
    %1407 = vmatpush1.msra.mxu0 0.0
    %1408 = vmatprep.mubr.f32.mxu0 0.0
    %1409 = vmatmul.mubr.f32.gmra.mrb[0].mxu0 %v1342
    %v1410 = vpop.f32.mrb[0].mxu0
    %v1411 = vadd.f32 %v282, %v1410
    %v1412 = vpop.f32.mrb[0].mxu0
    %1413 = vdwg.mxu0
    %s1414 = sld [smem:[#allocation2 + $0x9]]
    %v1415 = vstv %s1414
    %v1416 = vmul.f32 %v1415, %v1257
    %s1417 = sld [smem:[#allocation4 + $0x9]]
    %v1418 = vstv %s1417
    %v1419 = vmul.f32 %v1418, %v1411
    %v1420 = vsub.f32 %v1416, %v1419
    %s1421 = sld [smem:[#allocation6 + $0x9]]
    %v1422 = vstv %s1421
    %v1423 = vmul.f32 %v1422, %v1420
    %s1424 = sld [smem:[#allocation7 + $0x9]]
    %v1425 = vstv %s1424
    %v1426 = vmul.f32 %v1425, %v1257
    %v1427 = vadd.f32 %v1423, %v1426
    %s1428 = sld [smem:[#allocation9 + $0x9]]
    %s1429 = scalar_lea.vmem %s12, 72
    %v1430 = vld [vmem:[%s1429] sm:$0xff]
    %v1431 = vstv %s1428
    %v1432 = vmul.f32 %v1431, %v1430
    %v1433 = vadd.f32 %v1427, %v1432
    %v1435 = vsel %vm191, %v1433, 0
    %1437 = vmatprep.subr.mxu0 0.0
    %1438 = vmatpush1.msra.mxu0 %v196
    %1439 = vmatprep.subr.mxu0 0.0
    %1440 = vmatpush1.msra.mxu0 0.0
    %1441 = vmatprep.subr.mxu0 0.0
    %1442 = vmatpush1.msra.mxu0 0.0
    %1443 = vmatprep.subr.mxu0 0.0
    %1444 = vmatpush1.msra.mxu0 0.0
    %1445 = vmatprep.subr.mxu0 0.0
    %1446 = vmatpush1.msra.mxu0 0.0
    %1447 = vmatprep.subr.mxu0 0.0
    %1448 = vmatpush1.msra.mxu0 0.0
    %1449 = vmatprep.subr.mxu0 0.0
    %1450 = vmatpush1.msra.mxu0 0.0
    %1451 = vmatprep.subr.mxu0 0.0
    %1452 = vmatpush1.msra.mxu0 0.0
    %1453 = vmatprep.subr.mxu0 0.0
    %1454 = vmatpush1.msra.mxu0 0.0
    %1455 = vmatprep.subr.mxu0 0.0
    %1456 = vmatpush1.msra.mxu0 0.0
    %1457 = vmatprep.subr.mxu0 0.0
    %1458 = vmatpush1.msra.mxu0 0.0
    %1459 = vmatprep.subr.mxu0 0.0
    %1460 = vmatpush1.msra.mxu0 0.0
    %1461 = vmatprep.subr.mxu0 0.0
    %1462 = vmatpush1.msra.mxu0 0.0
    %1463 = vmatprep.subr.mxu0 0.0
    %1464 = vmatpush1.msra.mxu0 0.0
    %1465 = vmatprep.subr.mxu0 0.0
    %1466 = vmatpush1.msra.mxu0 0.0
    %1467 = vmatprep.subr.mxu0 0.0
    %1468 = vmatpush1.msra.mxu0 0.0
    %1469 = vmatprep.subr.mxu0 0.0
    %1470 = vmatpush1.msra.mxu0 0.0
    %1471 = vmatprep.subr.mxu0 0.0
    %1472 = vmatpush1.msra.mxu0 0.0
    %1473 = vmatprep.subr.mxu0 0.0
    %1474 = vmatpush1.msra.mxu0 0.0
    %1475 = vmatprep.subr.mxu0 0.0
    %1476 = vmatpush1.msra.mxu0 0.0
    %1477 = vmatprep.subr.mxu0 0.0
    %1478 = vmatpush1.msra.mxu0 0.0
    %1479 = vmatprep.subr.mxu0 0.0
    %1480 = vmatpush1.msra.mxu0 0.0
    %1481 = vmatprep.subr.mxu0 0.0
    %1482 = vmatpush1.msra.mxu0 0.0
    %1483 = vmatprep.subr.mxu0 0.0
    %1484 = vmatpush1.msra.mxu0 0.0
    %1485 = vmatprep.subr.mxu0 0.0
    %1486 = vmatpush1.msra.mxu0 0.0
    %1487 = vmatprep.subr.mxu0 0.0
    %1488 = vmatpush1.msra.mxu0 0.0
    %1489 = vmatprep.subr.mxu0 0.0
    %1490 = vmatpush1.msra.mxu0 0.0
    %1491 = vmatprep.subr.mxu0 0.0
    %1492 = vmatpush1.msra.mxu0 0.0
    %1493 = vmatprep.subr.mxu0 0.0
    %1494 = vmatpush1.msra.mxu0 0.0
    %1495 = vmatprep.subr.mxu0 0.0
    %1496 = vmatpush1.msra.mxu0 0.0
    %1497 = vmatprep.subr.mxu0 0.0
    %1498 = vmatpush1.msra.mxu0 0.0
    %1499 = vmatprep.subr.mxu0 0.0
    %1500 = vmatpush1.msra.mxu0 0.0
    %1501 = vmatprep.mubr.f32.mxu0 0.0
    %1502 = vmatmul.mubr.f32.gmra.mrb[0].mxu0 %v1435
    %v1503 = vpop.f32.mrb[0].mxu0
    %v1504 = vadd.f32 %v181, %v1503
    %v1505 = vpop.f32.mrb[0].mxu0
    %1506 = vdwg.mxu0
    %s1507 = scalar_lea.vmem %s9, 8
    %v1508 = vld [vmem:[%s1507] sm:$0x1]
    %v1510 = vlaneseq
    %v1511 = vshrl.u32 %v1510, 7
    %v1512 = vsub.s32 0, %v1511
    %v1513 = vrot.slane %v1508, %v1512
    %v1515 = vadd.f32 %v1504, %v1513
    %v1516 = vmax.f32 %v1515, 0.0
    %v1518 = vsel %vm284, %v1516, 0
    %1520 = vmatprep.subr.mxu0 0.0
    %1521 = vmatpush1.msra.mxu0 %v185
    %1522 = vmatprep.subr.mxu0 0.0
    %1523 = vmatpush1.msra.mxu0 %v186
    %1524 = vmatprep.subr.mxu0 0.0
    %1525 = vmatpush1.msra.mxu0 %v187
    %1526 = vmatprep.subr.mxu0 0.0
    %1527 = vmatpush1.msra.mxu0 %v188
    %1528 = vmatprep.subr.mxu0 0.0
    %1529 = vmatpush1.msra.mxu0 0.0
    %1530 = vmatprep.subr.mxu0 0.0
    %1531 = vmatpush1.msra.mxu0 0.0
    %1532 = vmatprep.subr.mxu0 0.0
    %1533 = vmatpush1.msra.mxu0 0.0
    %1534 = vmatprep.subr.mxu0 0.0
    %1535 = vmatpush1.msra.mxu0 0.0
    %1536 = vmatprep.subr.mxu0 0.0
    %1537 = vmatpush1.msra.mxu0 0.0
    %1538 = vmatprep.subr.mxu0 0.0
    %1539 = vmatpush1.msra.mxu0 0.0
    %1540 = vmatprep.subr.mxu0 0.0
    %1541 = vmatpush1.msra.mxu0 0.0
    %1542 = vmatprep.subr.mxu0 0.0
    %1543 = vmatpush1.msra.mxu0 0.0
    %1544 = vmatprep.subr.mxu0 0.0
    %1545 = vmatpush1.msra.mxu0 0.0
    %1546 = vmatprep.subr.mxu0 0.0
    %1547 = vmatpush1.msra.mxu0 0.0
    %1548 = vmatprep.subr.mxu0 0.0
    %1549 = vmatpush1.msra.mxu0 0.0
    %1550 = vmatprep.subr.mxu0 0.0
    %1551 = vmatpush1.msra.mxu0 0.0
    %1552 = vmatprep.subr.mxu0 0.0
    %1553 = vmatpush1.msra.mxu0 0.0
    %1554 = vmatprep.subr.mxu0 0.0
    %1555 = vmatpush1.msra.mxu0 0.0
    %1556 = vmatprep.subr.mxu0 0.0
    %1557 = vmatpush1.msra.mxu0 0.0
    %1558 = vmatprep.subr.mxu0 0.0
    %1559 = vmatpush1.msra.mxu0 0.0
    %1560 = vmatprep.subr.mxu0 0.0
    %1561 = vmatpush1.msra.mxu0 0.0
    %1562 = vmatprep.subr.mxu0 0.0
    %1563 = vmatpush1.msra.mxu0 0.0
    %1564 = vmatprep.subr.mxu0 0.0
    %1565 = vmatpush1.msra.mxu0 0.0
    %1566 = vmatprep.subr.mxu0 0.0
    %1567 = vmatpush1.msra.mxu0 0.0
    %1568 = vmatprep.subr.mxu0 0.0
    %1569 = vmatpush1.msra.mxu0 0.0
    %1570 = vmatprep.subr.mxu0 0.0
    %1571 = vmatpush1.msra.mxu0 0.0
    %1572 = vmatprep.subr.mxu0 0.0
    %1573 = vmatpush1.msra.mxu0 0.0
    %1574 = vmatprep.subr.mxu0 0.0
    %1575 = vmatpush1.msra.mxu0 0.0
    %1576 = vmatprep.subr.mxu0 0.0
    %1577 = vmatpush1.msra.mxu0 0.0
    %1578 = vmatprep.subr.mxu0 0.0
    %1579 = vmatpush1.msra.mxu0 0.0
    %1580 = vmatprep.subr.mxu0 0.0
    %1581 = vmatpush1.msra.mxu0 0.0
    %1582 = vmatprep.subr.mxu0 0.0
    %1583 = vmatpush1.msra.mxu0 0.0
    %1584 = vmatprep.mubr.f32.mxu0 0.0
    %1585 = vmatmul.mubr.f32.gmra.mrb[0].mxu0 %v1518
    %v1586 = vpop.f32.mrb[0].mxu0
    %v1587 = vadd.f32 %v282, %v1586
    %v1588 = vpop.f32.mrb[0].mxu0
    %1589 = vdwg.mxu0
    %s1590 = sld [smem:[#allocation2 + $0x8]]
    %v1591 = vstv %s1590
    %v1592 = vmul.f32 %v1591, %v1433
    %s1593 = sld [smem:[#allocation4 + $0x8]]
    %v1594 = vstv %s1593
    %v1595 = vmul.f32 %v1594, %v1587
    %v1596 = vsub.f32 %v1592, %v1595
    %s1597 = sld [smem:[#allocation6 + $0x8]]
    %v1598 = vstv %s1597
    %v1599 = vmul.f32 %v1598, %v1596
    %s1600 = sld [smem:[#allocation7 + $0x8]]
    %v1601 = vstv %s1600
    %v1602 = vmul.f32 %v1601, %v1433
    %v1603 = vadd.f32 %v1599, %v1602
    %s1604 = sld [smem:[#allocation9 + $0x8]]
    %s1605 = scalar_lea.vmem %s12, 64
    %v1606 = vld [vmem:[%s1605] sm:$0xff]
    %v1607 = vstv %s1604
    %v1608 = vmul.f32 %v1607, %v1606
    %v1609 = vadd.f32 %v1603, %v1608
    %v1611 = vsel %vm191, %v1609, 0
    %1613 = vmatprep.subr.mxu0 0.0
    %1614 = vmatpush1.msra.mxu0 %v196
    %1615 = vmatprep.subr.mxu0 0.0
    %1616 = vmatpush1.msra.mxu0 0.0
    %1617 = vmatprep.subr.mxu0 0.0
    %1618 = vmatpush1.msra.mxu0 0.0
    %1619 = vmatprep.subr.mxu0 0.0
    %1620 = vmatpush1.msra.mxu0 0.0
    %1621 = vmatprep.subr.mxu0 0.0
    %1622 = vmatpush1.msra.mxu0 0.0
    %1623 = vmatprep.subr.mxu0 0.0
    %1624 = vmatpush1.msra.mxu0 0.0
    %1625 = vmatprep.subr.mxu0 0.0
    %1626 = vmatpush1.msra.mxu0 0.0
    %1627 = vmatprep.subr.mxu0 0.0
    %1628 = vmatpush1.msra.mxu0 0.0
    %1629 = vmatprep.subr.mxu0 0.0
    %1630 = vmatpush1.msra.mxu0 0.0
    %1631 = vmatprep.subr.mxu0 0.0
    %1632 = vmatpush1.msra.mxu0 0.0
    %1633 = vmatprep.subr.mxu0 0.0
    %1634 = vmatpush1.msra.mxu0 0.0
    %1635 = vmatprep.subr.mxu0 0.0
    %1636 = vmatpush1.msra.mxu0 0.0
    %1637 = vmatprep.subr.mxu0 0.0
    %1638 = vmatpush1.msra.mxu0 0.0
    %1639 = vmatprep.subr.mxu0 0.0
    %1640 = vmatpush1.msra.mxu0 0.0
    %1641 = vmatprep.subr.mxu0 0.0
    %1642 = vmatpush1.msra.mxu0 0.0
    %1643 = vmatprep.subr.mxu0 0.0
    %1644 = vmatpush1.msra.mxu0 0.0
    %1645 = vmatprep.subr.mxu0 0.0
    %1646 = vmatpush1.msra.mxu0 0.0
    %1647 = vmatprep.subr.mxu0 0.0
    %1648 = vmatpush1.msra.mxu0 0.0
    %1649 = vmatprep.subr.mxu0 0.0
    %1650 = vmatpush1.msra.mxu0 0.0
    %1651 = vmatprep.subr.mxu0 0.0
    %1652 = vmatpush1.msra.mxu0 0.0
    %1653 = vmatprep.subr.mxu0 0.0
    %1654 = vmatpush1.msra.mxu0 0.0
    %1655 = vmatprep.subr.mxu0 0.0
    %1656 = vmatpush1.msra.mxu0 0.0
    %1657 = vmatprep.subr.mxu0 0.0
    %1658 = vmatpush1.msra.mxu0 0.0
    %1659 = vmatprep.subr.mxu0 0.0
    %1660 = vmatpush1.msra.mxu0 0.0
    %1661 = vmatprep.subr.mxu0 0.0
    %1662 = vmatpush1.msra.mxu0 0.0
    %1663 = vmatprep.subr.mxu0 0.0
    %1664 = vmatpush1.msra.mxu0 0.0
    %1665 = vmatprep.subr.mxu0 0.0
    %1666 = vmatpush1.msra.mxu0 0.0
    %1667 = vmatprep.subr.mxu0 0.0
    %1668 = vmatpush1.msra.mxu0 0.0
    %1669 = vmatprep.subr.mxu0 0.0
    %1670 = vmatpush1.msra.mxu0 0.0
    %1671 = vmatprep.subr.mxu0 0.0
    %1672 = vmatpush1.msra.mxu0 0.0
    %1673 = vmatprep.subr.mxu0 0.0
    %1674 = vmatpush1.msra.mxu0 0.0
    %1675 = vmatprep.subr.mxu0 0.0
    %1676 = vmatpush1.msra.mxu0 0.0
    %1677 = vmatprep.mubr.f32.mxu0 0.0
    %1678 = vmatmul.mubr.f32.gmra.mrb[0].mxu0 %v1611
    %v1679 = vpop.f32.mrb[0].mxu0
    %v1680 = vadd.f32 %v181, %v1679
    %v1681 = vpop.f32.mrb[0].mxu0
    %1682 = vdwg.mxu0
    %s1683 = scalar_lea.vmem %s9, 7
    %v1684 = vld [vmem:[%s1683] sm:$0x1]
    %v1686 = vlaneseq
    %v1687 = vshrl.u32 %v1686, 7
    %v1688 = vsub.s32 0, %v1687
    %v1689 = vrot.slane %v1684, %v1688
    %v1691 = vadd.f32 %v1680, %v1689
    %v1692 = vmax.f32 %v1691, 0.0
    %v1694 = vsel %vm284, %v1692, 0
    %1696 = vmatprep.subr.mxu0 0.0
    %1697 = vmatpush1.msra.mxu0 %v185
    %1698 = vmatprep.subr.mxu0 0.0
    %1699 = vmatpush1.msra.mxu0 %v186
    %1700 = vmatprep.subr.mxu0 0.0
    %1701 = vmatpush1.msra.mxu0 %v187
    %1702 = vmatprep.subr.mxu0 0.0
    %1703 = vmatpush1.msra.mxu0 %v188
    %1704 = vmatprep.subr.mxu0 0.0
    %1705 = vmatpush1.msra.mxu0 0.0
    %1706 = vmatprep.subr.mxu0 0.0
    %1707 = vmatpush1.msra.mxu0 0.0
    %1708 = vmatprep.subr.mxu0 0.0
    %1709 = vmatpush1.msra.mxu0 0.0
    %1710 = vmatprep.subr.mxu0 0.0
    %1711 = vmatpush1.msra.mxu0 0.0
    %1712 = vmatprep.subr.mxu0 0.0
    %1713 = vmatpush1.msra.mxu0 0.0
    %1714 = vmatprep.subr.mxu0 0.0
    %1715 = vmatpush1.msra.mxu0 0.0
    %1716 = vmatprep.subr.mxu0 0.0
    %1717 = vmatpush1.msra.mxu0 0.0
    %1718 = vmatprep.subr.mxu0 0.0
    %1719 = vmatpush1.msra.mxu0 0.0
    %1720 = vmatprep.subr.mxu0 0.0
    %1721 = vmatpush1.msra.mxu0 0.0
    %1722 = vmatprep.subr.mxu0 0.0
    %1723 = vmatpush1.msra.mxu0 0.0
    %1724 = vmatprep.subr.mxu0 0.0
    %1725 = vmatpush1.msra.mxu0 0.0
    %1726 = vmatprep.subr.mxu0 0.0
    %1727 = vmatpush1.msra.mxu0 0.0
    %1728 = vmatprep.subr.mxu0 0.0
    %1729 = vmatpush1.msra.mxu0 0.0
    %1730 = vmatprep.subr.mxu0 0.0
    %1731 = vmatpush1.msra.mxu0 0.0
    %1732 = vmatprep.subr.mxu0 0.0
    %1733 = vmatpush1.msra.mxu0 0.0
    %1734 = vmatprep.subr.mxu0 0.0
    %1735 = vmatpush1.msra.mxu0 0.0
    %1736 = vmatprep.subr.mxu0 0.0
    %1737 = vmatpush1.msra.mxu0 0.0
    %1738 = vmatprep.subr.mxu0 0.0
    %1739 = vmatpush1.msra.mxu0 0.0
    %1740 = vmatprep.subr.mxu0 0.0
    %1741 = vmatpush1.msra.mxu0 0.0
    %1742 = vmatprep.subr.mxu0 0.0
    %1743 = vmatpush1.msra.mxu0 0.0
    %1744 = vmatprep.subr.mxu0 0.0
    %1745 = vmatpush1.msra.mxu0 0.0
    %1746 = vmatprep.subr.mxu0 0.0
    %1747 = vmatpush1.msra.mxu0 0.0
    %1748 = vmatprep.subr.mxu0 0.0
    %1749 = vmatpush1.msra.mxu0 0.0
    %1750 = vmatprep.subr.mxu0 0.0
    %1751 = vmatpush1.msra.mxu0 0.0
    %1752 = vmatprep.subr.mxu0 0.0
    %1753 = vmatpush1.msra.mxu0 0.0
    %1754 = vmatprep.subr.mxu0 0.0
    %1755 = vmatpush1.msra.mxu0 0.0
    %1756 = vmatprep.subr.mxu0 0.0
    %1757 = vmatpush1.msra.mxu0 0.0
    %1758 = vmatprep.subr.mxu0 0.0
    %1759 = vmatpush1.msra.mxu0 0.0
    %1760 = vmatprep.mubr.f32.mxu0 0.0
    %1761 = vmatmul.mubr.f32.gmra.mrb[0].mxu0 %v1694
    %v1762 = vpop.f32.mrb[0].mxu0
    %v1763 = vadd.f32 %v282, %v1762
    %v1764 = vpop.f32.mrb[0].mxu0
    %1765 = vdwg.mxu0
    %s1766 = sld [smem:[#allocation2 + $0x7]]
    %v1767 = vstv %s1766
    %v1768 = vmul.f32 %v1767, %v1609
    %s1769 = sld [smem:[#allocation4 + $0x7]]
    %v1770 = vstv %s1769
    %v1771 = vmul.f32 %v1770, %v1763
    %v1772 = vsub.f32 %v1768, %v1771
    %s1773 = sld [smem:[#allocation6 + $0x7]]
    %v1774 = vstv %s1773
    %v1775 = vmul.f32 %v1774, %v1772
    %s1776 = sld [smem:[#allocation7 + $0x7]]
    %v1777 = vstv %s1776
    %v1778 = vmul.f32 %v1777, %v1609
    %v1779 = vadd.f32 %v1775, %v1778
    %s1780 = sld [smem:[#allocation9 + $0x7]]
    %s1781 = scalar_lea.vmem %s12, 56
    %v1782 = vld [vmem:[%s1781] sm:$0xff]
    %v1783 = vstv %s1780
    %v1784 = vmul.f32 %v1783, %v1782
    %v1785 = vadd.f32 %v1779, %v1784
    %v1787 = vsel %vm191, %v1785, 0
    %1789 = vmatprep.subr.mxu0 0.0
    %1790 = vmatpush1.msra.mxu0 %v196
    %1791 = vmatprep.subr.mxu0 0.0
    %1792 = vmatpush1.msra.mxu0 0.0
    %1793 = vmatprep.subr.mxu0 0.0
    %1794 = vmatpush1.msra.mxu0 0.0
    %1795 = vmatprep.subr.mxu0 0.0
    %1796 = vmatpush1.msra.mxu0 0.0
    %1797 = vmatprep.subr.mxu0 0.0
    %1798 = vmatpush1.msra.mxu0 0.0
    %1799 = vmatprep.subr.mxu0 0.0
    %1800 = vmatpush1.msra.mxu0 0.0
    %1801 = vmatprep.subr.mxu0 0.0
    %1802 = vmatpush1.msra.mxu0 0.0
    %1803 = vmatprep.subr.mxu0 0.0
    %1804 = vmatpush1.msra.mxu0 0.0
    %1805 = vmatprep.subr.mxu0 0.0
    %1806 = vmatpush1.msra.mxu0 0.0
    %1807 = vmatprep.subr.mxu0 0.0
    %1808 = vmatpush1.msra.mxu0 0.0
    %1809 = vmatprep.subr.mxu0 0.0
    %1810 = vmatpush1.msra.mxu0 0.0
    %1811 = vmatprep.subr.mxu0 0.0
    %1812 = vmatpush1.msra.mxu0 0.0
    %1813 = vmatprep.subr.mxu0 0.0
    %1814 = vmatpush1.msra.mxu0 0.0
    %1815 = vmatprep.subr.mxu0 0.0
    %1816 = vmatpush1.msra.mxu0 0.0
    %1817 = vmatprep.subr.mxu0 0.0
    %1818 = vmatpush1.msra.mxu0 0.0
    %1819 = vmatprep.subr.mxu0 0.0
    %1820 = vmatpush1.msra.mxu0 0.0
    %1821 = vmatprep.subr.mxu0 0.0
    %1822 = vmatpush1.msra.mxu0 0.0
    %1823 = vmatprep.subr.mxu0 0.0
    %1824 = vmatpush1.msra.mxu0 0.0
    %1825 = vmatprep.subr.mxu0 0.0
    %1826 = vmatpush1.msra.mxu0 0.0
    %1827 = vmatprep.subr.mxu0 0.0
    %1828 = vmatpush1.msra.mxu0 0.0
    %1829 = vmatprep.subr.mxu0 0.0
    %1830 = vmatpush1.msra.mxu0 0.0
    %1831 = vmatprep.subr.mxu0 0.0
    %1832 = vmatpush1.msra.mxu0 0.0
    %1833 = vmatprep.subr.mxu0 0.0
    %1834 = vmatpush1.msra.mxu0 0.0
    %1835 = vmatprep.subr.mxu0 0.0
    %1836 = vmatpush1.msra.mxu0 0.0
    %1837 = vmatprep.subr.mxu0 0.0
    %1838 = vmatpush1.msra.mxu0 0.0
    %1839 = vmatprep.subr.mxu0 0.0
    %1840 = vmatpush1.msra.mxu0 0.0
    %1841 = vmatprep.subr.mxu0 0.0
    %1842 = vmatpush1.msra.mxu0 0.0
    %1843 = vmatprep.subr.mxu0 0.0
    %1844 = vmatpush1.msra.mxu0 0.0
    %1845 = vmatprep.subr.mxu0 0.0
    %1846 = vmatpush1.msra.mxu0 0.0
    %1847 = vmatprep.subr.mxu0 0.0
    %1848 = vmatpush1.msra.mxu0 0.0
    %1849 = vmatprep.subr.mxu0 0.0
    %1850 = vmatpush1.msra.mxu0 0.0
    %1851 = vmatprep.subr.mxu0 0.0
    %1852 = vmatpush1.msra.mxu0 0.0
    %1853 = vmatprep.mubr.f32.mxu0 0.0
    %1854 = vmatmul.mubr.f32.gmra.mrb[0].mxu0 %v1787
    %v1855 = vpop.f32.mrb[0].mxu0
    %v1856 = vadd.f32 %v181, %v1855
    %v1857 = vpop.f32.mrb[0].mxu0
    %1858 = vdwg.mxu0
    %s1859 = scalar_lea.vmem %s9, 6
    %v1860 = vld [vmem:[%s1859] sm:$0x1]
    %v1862 = vlaneseq
    %v1863 = vshrl.u32 %v1862, 7
    %v1864 = vsub.s32 0, %v1863
    %v1865 = vrot.slane %v1860, %v1864
    %v1867 = vadd.f32 %v1856, %v1865
    %v1868 = vmax.f32 %v1867, 0.0
    %v1870 = vsel %vm284, %v1868, 0
    %1872 = vmatprep.subr.mxu0 0.0
    %1873 = vmatpush1.msra.mxu0 %v185
    %1874 = vmatprep.subr.mxu0 0.0
    %1875 = vmatpush1.msra.mxu0 %v186
    %1876 = vmatprep.subr.mxu0 0.0
    %1877 = vmatpush1.msra.mxu0 %v187
    %1878 = vmatprep.subr.mxu0 0.0
    %1879 = vmatpush1.msra.mxu0 %v188
    %1880 = vmatprep.subr.mxu0 0.0
    %1881 = vmatpush1.msra.mxu0 0.0
    %1882 = vmatprep.subr.mxu0 0.0
    %1883 = vmatpush1.msra.mxu0 0.0
    %1884 = vmatprep.subr.mxu0 0.0
    %1885 = vmatpush1.msra.mxu0 0.0
    %1886 = vmatprep.subr.mxu0 0.0
    %1887 = vmatpush1.msra.mxu0 0.0
    %1888 = vmatprep.subr.mxu0 0.0
    %1889 = vmatpush1.msra.mxu0 0.0
    %1890 = vmatprep.subr.mxu0 0.0
    %1891 = vmatpush1.msra.mxu0 0.0
    %1892 = vmatprep.subr.mxu0 0.0
    %1893 = vmatpush1.msra.mxu0 0.0
    %1894 = vmatprep.subr.mxu0 0.0
    %1895 = vmatpush1.msra.mxu0 0.0
    %1896 = vmatprep.subr.mxu0 0.0
    %1897 = vmatpush1.msra.mxu0 0.0
    %1898 = vmatprep.subr.mxu0 0.0
    %1899 = vmatpush1.msra.mxu0 0.0
    %1900 = vmatprep.subr.mxu0 0.0
    %1901 = vmatpush1.msra.mxu0 0.0
    %1902 = vmatprep.subr.mxu0 0.0
    %1903 = vmatpush1.msra.mxu0 0.0
    %1904 = vmatprep.subr.mxu0 0.0
    %1905 = vmatpush1.msra.mxu0 0.0
    %1906 = vmatprep.subr.mxu0 0.0
    %1907 = vmatpush1.msra.mxu0 0.0
    %1908 = vmatprep.subr.mxu0 0.0
    %1909 = vmatpush1.msra.mxu0 0.0
    %1910 = vmatprep.subr.mxu0 0.0
    %1911 = vmatpush1.msra.mxu0 0.0
    %1912 = vmatprep.subr.mxu0 0.0
    %1913 = vmatpush1.msra.mxu0 0.0
    %1914 = vmatprep.subr.mxu0 0.0
    %1915 = vmatpush1.msra.mxu0 0.0
    %1916 = vmatprep.subr.mxu0 0.0
    %1917 = vmatpush1.msra.mxu0 0.0
    %1918 = vmatprep.subr.mxu0 0.0
    %1919 = vmatpush1.msra.mxu0 0.0
    %1920 = vmatprep.subr.mxu0 0.0
    %1921 = vmatpush1.msra.mxu0 0.0
    %1922 = vmatprep.subr.mxu0 0.0
    %1923 = vmatpush1.msra.mxu0 0.0
    %1924 = vmatprep.subr.mxu0 0.0
    %1925 = vmatpush1.msra.mxu0 0.0
    %1926 = vmatprep.subr.mxu0 0.0
    %1927 = vmatpush1.msra.mxu0 0.0
    %1928 = vmatprep.subr.mxu0 0.0
    %1929 = vmatpush1.msra.mxu0 0.0
    %1930 = vmatprep.subr.mxu0 0.0
    %1931 = vmatpush1.msra.mxu0 0.0
    %1932 = vmatprep.subr.mxu0 0.0
    %1933 = vmatpush1.msra.mxu0 0.0
    %1934 = vmatprep.subr.mxu0 0.0
    %1935 = vmatpush1.msra.mxu0 0.0
    %1936 = vmatprep.mubr.f32.mxu0 0.0
    %1937 = vmatmul.mubr.f32.gmra.mrb[0].mxu0 %v1870
    %v1938 = vpop.f32.mrb[0].mxu0
    %v1939 = vadd.f32 %v282, %v1938
    %v1940 = vpop.f32.mrb[0].mxu0
    %1941 = vdwg.mxu0
    %s1942 = sld [smem:[#allocation2 + $0x6]]
    %v1943 = vstv %s1942
    %v1944 = vmul.f32 %v1943, %v1785
    %s1945 = sld [smem:[#allocation4 + $0x6]]
    %v1946 = vstv %s1945
    %v1947 = vmul.f32 %v1946, %v1939
    %v1948 = vsub.f32 %v1944, %v1947
    %s1949 = sld [smem:[#allocation6 + $0x6]]
    %v1950 = vstv %s1949
    %v1951 = vmul.f32 %v1950, %v1948
    %s1952 = sld [smem:[#allocation7 + $0x6]]
    %v1953 = vstv %s1952
    %v1954 = vmul.f32 %v1953, %v1785
    %v1955 = vadd.f32 %v1951, %v1954
    %s1956 = sld [smem:[#allocation9 + $0x6]]
    %s1957 = scalar_lea.vmem %s12, 48
    %v1958 = vld [vmem:[%s1957] sm:$0xff]
    %v1959 = vstv %s1956
    %v1960 = vmul.f32 %v1959, %v1958
    %v1961 = vadd.f32 %v1955, %v1960
    %v1963 = vsel %vm191, %v1961, 0
    %1965 = vmatprep.subr.mxu0 0.0
    %1966 = vmatpush1.msra.mxu0 %v196
    %1967 = vmatprep.subr.mxu0 0.0
    %1968 = vmatpush1.msra.mxu0 0.0
    %1969 = vmatprep.subr.mxu0 0.0
    %1970 = vmatpush1.msra.mxu0 0.0
    %1971 = vmatprep.subr.mxu0 0.0
    %1972 = vmatpush1.msra.mxu0 0.0
    %1973 = vmatprep.subr.mxu0 0.0
    %1974 = vmatpush1.msra.mxu0 0.0
    %1975 = vmatprep.subr.mxu0 0.0
    %1976 = vmatpush1.msra.mxu0 0.0
    %1977 = vmatprep.subr.mxu0 0.0
    %1978 = vmatpush1.msra.mxu0 0.0
    %1979 = vmatprep.subr.mxu0 0.0
    %1980 = vmatpush1.msra.mxu0 0.0
    %1981 = vmatprep.subr.mxu0 0.0
    %1982 = vmatpush1.msra.mxu0 0.0
    %1983 = vmatprep.subr.mxu0 0.0
    %1984 = vmatpush1.msra.mxu0 0.0
    %1985 = vmatprep.subr.mxu0 0.0
    %1986 = vmatpush1.msra.mxu0 0.0
    %1987 = vmatprep.subr.mxu0 0.0
    %1988 = vmatpush1.msra.mxu0 0.0
    %1989 = vmatprep.subr.mxu0 0.0
    %1990 = vmatpush1.msra.mxu0 0.0
    %1991 = vmatprep.subr.mxu0 0.0
    %1992 = vmatpush1.msra.mxu0 0.0
    %1993 = vmatprep.subr.mxu0 0.0
    %1994 = vmatpush1.msra.mxu0 0.0
    %1995 = vmatprep.subr.mxu0 0.0
    %1996 = vmatpush1.msra.mxu0 0.0
    %1997 = vmatprep.subr.mxu0 0.0
    %1998 = vmatpush1.msra.mxu0 0.0
    %1999 = vmatprep.subr.mxu0 0.0
    %2000 = vmatpush1.msra.mxu0 0.0
    %2001 = vmatprep.subr.mxu0 0.0
    %2002 = vmatpush1.msra.mxu0 0.0
    %2003 = vmatprep.subr.mxu0 0.0
    %2004 = vmatpush1.msra.mxu0 0.0
    %2005 = vmatprep.subr.mxu0 0.0
    %2006 = vmatpush1.msra.mxu0 0.0
    %2007 = vmatprep.subr.mxu0 0.0
    %2008 = vmatpush1.msra.mxu0 0.0
    %2009 = vmatprep.subr.mxu0 0.0
    %2010 = vmatpush1.msra.mxu0 0.0
    %2011 = vmatprep.subr.mxu0 0.0
    %2012 = vmatpush1.msra.mxu0 0.0
    %2013 = vmatprep.subr.mxu0 0.0
    %2014 = vmatpush1.msra.mxu0 0.0
    %2015 = vmatprep.subr.mxu0 0.0
    %2016 = vmatpush1.msra.mxu0 0.0
    %2017 = vmatprep.subr.mxu0 0.0
    %2018 = vmatpush1.msra.mxu0 0.0
    %2019 = vmatprep.subr.mxu0 0.0
    %2020 = vmatpush1.msra.mxu0 0.0
    %2021 = vmatprep.subr.mxu0 0.0
    %2022 = vmatpush1.msra.mxu0 0.0
    %2023 = vmatprep.subr.mxu0 0.0
    %2024 = vmatpush1.msra.mxu0 0.0
    %2025 = vmatprep.subr.mxu0 0.0
    %2026 = vmatpush1.msra.mxu0 0.0
    %2027 = vmatprep.subr.mxu0 0.0
    %2028 = vmatpush1.msra.mxu0 0.0
    %2029 = vmatprep.mubr.f32.mxu0 0.0
    %2030 = vmatmul.mubr.f32.gmra.mrb[0].mxu0 %v1963
    %v2031 = vpop.f32.mrb[0].mxu0
    %v2032 = vadd.f32 %v181, %v2031
    %v2033 = vpop.f32.mrb[0].mxu0
    %2034 = vdwg.mxu0
    %s2035 = scalar_lea.vmem %s9, 5
    %v2036 = vld [vmem:[%s2035] sm:$0x1]
    %v2038 = vlaneseq
    %v2039 = vshrl.u32 %v2038, 7
    %v2040 = vsub.s32 0, %v2039
    %v2041 = vrot.slane %v2036, %v2040
    %v2043 = vadd.f32 %v2032, %v2041
    %v2044 = vmax.f32 %v2043, 0.0
    %v2046 = vsel %vm284, %v2044, 0
    %2048 = vmatprep.subr.mxu0 0.0
    %2049 = vmatpush1.msra.mxu0 %v185
    %2050 = vmatprep.subr.mxu0 0.0
    %2051 = vmatpush1.msra.mxu0 %v186
    %2052 = vmatprep.subr.mxu0 0.0
    %2053 = vmatpush1.msra.mxu0 %v187
    %2054 = vmatprep.subr.mxu0 0.0
    %2055 = vmatpush1.msra.mxu0 %v188
    %2056 = vmatprep.subr.mxu0 0.0
    %2057 = vmatpush1.msra.mxu0 0.0
    %2058 = vmatprep.subr.mxu0 0.0
    %2059 = vmatpush1.msra.mxu0 0.0
    %2060 = vmatprep.subr.mxu0 0.0
    %2061 = vmatpush1.msra.mxu0 0.0
    %2062 = vmatprep.subr.mxu0 0.0
    %2063 = vmatpush1.msra.mxu0 0.0
    %2064 = vmatprep.subr.mxu0 0.0
    %2065 = vmatpush1.msra.mxu0 0.0
    %2066 = vmatprep.subr.mxu0 0.0
    %2067 = vmatpush1.msra.mxu0 0.0
    %2068 = vmatprep.subr.mxu0 0.0
    %2069 = vmatpush1.msra.mxu0 0.0
    %2070 = vmatprep.subr.mxu0 0.0
    %2071 = vmatpush1.msra.mxu0 0.0
    %2072 = vmatprep.subr.mxu0 0.0
    %2073 = vmatpush1.msra.mxu0 0.0
    %2074 = vmatprep.subr.mxu0 0.0
    %2075 = vmatpush1.msra.mxu0 0.0
    %2076 = vmatprep.subr.mxu0 0.0
    %2077 = vmatpush1.msra.mxu0 0.0
    %2078 = vmatprep.subr.mxu0 0.0
    %2079 = vmatpush1.msra.mxu0 0.0
    %2080 = vmatprep.subr.mxu0 0.0
    %2081 = vmatpush1.msra.mxu0 0.0
    %2082 = vmatprep.subr.mxu0 0.0
    %2083 = vmatpush1.msra.mxu0 0.0
    %2084 = vmatprep.subr.mxu0 0.0
    %2085 = vmatpush1.msra.mxu0 0.0
    %2086 = vmatprep.subr.mxu0 0.0
    %2087 = vmatpush1.msra.mxu0 0.0
    %2088 = vmatprep.subr.mxu0 0.0
    %2089 = vmatpush1.msra.mxu0 0.0
    %2090 = vmatprep.subr.mxu0 0.0
    %2091 = vmatpush1.msra.mxu0 0.0
    %2092 = vmatprep.subr.mxu0 0.0
    %2093 = vmatpush1.msra.mxu0 0.0
    %2094 = vmatprep.subr.mxu0 0.0
    %2095 = vmatpush1.msra.mxu0 0.0
    %2096 = vmatprep.subr.mxu0 0.0
    %2097 = vmatpush1.msra.mxu0 0.0
    %2098 = vmatprep.subr.mxu0 0.0
    %2099 = vmatpush1.msra.mxu0 0.0
    %2100 = vmatprep.subr.mxu0 0.0
    %2101 = vmatpush1.msra.mxu0 0.0
    %2102 = vmatprep.subr.mxu0 0.0
    %2103 = vmatpush1.msra.mxu0 0.0
    %2104 = vmatprep.subr.mxu0 0.0
    %2105 = vmatpush1.msra.mxu0 0.0
    %2106 = vmatprep.subr.mxu0 0.0
    %2107 = vmatpush1.msra.mxu0 0.0
    %2108 = vmatprep.subr.mxu0 0.0
    %2109 = vmatpush1.msra.mxu0 0.0
    %2110 = vmatprep.subr.mxu0 0.0
    %2111 = vmatpush1.msra.mxu0 0.0
    %2112 = vmatprep.mubr.f32.mxu0 0.0
    %2113 = vmatmul.mubr.f32.gmra.mrb[0].mxu0 %v2046
    %v2114 = vpop.f32.mrb[0].mxu0
    %v2115 = vadd.f32 %v282, %v2114
    %v2116 = vpop.f32.mrb[0].mxu0
    %2117 = vdwg.mxu0
    %s2118 = sld [smem:[#allocation2 + $0x5]]
    %v2119 = vstv %s2118
    %v2120 = vmul.f32 %v2119, %v1961
    %s2121 = sld [smem:[#allocation4 + $0x5]]
    %v2122 = vstv %s2121
    %v2123 = vmul.f32 %v2122, %v2115
    %v2124 = vsub.f32 %v2120, %v2123
    %s2125 = sld [smem:[#allocation6 + $0x5]]
    %v2126 = vstv %s2125
    %v2127 = vmul.f32 %v2126, %v2124
    %s2128 = sld [smem:[#allocation7 + $0x5]]
    %v2129 = vstv %s2128
    %v2130 = vmul.f32 %v2129, %v1961
    %v2131 = vadd.f32 %v2127, %v2130
    %s2132 = sld [smem:[#allocation9 + $0x5]]
    %s2133 = scalar_lea.vmem %s12, 40
    %v2134 = vld [vmem:[%s2133] sm:$0xff]
    %v2135 = vstv %s2132
    %v2136 = vmul.f32 %v2135, %v2134
    %v2137 = vadd.f32 %v2131, %v2136
    %v2139 = vsel %vm191, %v2137, 0
    %2141 = vmatprep.subr.mxu0 0.0
    %2142 = vmatpush1.msra.mxu0 %v196
    %2143 = vmatprep.subr.mxu0 0.0
    %2144 = vmatpush1.msra.mxu0 0.0
    %2145 = vmatprep.subr.mxu0 0.0
    %2146 = vmatpush1.msra.mxu0 0.0
    %2147 = vmatprep.subr.mxu0 0.0
    %2148 = vmatpush1.msra.mxu0 0.0
    %2149 = vmatprep.subr.mxu0 0.0
    %2150 = vmatpush1.msra.mxu0 0.0
    %2151 = vmatprep.subr.mxu0 0.0
    %2152 = vmatpush1.msra.mxu0 0.0
    %2153 = vmatprep.subr.mxu0 0.0
    %2154 = vmatpush1.msra.mxu0 0.0
    %2155 = vmatprep.subr.mxu0 0.0
    %2156 = vmatpush1.msra.mxu0 0.0
    %2157 = vmatprep.subr.mxu0 0.0
    %2158 = vmatpush1.msra.mxu0 0.0
    %2159 = vmatprep.subr.mxu0 0.0
    %2160 = vmatpush1.msra.mxu0 0.0
    %2161 = vmatprep.subr.mxu0 0.0
    %2162 = vmatpush1.msra.mxu0 0.0
    %2163 = vmatprep.subr.mxu0 0.0
    %2164 = vmatpush1.msra.mxu0 0.0
    %2165 = vmatprep.subr.mxu0 0.0
    %2166 = vmatpush1.msra.mxu0 0.0
    %2167 = vmatprep.subr.mxu0 0.0
    %2168 = vmatpush1.msra.mxu0 0.0
    %2169 = vmatprep.subr.mxu0 0.0
    %2170 = vmatpush1.msra.mxu0 0.0
    %2171 = vmatprep.subr.mxu0 0.0
    %2172 = vmatpush1.msra.mxu0 0.0
    %2173 = vmatprep.subr.mxu0 0.0
    %2174 = vmatpush1.msra.mxu0 0.0
    %2175 = vmatprep.subr.mxu0 0.0
    %2176 = vmatpush1.msra.mxu0 0.0
    %2177 = vmatprep.subr.mxu0 0.0
    %2178 = vmatpush1.msra.mxu0 0.0
    %2179 = vmatprep.subr.mxu0 0.0
    %2180 = vmatpush1.msra.mxu0 0.0
    %2181 = vmatprep.subr.mxu0 0.0
    %2182 = vmatpush1.msra.mxu0 0.0
    %2183 = vmatprep.subr.mxu0 0.0
    %2184 = vmatpush1.msra.mxu0 0.0
    %2185 = vmatprep.subr.mxu0 0.0
    %2186 = vmatpush1.msra.mxu0 0.0
    %2187 = vmatprep.subr.mxu0 0.0
    %2188 = vmatpush1.msra.mxu0 0.0
    %2189 = vmatprep.subr.mxu0 0.0
    %2190 = vmatpush1.msra.mxu0 0.0
    %2191 = vmatprep.subr.mxu0 0.0
    %2192 = vmatpush1.msra.mxu0 0.0
    %2193 = vmatprep.subr.mxu0 0.0
    %2194 = vmatpush1.msra.mxu0 0.0
    %2195 = vmatprep.subr.mxu0 0.0
    %2196 = vmatpush1.msra.mxu0 0.0
    %2197 = vmatprep.subr.mxu0 0.0
    %2198 = vmatpush1.msra.mxu0 0.0
    %2199 = vmatprep.subr.mxu0 0.0
    %2200 = vmatpush1.msra.mxu0 0.0
    %2201 = vmatprep.subr.mxu0 0.0
    %2202 = vmatpush1.msra.mxu0 0.0
    %2203 = vmatprep.subr.mxu0 0.0
    %2204 = vmatpush1.msra.mxu0 0.0
    %2205 = vmatprep.mubr.f32.mxu0 0.0
    %2206 = vmatmul.mubr.f32.gmra.mrb[0].mxu0 %v2139
    %v2207 = vpop.f32.mrb[0].mxu0
    %v2208 = vadd.f32 %v181, %v2207
    %v2209 = vpop.f32.mrb[0].mxu0
    %2210 = vdwg.mxu0
    %s2211 = scalar_lea.vmem %s9, 4
    %v2212 = vld [vmem:[%s2211] sm:$0x1]
    %v2214 = vlaneseq
    %v2215 = vshrl.u32 %v2214, 7
    %v2216 = vsub.s32 0, %v2215
    %v2217 = vrot.slane %v2212, %v2216
    %v2219 = vadd.f32 %v2208, %v2217
    %v2220 = vmax.f32 %v2219, 0.0
    %v2222 = vsel %vm284, %v2220, 0
    %2224 = vmatprep.subr.mxu0 0.0
    %2225 = vmatpush1.msra.mxu0 %v185
    %2226 = vmatprep.subr.mxu0 0.0
    %2227 = vmatpush1.msra.mxu0 %v186
    %2228 = vmatprep.subr.mxu0 0.0
    %2229 = vmatpush1.msra.mxu0 %v187
    %2230 = vmatprep.subr.mxu0 0.0
    %2231 = vmatpush1.msra.mxu0 %v188
    %2232 = vmatprep.subr.mxu0 0.0
    %2233 = vmatpush1.msra.mxu0 0.0
    %2234 = vmatprep.subr.mxu0 0.0
    %2235 = vmatpush1.msra.mxu0 0.0
    %2236 = vmatprep.subr.mxu0 0.0
    %2237 = vmatpush1.msra.mxu0 0.0
    %2238 = vmatprep.subr.mxu0 0.0
    %2239 = vmatpush1.msra.mxu0 0.0
    %2240 = vmatprep.subr.mxu0 0.0
    %2241 = vmatpush1.msra.mxu0 0.0
    %2242 = vmatprep.subr.mxu0 0.0
    %2243 = vmatpush1.msra.mxu0 0.0
    %2244 = vmatprep.subr.mxu0 0.0
    %2245 = vmatpush1.msra.mxu0 0.0
    %2246 = vmatprep.subr.mxu0 0.0
    %2247 = vmatpush1.msra.mxu0 0.0
    %2248 = vmatprep.subr.mxu0 0.0
    %2249 = vmatpush1.msra.mxu0 0.0
    %2250 = vmatprep.subr.mxu0 0.0
    %2251 = vmatpush1.msra.mxu0 0.0
    %2252 = vmatprep.subr.mxu0 0.0
    %2253 = vmatpush1.msra.mxu0 0.0
    %2254 = vmatprep.subr.mxu0 0.0
    %2255 = vmatpush1.msra.mxu0 0.0
    %2256 = vmatprep.subr.mxu0 0.0
    %2257 = vmatpush1.msra.mxu0 0.0
    %2258 = vmatprep.subr.mxu0 0.0
    %2259 = vmatpush1.msra.mxu0 0.0
    %2260 = vmatprep.subr.mxu0 0.0
    %2261 = vmatpush1.msra.mxu0 0.0
    %2262 = vmatprep.subr.mxu0 0.0
    %2263 = vmatpush1.msra.mxu0 0.0
    %2264 = vmatprep.subr.mxu0 0.0
    %2265 = vmatpush1.msra.mxu0 0.0
    %2266 = vmatprep.subr.mxu0 0.0
    %2267 = vmatpush1.msra.mxu0 0.0
    %2268 = vmatprep.subr.mxu0 0.0
    %2269 = vmatpush1.msra.mxu0 0.0
    %2270 = vmatprep.subr.mxu0 0.0
    %2271 = vmatpush1.msra.mxu0 0.0
    %2272 = vmatprep.subr.mxu0 0.0
    %2273 = vmatpush1.msra.mxu0 0.0
    %2274 = vmatprep.subr.mxu0 0.0
    %2275 = vmatpush1.msra.mxu0 0.0
    %2276 = vmatprep.subr.mxu0 0.0
    %2277 = vmatpush1.msra.mxu0 0.0
    %2278 = vmatprep.subr.mxu0 0.0
    %2279 = vmatpush1.msra.mxu0 0.0
    %2280 = vmatprep.subr.mxu0 0.0
    %2281 = vmatpush1.msra.mxu0 0.0
    %2282 = vmatprep.subr.mxu0 0.0
    %2283 = vmatpush1.msra.mxu0 0.0
    %2284 = vmatprep.subr.mxu0 0.0
    %2285 = vmatpush1.msra.mxu0 0.0
    %2286 = vmatprep.subr.mxu0 0.0
    %2287 = vmatpush1.msra.mxu0 0.0
    %2288 = vmatprep.mubr.f32.mxu0 0.0
    %2289 = vmatmul.mubr.f32.gmra.mrb[0].mxu0 %v2222
    %v2290 = vpop.f32.mrb[0].mxu0
    %v2291 = vadd.f32 %v282, %v2290
    %v2292 = vpop.f32.mrb[0].mxu0
    %2293 = vdwg.mxu0
    %s2294 = sld [smem:[#allocation2 + $0x4]]
    %v2295 = vstv %s2294
    %v2296 = vmul.f32 %v2295, %v2137
    %s2297 = sld [smem:[#allocation4 + $0x4]]
    %v2298 = vstv %s2297
    %v2299 = vmul.f32 %v2298, %v2291
    %v2300 = vsub.f32 %v2296, %v2299
    %s2301 = sld [smem:[#allocation6 + $0x4]]
    %v2302 = vstv %s2301
    %v2303 = vmul.f32 %v2302, %v2300
    %s2304 = sld [smem:[#allocation7 + $0x4]]
    %v2305 = vstv %s2304
    %v2306 = vmul.f32 %v2305, %v2137
    %v2307 = vadd.f32 %v2303, %v2306
    %s2308 = sld [smem:[#allocation9 + $0x4]]
    %s2309 = scalar_lea.vmem %s12, 32
    %v2310 = vld [vmem:[%s2309] sm:$0xff]
    %v2311 = vstv %s2308
    %v2312 = vmul.f32 %v2311, %v2310
    %v2313 = vadd.f32 %v2307, %v2312
    %v2315 = vsel %vm191, %v2313, 0
    %2317 = vmatprep.subr.mxu0 0.0
    %2318 = vmatpush1.msra.mxu0 %v196
    %2319 = vmatprep.subr.mxu0 0.0
    %2320 = vmatpush1.msra.mxu0 0.0
    %2321 = vmatprep.subr.mxu0 0.0
    %2322 = vmatpush1.msra.mxu0 0.0
    %2323 = vmatprep.subr.mxu0 0.0
    %2324 = vmatpush1.msra.mxu0 0.0
    %2325 = vmatprep.subr.mxu0 0.0
    %2326 = vmatpush1.msra.mxu0 0.0
    %2327 = vmatprep.subr.mxu0 0.0
    %2328 = vmatpush1.msra.mxu0 0.0
    %2329 = vmatprep.subr.mxu0 0.0
    %2330 = vmatpush1.msra.mxu0 0.0
    %2331 = vmatprep.subr.mxu0 0.0
    %2332 = vmatpush1.msra.mxu0 0.0
    %2333 = vmatprep.subr.mxu0 0.0
    %2334 = vmatpush1.msra.mxu0 0.0
    %2335 = vmatprep.subr.mxu0 0.0
    %2336 = vmatpush1.msra.mxu0 0.0
    %2337 = vmatprep.subr.mxu0 0.0
    %2338 = vmatpush1.msra.mxu0 0.0
    %2339 = vmatprep.subr.mxu0 0.0
    %2340 = vmatpush1.msra.mxu0 0.0
    %2341 = vmatprep.subr.mxu0 0.0
    %2342 = vmatpush1.msra.mxu0 0.0
    %2343 = vmatprep.subr.mxu0 0.0
    %2344 = vmatpush1.msra.mxu0 0.0
    %2345 = vmatprep.subr.mxu0 0.0
    %2346 = vmatpush1.msra.mxu0 0.0
    %2347 = vmatprep.subr.mxu0 0.0
    %2348 = vmatpush1.msra.mxu0 0.0
    %2349 = vmatprep.subr.mxu0 0.0
    %2350 = vmatpush1.msra.mxu0 0.0
    %2351 = vmatprep.subr.mxu0 0.0
    %2352 = vmatpush1.msra.mxu0 0.0
    %2353 = vmatprep.subr.mxu0 0.0
    %2354 = vmatpush1.msra.mxu0 0.0
    %2355 = vmatprep.subr.mxu0 0.0
    %2356 = vmatpush1.msra.mxu0 0.0
    %2357 = vmatprep.subr.mxu0 0.0
    %2358 = vmatpush1.msra.mxu0 0.0
    %2359 = vmatprep.subr.mxu0 0.0
    %2360 = vmatpush1.msra.mxu0 0.0
    %2361 = vmatprep.subr.mxu0 0.0
    %2362 = vmatpush1.msra.mxu0 0.0
    %2363 = vmatprep.subr.mxu0 0.0
    %2364 = vmatpush1.msra.mxu0 0.0
    %2365 = vmatprep.subr.mxu0 0.0
    %2366 = vmatpush1.msra.mxu0 0.0
    %2367 = vmatprep.subr.mxu0 0.0
    %2368 = vmatpush1.msra.mxu0 0.0
    %2369 = vmatprep.subr.mxu0 0.0
    %2370 = vmatpush1.msra.mxu0 0.0
    %2371 = vmatprep.subr.mxu0 0.0
    %2372 = vmatpush1.msra.mxu0 0.0
    %2373 = vmatprep.subr.mxu0 0.0
    %2374 = vmatpush1.msra.mxu0 0.0
    %2375 = vmatprep.subr.mxu0 0.0
    %2376 = vmatpush1.msra.mxu0 0.0
    %2377 = vmatprep.subr.mxu0 0.0
    %2378 = vmatpush1.msra.mxu0 0.0
    %2379 = vmatprep.subr.mxu0 0.0
    %2380 = vmatpush1.msra.mxu0 0.0
    %2381 = vmatprep.mubr.f32.mxu0 0.0
    %2382 = vmatmul.mubr.f32.gmra.mrb[0].mxu0 %v2315
    %v2383 = vpop.f32.mrb[0].mxu0
    %v2384 = vadd.f32 %v181, %v2383
    %v2385 = vpop.f32.mrb[0].mxu0
    %2386 = vdwg.mxu0
    %s2387 = scalar_lea.vmem %s9, 3
    %v2388 = vld [vmem:[%s2387] sm:$0x1]
    %v2390 = vlaneseq
    %v2391 = vshrl.u32 %v2390, 7
    %v2392 = vsub.s32 0, %v2391
    %v2393 = vrot.slane %v2388, %v2392
    %v2395 = vadd.f32 %v2384, %v2393
    %v2396 = vmax.f32 %v2395, 0.0
    %v2398 = vsel %vm284, %v2396, 0
    %2400 = vmatprep.subr.mxu0 0.0
    %2401 = vmatpush1.msra.mxu0 %v185
    %2402 = vmatprep.subr.mxu0 0.0
    %2403 = vmatpush1.msra.mxu0 %v186
    %2404 = vmatprep.subr.mxu0 0.0
    %2405 = vmatpush1.msra.mxu0 %v187
    %2406 = vmatprep.subr.mxu0 0.0
    %2407 = vmatpush1.msra.mxu0 %v188
    %2408 = vmatprep.subr.mxu0 0.0
    %2409 = vmatpush1.msra.mxu0 0.0
    %2410 = vmatprep.subr.mxu0 0.0
    %2411 = vmatpush1.msra.mxu0 0.0
    %2412 = vmatprep.subr.mxu0 0.0
    %2413 = vmatpush1.msra.mxu0 0.0
    %2414 = vmatprep.subr.mxu0 0.0
    %2415 = vmatpush1.msra.mxu0 0.0
    %2416 = vmatprep.subr.mxu0 0.0
    %2417 = vmatpush1.msra.mxu0 0.0
    %2418 = vmatprep.subr.mxu0 0.0
    %2419 = vmatpush1.msra.mxu0 0.0
    %2420 = vmatprep.subr.mxu0 0.0
    %2421 = vmatpush1.msra.mxu0 0.0
    %2422 = vmatprep.subr.mxu0 0.0
    %2423 = vmatpush1.msra.mxu0 0.0
    %2424 = vmatprep.subr.mxu0 0.0
    %2425 = vmatpush1.msra.mxu0 0.0
    %2426 = vmatprep.subr.mxu0 0.0
    %2427 = vmatpush1.msra.mxu0 0.0
    %2428 = vmatprep.subr.mxu0 0.0
    %2429 = vmatpush1.msra.mxu0 0.0
    %2430 = vmatprep.subr.mxu0 0.0
    %2431 = vmatpush1.msra.mxu0 0.0
    %2432 = vmatprep.subr.mxu0 0.0
    %2433 = vmatpush1.msra.mxu0 0.0
    %2434 = vmatprep.subr.mxu0 0.0
    %2435 = vmatpush1.msra.mxu0 0.0
    %2436 = vmatprep.subr.mxu0 0.0
    %2437 = vmatpush1.msra.mxu0 0.0
    %2438 = vmatprep.subr.mxu0 0.0
    %2439 = vmatpush1.msra.mxu0 0.0
    %2440 = vmatprep.subr.mxu0 0.0
    %2441 = vmatpush1.msra.mxu0 0.0
    %2442 = vmatprep.subr.mxu0 0.0
    %2443 = vmatpush1.msra.mxu0 0.0
    %2444 = vmatprep.subr.mxu0 0.0
    %2445 = vmatpush1.msra.mxu0 0.0
    %2446 = vmatprep.subr.mxu0 0.0
    %2447 = vmatpush1.msra.mxu0 0.0
    %2448 = vmatprep.subr.mxu0 0.0
    %2449 = vmatpush1.msra.mxu0 0.0
    %2450 = vmatprep.subr.mxu0 0.0
    %2451 = vmatpush1.msra.mxu0 0.0
    %2452 = vmatprep.subr.mxu0 0.0
    %2453 = vmatpush1.msra.mxu0 0.0
    %2454 = vmatprep.subr.mxu0 0.0
    %2455 = vmatpush1.msra.mxu0 0.0
    %2456 = vmatprep.subr.mxu0 0.0
    %2457 = vmatpush1.msra.mxu0 0.0
    %2458 = vmatprep.subr.mxu0 0.0
    %2459 = vmatpush1.msra.mxu0 0.0
    %2460 = vmatprep.subr.mxu0 0.0
    %2461 = vmatpush1.msra.mxu0 0.0
    %2462 = vmatprep.subr.mxu0 0.0
    %2463 = vmatpush1.msra.mxu0 0.0
    %2464 = vmatprep.mubr.f32.mxu0 0.0
    %2465 = vmatmul.mubr.f32.gmra.mrb[0].mxu0 %v2398
    %v2466 = vpop.f32.mrb[0].mxu0
    %v2467 = vadd.f32 %v282, %v2466
    %v2468 = vpop.f32.mrb[0].mxu0
    %2469 = vdwg.mxu0
    %s2470 = sld [smem:[#allocation2 + $0x3]]
    %v2471 = vstv %s2470
    %v2472 = vmul.f32 %v2471, %v2313
    %s2473 = sld [smem:[#allocation4 + $0x3]]
    %v2474 = vstv %s2473
    %v2475 = vmul.f32 %v2474, %v2467
    %v2476 = vsub.f32 %v2472, %v2475
    %s2477 = sld [smem:[#allocation6 + $0x3]]
    %v2478 = vstv %s2477
    %v2479 = vmul.f32 %v2478, %v2476
    %s2480 = sld [smem:[#allocation7 + $0x3]]
    %v2481 = vstv %s2480
    %v2482 = vmul.f32 %v2481, %v2313
    %v2483 = vadd.f32 %v2479, %v2482
    %s2484 = sld [smem:[#allocation9 + $0x3]]
    %s2485 = scalar_lea.vmem %s12, 24
    %v2486 = vld [vmem:[%s2485] sm:$0xff]
    %v2487 = vstv %s2484
    %v2488 = vmul.f32 %v2487, %v2486
    %v2489 = vadd.f32 %v2483, %v2488
    %v2491 = vsel %vm191, %v2489, 0
    %2493 = vmatprep.subr.mxu0 0.0
    %2494 = vmatpush1.msra.mxu0 %v196
    %2495 = vmatprep.subr.mxu0 0.0
    %2496 = vmatpush1.msra.mxu0 0.0
    %2497 = vmatprep.subr.mxu0 0.0
    %2498 = vmatpush1.msra.mxu0 0.0
    %2499 = vmatprep.subr.mxu0 0.0
    %2500 = vmatpush1.msra.mxu0 0.0
    %2501 = vmatprep.subr.mxu0 0.0
    %2502 = vmatpush1.msra.mxu0 0.0
    %2503 = vmatprep.subr.mxu0 0.0
    %2504 = vmatpush1.msra.mxu0 0.0
    %2505 = vmatprep.subr.mxu0 0.0
    %2506 = vmatpush1.msra.mxu0 0.0
    %2507 = vmatprep.subr.mxu0 0.0
    %2508 = vmatpush1.msra.mxu0 0.0
    %2509 = vmatprep.subr.mxu0 0.0
    %2510 = vmatpush1.msra.mxu0 0.0
    %2511 = vmatprep.subr.mxu0 0.0
    %2512 = vmatpush1.msra.mxu0 0.0
    %2513 = vmatprep.subr.mxu0 0.0
    %2514 = vmatpush1.msra.mxu0 0.0
    %2515 = vmatprep.subr.mxu0 0.0
    %2516 = vmatpush1.msra.mxu0 0.0
    %2517 = vmatprep.subr.mxu0 0.0
    %2518 = vmatpush1.msra.mxu0 0.0
    %2519 = vmatprep.subr.mxu0 0.0
    %2520 = vmatpush1.msra.mxu0 0.0
    %2521 = vmatprep.subr.mxu0 0.0
    %2522 = vmatpush1.msra.mxu0 0.0
    %2523 = vmatprep.subr.mxu0 0.0
    %2524 = vmatpush1.msra.mxu0 0.0
    %2525 = vmatprep.subr.mxu0 0.0
    %2526 = vmatpush1.msra.mxu0 0.0
    %2527 = vmatprep.subr.mxu0 0.0
    %2528 = vmatpush1.msra.mxu0 0.0
    %2529 = vmatprep.subr.mxu0 0.0
    %2530 = vmatpush1.msra.mxu0 0.0
    %2531 = vmatprep.subr.mxu0 0.0
    %2532 = vmatpush1.msra.mxu0 0.0
    %2533 = vmatprep.subr.mxu0 0.0
    %2534 = vmatpush1.msra.mxu0 0.0
    %2535 = vmatprep.subr.mxu0 0.0
    %2536 = vmatpush1.msra.mxu0 0.0
    %2537 = vmatprep.subr.mxu0 0.0
    %2538 = vmatpush1.msra.mxu0 0.0
    %2539 = vmatprep.subr.mxu0 0.0
    %2540 = vmatpush1.msra.mxu0 0.0
    %2541 = vmatprep.subr.mxu0 0.0
    %2542 = vmatpush1.msra.mxu0 0.0
    %2543 = vmatprep.subr.mxu0 0.0
    %2544 = vmatpush1.msra.mxu0 0.0
    %2545 = vmatprep.subr.mxu0 0.0
    %2546 = vmatpush1.msra.mxu0 0.0
    %2547 = vmatprep.subr.mxu0 0.0
    %2548 = vmatpush1.msra.mxu0 0.0
    %2549 = vmatprep.subr.mxu0 0.0
    %2550 = vmatpush1.msra.mxu0 0.0
    %2551 = vmatprep.subr.mxu0 0.0
    %2552 = vmatpush1.msra.mxu0 0.0
    %2553 = vmatprep.subr.mxu0 0.0
    %2554 = vmatpush1.msra.mxu0 0.0
    %2555 = vmatprep.subr.mxu0 0.0
    %2556 = vmatpush1.msra.mxu0 0.0
    %2557 = vmatprep.mubr.f32.mxu0 0.0
    %2558 = vmatmul.mubr.f32.gmra.mrb[0].mxu0 %v2491
    %v2559 = vpop.f32.mrb[0].mxu0
    %v2560 = vadd.f32 %v181, %v2559
    %v2561 = vpop.f32.mrb[0].mxu0
    %2562 = vdwg.mxu0
    %s2563 = scalar_lea.vmem %s9, 2
    %v2564 = vld [vmem:[%s2563] sm:$0x1]
    %v2566 = vlaneseq
    %v2567 = vshrl.u32 %v2566, 7
    %v2568 = vsub.s32 0, %v2567
    %v2569 = vrot.slane %v2564, %v2568
    %v2571 = vadd.f32 %v2560, %v2569
    %v2572 = vmax.f32 %v2571, 0.0
    %v2574 = vsel %vm284, %v2572, 0
    %2576 = vmatprep.subr.mxu0 0.0
    %2577 = vmatpush1.msra.mxu0 %v185
    %2578 = vmatprep.subr.mxu0 0.0
    %2579 = vmatpush1.msra.mxu0 %v186
    %2580 = vmatprep.subr.mxu0 0.0
    %2581 = vmatpush1.msra.mxu0 %v187
    %2582 = vmatprep.subr.mxu0 0.0
    %2583 = vmatpush1.msra.mxu0 %v188
    %2584 = vmatprep.subr.mxu0 0.0
    %2585 = vmatpush1.msra.mxu0 0.0
    %2586 = vmatprep.subr.mxu0 0.0
    %2587 = vmatpush1.msra.mxu0 0.0
    %2588 = vmatprep.subr.mxu0 0.0
    %2589 = vmatpush1.msra.mxu0 0.0
    %2590 = vmatprep.subr.mxu0 0.0
    %2591 = vmatpush1.msra.mxu0 0.0
    %2592 = vmatprep.subr.mxu0 0.0
    %2593 = vmatpush1.msra.mxu0 0.0
    %2594 = vmatprep.subr.mxu0 0.0
    %2595 = vmatpush1.msra.mxu0 0.0
    %2596 = vmatprep.subr.mxu0 0.0
    %2597 = vmatpush1.msra.mxu0 0.0
    %2598 = vmatprep.subr.mxu0 0.0
    %2599 = vmatpush1.msra.mxu0 0.0
    %2600 = vmatprep.subr.mxu0 0.0
    %2601 = vmatpush1.msra.mxu0 0.0
    %2602 = vmatprep.subr.mxu0 0.0
    %2603 = vmatpush1.msra.mxu0 0.0
    %2604 = vmatprep.subr.mxu0 0.0
    %2605 = vmatpush1.msra.mxu0 0.0
    %2606 = vmatprep.subr.mxu0 0.0
    %2607 = vmatpush1.msra.mxu0 0.0
    %2608 = vmatprep.subr.mxu0 0.0
    %2609 = vmatpush1.msra.mxu0 0.0
    %2610 = vmatprep.subr.mxu0 0.0
    %2611 = vmatpush1.msra.mxu0 0.0
    %2612 = vmatprep.subr.mxu0 0.0
    %2613 = vmatpush1.msra.mxu0 0.0
    %2614 = vmatprep.subr.mxu0 0.0
    %2615 = vmatpush1.msra.mxu0 0.0
    %2616 = vmatprep.subr.mxu0 0.0
    %2617 = vmatpush1.msra.mxu0 0.0
    %2618 = vmatprep.subr.mxu0 0.0
    %2619 = vmatpush1.msra.mxu0 0.0
    %2620 = vmatprep.subr.mxu0 0.0
    %2621 = vmatpush1.msra.mxu0 0.0
    %2622 = vmatprep.subr.mxu0 0.0
    %2623 = vmatpush1.msra.mxu0 0.0
    %2624 = vmatprep.subr.mxu0 0.0
    %2625 = vmatpush1.msra.mxu0 0.0
    %2626 = vmatprep.subr.mxu0 0.0
    %2627 = vmatpush1.msra.mxu0 0.0
    %2628 = vmatprep.subr.mxu0 0.0
    %2629 = vmatpush1.msra.mxu0 0.0
    %2630 = vmatprep.subr.mxu0 0.0
    %2631 = vmatpush1.msra.mxu0 0.0
    %2632 = vmatprep.subr.mxu0 0.0
    %2633 = vmatpush1.msra.mxu0 0.0
    %2634 = vmatprep.subr.mxu0 0.0
    %2635 = vmatpush1.msra.mxu0 0.0
    %2636 = vmatprep.subr.mxu0 0.0
    %2637 = vmatpush1.msra.mxu0 0.0
    %2638 = vmatprep.subr.mxu0 0.0
    %2639 = vmatpush1.msra.mxu0 0.0
    %2640 = vmatprep.mubr.f32.mxu0 0.0
    %2641 = vmatmul.mubr.f32.gmra.mrb[0].mxu0 %v2574
    %v2642 = vpop.f32.mrb[0].mxu0
    %v2643 = vadd.f32 %v282, %v2642
    %v2644 = vpop.f32.mrb[0].mxu0
    %2645 = vdwg.mxu0
    %s2646 = sld [smem:[#allocation2 + $0x2]]
    %v2647 = vstv %s2646
    %v2648 = vmul.f32 %v2647, %v2489
    %s2649 = sld [smem:[#allocation4 + $0x2]]
    %v2650 = vstv %s2649
    %v2651 = vmul.f32 %v2650, %v2643
    %v2652 = vsub.f32 %v2648, %v2651
    %s2653 = sld [smem:[#allocation6 + $0x2]]
    %v2654 = vstv %s2653
    %v2655 = vmul.f32 %v2654, %v2652
    %s2656 = sld [smem:[#allocation7 + $0x2]]
    %v2657 = vstv %s2656
    %v2658 = vmul.f32 %v2657, %v2489
    %v2659 = vadd.f32 %v2655, %v2658
    %s2660 = sld [smem:[#allocation9 + $0x2]]
    %s2661 = scalar_lea.vmem %s12, 16
    %v2662 = vld [vmem:[%s2661] sm:$0xff]
    %v2663 = vstv %s2660
    %v2664 = vmul.f32 %v2663, %v2662
    %v2665 = vadd.f32 %v2659, %v2664
    %v2667 = vsel %vm191, %v2665, 0
    %2669 = vmatprep.subr.mxu0 0.0
    %2670 = vmatpush1.msra.mxu0 %v196
    %2671 = vmatprep.subr.mxu0 0.0
    %2672 = vmatpush1.msra.mxu0 0.0
    %2673 = vmatprep.subr.mxu0 0.0
    %2674 = vmatpush1.msra.mxu0 0.0
    %2675 = vmatprep.subr.mxu0 0.0
    %2676 = vmatpush1.msra.mxu0 0.0
    %2677 = vmatprep.subr.mxu0 0.0
    %2678 = vmatpush1.msra.mxu0 0.0
    %2679 = vmatprep.subr.mxu0 0.0
    %2680 = vmatpush1.msra.mxu0 0.0
    %2681 = vmatprep.subr.mxu0 0.0
    %2682 = vmatpush1.msra.mxu0 0.0
    %2683 = vmatprep.subr.mxu0 0.0
    %2684 = vmatpush1.msra.mxu0 0.0
    %2685 = vmatprep.subr.mxu0 0.0
    %2686 = vmatpush1.msra.mxu0 0.0
    %2687 = vmatprep.subr.mxu0 0.0
    %2688 = vmatpush1.msra.mxu0 0.0
    %2689 = vmatprep.subr.mxu0 0.0
    %2690 = vmatpush1.msra.mxu0 0.0
    %2691 = vmatprep.subr.mxu0 0.0
    %2692 = vmatpush1.msra.mxu0 0.0
    %2693 = vmatprep.subr.mxu0 0.0
    %2694 = vmatpush1.msra.mxu0 0.0
    %2695 = vmatprep.subr.mxu0 0.0
    %2696 = vmatpush1.msra.mxu0 0.0
    %2697 = vmatprep.subr.mxu0 0.0
    %2698 = vmatpush1.msra.mxu0 0.0
    %2699 = vmatprep.subr.mxu0 0.0
    %2700 = vmatpush1.msra.mxu0 0.0
    %2701 = vmatprep.subr.mxu0 0.0
    %2702 = vmatpush1.msra.mxu0 0.0
    %2703 = vmatprep.subr.mxu0 0.0
    %2704 = vmatpush1.msra.mxu0 0.0
    %2705 = vmatprep.subr.mxu0 0.0
    %2706 = vmatpush1.msra.mxu0 0.0
    %2707 = vmatprep.subr.mxu0 0.0
    %2708 = vmatpush1.msra.mxu0 0.0
    %2709 = vmatprep.subr.mxu0 0.0
    %2710 = vmatpush1.msra.mxu0 0.0
    %2711 = vmatprep.subr.mxu0 0.0
    %2712 = vmatpush1.msra.mxu0 0.0
    %2713 = vmatprep.subr.mxu0 0.0
    %2714 = vmatpush1.msra.mxu0 0.0
    %2715 = vmatprep.subr.mxu0 0.0
    %2716 = vmatpush1.msra.mxu0 0.0
    %2717 = vmatprep.subr.mxu0 0.0
    %2718 = vmatpush1.msra.mxu0 0.0
    %2719 = vmatprep.subr.mxu0 0.0
    %2720 = vmatpush1.msra.mxu0 0.0
    %2721 = vmatprep.subr.mxu0 0.0
    %2722 = vmatpush1.msra.mxu0 0.0
    %2723 = vmatprep.subr.mxu0 0.0
    %2724 = vmatpush1.msra.mxu0 0.0
    %2725 = vmatprep.subr.mxu0 0.0
    %2726 = vmatpush1.msra.mxu0 0.0
    %2727 = vmatprep.subr.mxu0 0.0
    %2728 = vmatpush1.msra.mxu0 0.0
    %2729 = vmatprep.subr.mxu0 0.0
    %2730 = vmatpush1.msra.mxu0 0.0
    %2731 = vmatprep.subr.mxu0 0.0
    %2732 = vmatpush1.msra.mxu0 0.0
    %2733 = vmatprep.mubr.f32.mxu0 0.0
    %2734 = vmatmul.mubr.f32.gmra.mrb[0].mxu0 %v2667
    %v2735 = vpop.f32.mrb[0].mxu0
    %v2736 = vadd.f32 %v181, %v2735
    %v2737 = vpop.f32.mrb[0].mxu0
    %2738 = vdwg.mxu0
    %s2739 = scalar_lea.vmem %s9, 1
    %v2740 = vld [vmem:[%s2739] sm:$0x1]
    %v2742 = vlaneseq
    %v2743 = vshrl.u32 %v2742, 7
    %v2744 = vsub.s32 0, %v2743
    %v2745 = vrot.slane %v2740, %v2744
    %v2747 = vadd.f32 %v2736, %v2745
    %v2748 = vmax.f32 %v2747, 0.0
    %v2750 = vsel %vm284, %v2748, 0
    %2752 = vmatprep.subr.mxu0 0.0
    %2753 = vmatpush1.msra.mxu0 %v185
    %2754 = vmatprep.subr.mxu0 0.0
    %2755 = vmatpush1.msra.mxu0 %v186
    %2756 = vmatprep.subr.mxu0 0.0
    %2757 = vmatpush1.msra.mxu0 %v187
    %2758 = vmatprep.subr.mxu0 0.0
    %2759 = vmatpush1.msra.mxu0 %v188
    %2760 = vmatprep.subr.mxu0 0.0
    %2761 = vmatpush1.msra.mxu0 0.0
    %2762 = vmatprep.subr.mxu0 0.0
    %2763 = vmatpush1.msra.mxu0 0.0
    %2764 = vmatprep.subr.mxu0 0.0
    %2765 = vmatpush1.msra.mxu0 0.0
    %2766 = vmatprep.subr.mxu0 0.0
    %2767 = vmatpush1.msra.mxu0 0.0
    %2768 = vmatprep.subr.mxu0 0.0
    %2769 = vmatpush1.msra.mxu0 0.0
    %2770 = vmatprep.subr.mxu0 0.0
    %2771 = vmatpush1.msra.mxu0 0.0
    %2772 = vmatprep.subr.mxu0 0.0
    %2773 = vmatpush1.msra.mxu0 0.0
    %2774 = vmatprep.subr.mxu0 0.0
    %2775 = vmatpush1.msra.mxu0 0.0
    %2776 = vmatprep.subr.mxu0 0.0
    %2777 = vmatpush1.msra.mxu0 0.0
    %2778 = vmatprep.subr.mxu0 0.0
    %2779 = vmatpush1.msra.mxu0 0.0
    %2780 = vmatprep.subr.mxu0 0.0
    %2781 = vmatpush1.msra.mxu0 0.0
    %2782 = vmatprep.subr.mxu0 0.0
    %2783 = vmatpush1.msra.mxu0 0.0
    %2784 = vmatprep.subr.mxu0 0.0
    %2785 = vmatpush1.msra.mxu0 0.0
    %2786 = vmatprep.subr.mxu0 0.0
    %2787 = vmatpush1.msra.mxu0 0.0
    %2788 = vmatprep.subr.mxu0 0.0
    %2789 = vmatpush1.msra.mxu0 0.0
    %2790 = vmatprep.subr.mxu0 0.0
    %2791 = vmatpush1.msra.mxu0 0.0
    %2792 = vmatprep.subr.mxu0 0.0
    %2793 = vmatpush1.msra.mxu0 0.0
    %2794 = vmatprep.subr.mxu0 0.0
    %2795 = vmatpush1.msra.mxu0 0.0
    %2796 = vmatprep.subr.mxu0 0.0
    %2797 = vmatpush1.msra.mxu0 0.0
    %2798 = vmatprep.subr.mxu0 0.0
    %2799 = vmatpush1.msra.mxu0 0.0
    %2800 = vmatprep.subr.mxu0 0.0
    %2801 = vmatpush1.msra.mxu0 0.0
    %2802 = vmatprep.subr.mxu0 0.0
    %2803 = vmatpush1.msra.mxu0 0.0
    %2804 = vmatprep.subr.mxu0 0.0
    %2805 = vmatpush1.msra.mxu0 0.0
    %2806 = vmatprep.subr.mxu0 0.0
    %2807 = vmatpush1.msra.mxu0 0.0
    %2808 = vmatprep.subr.mxu0 0.0
    %2809 = vmatpush1.msra.mxu0 0.0
    %2810 = vmatprep.subr.mxu0 0.0
    %2811 = vmatpush1.msra.mxu0 0.0
    %2812 = vmatprep.subr.mxu0 0.0
    %2813 = vmatpush1.msra.mxu0 0.0
    %2814 = vmatprep.subr.mxu0 0.0
    %2815 = vmatpush1.msra.mxu0 0.0
    %2816 = vmatprep.mubr.f32.mxu0 0.0
    %2817 = vmatmul.mubr.f32.gmra.mrb[0].mxu0 %v2750
    %v2818 = vpop.f32.mrb[0].mxu0
    %v2819 = vadd.f32 %v282, %v2818
    %v2820 = vpop.f32.mrb[0].mxu0
    %2821 = vdwg.mxu0
    %s2822 = sld [smem:[#allocation2 + $0x1]]
    %v2823 = vstv %s2822
    %v2824 = vmul.f32 %v2823, %v2665
    %s2825 = sld [smem:[#allocation4 + $0x1]]
    %v2826 = vstv %s2825
    %v2827 = vmul.f32 %v2826, %v2819
    %v2828 = vsub.f32 %v2824, %v2827
    %s2829 = sld [smem:[#allocation6 + $0x1]]
    %v2830 = vstv %s2829
    %v2831 = vmul.f32 %v2830, %v2828
    %s2832 = sld [smem:[#allocation7 + $0x1]]
    %v2833 = vstv %s2832
    %v2834 = vmul.f32 %v2833, %v2665
    %v2835 = vadd.f32 %v2831, %v2834
    %s2836 = sld [smem:[#allocation9 + $0x1]]
    %s2837 = scalar_lea.vmem %s12, 8
    %v2838 = vld [vmem:[%s2837] sm:$0xff]
    %v2839 = vstv %s2836
    %v2840 = vmul.f32 %v2839, %v2838
    %v2841 = vadd.f32 %v2835, %v2840
    %v2843 = vsel %vm191, %v2841, 0
    %2845 = vmatprep.subr.mxu0 0.0
    %2846 = vmatpush1.msra.mxu0 %v196
    %2847 = vmatprep.subr.mxu0 0.0
    %2848 = vmatpush1.msra.mxu0 0.0
    %2849 = vmatprep.subr.mxu0 0.0
    %2850 = vmatpush1.msra.mxu0 0.0
    %2851 = vmatprep.subr.mxu0 0.0
    %2852 = vmatpush1.msra.mxu0 0.0
    %2853 = vmatprep.subr.mxu0 0.0
    %2854 = vmatpush1.msra.mxu0 0.0
    %2855 = vmatprep.subr.mxu0 0.0
    %2856 = vmatpush1.msra.mxu0 0.0
    %2857 = vmatprep.subr.mxu0 0.0
    %2858 = vmatpush1.msra.mxu0 0.0
    %2859 = vmatprep.subr.mxu0 0.0
    %2860 = vmatpush1.msra.mxu0 0.0
    %2861 = vmatprep.subr.mxu0 0.0
    %2862 = vmatpush1.msra.mxu0 0.0
    %2863 = vmatprep.subr.mxu0 0.0
    %2864 = vmatpush1.msra.mxu0 0.0
    %2865 = vmatprep.subr.mxu0 0.0
    %2866 = vmatpush1.msra.mxu0 0.0
    %2867 = vmatprep.subr.mxu0 0.0
    %2868 = vmatpush1.msra.mxu0 0.0
    %2869 = vmatprep.subr.mxu0 0.0
    %2870 = vmatpush1.msra.mxu0 0.0
    %2871 = vmatprep.subr.mxu0 0.0
    %2872 = vmatpush1.msra.mxu0 0.0
    %2873 = vmatprep.subr.mxu0 0.0
    %2874 = vmatpush1.msra.mxu0 0.0
    %2875 = vmatprep.subr.mxu0 0.0
    %2876 = vmatpush1.msra.mxu0 0.0
    %2877 = vmatprep.subr.mxu0 0.0
    %2878 = vmatpush1.msra.mxu0 0.0
    %2879 = vmatprep.subr.mxu0 0.0
    %2880 = vmatpush1.msra.mxu0 0.0
    %2881 = vmatprep.subr.mxu0 0.0
    %2882 = vmatpush1.msra.mxu0 0.0
    %2883 = vmatprep.subr.mxu0 0.0
    %2884 = vmatpush1.msra.mxu0 0.0
    %2885 = vmatprep.subr.mxu0 0.0
    %2886 = vmatpush1.msra.mxu0 0.0
    %2887 = vmatprep.subr.mxu0 0.0
    %2888 = vmatpush1.msra.mxu0 0.0
    %2889 = vmatprep.subr.mxu0 0.0
    %2890 = vmatpush1.msra.mxu0 0.0
    %2891 = vmatprep.subr.mxu0 0.0
    %2892 = vmatpush1.msra.mxu0 0.0
    %2893 = vmatprep.subr.mxu0 0.0
    %2894 = vmatpush1.msra.mxu0 0.0
    %2895 = vmatprep.subr.mxu0 0.0
    %2896 = vmatpush1.msra.mxu0 0.0
    %2897 = vmatprep.subr.mxu0 0.0
    %2898 = vmatpush1.msra.mxu0 0.0
    %2899 = vmatprep.subr.mxu0 0.0
    %2900 = vmatpush1.msra.mxu0 0.0
    %2901 = vmatprep.subr.mxu0 0.0
    %2902 = vmatpush1.msra.mxu0 0.0
    %2903 = vmatprep.subr.mxu0 0.0
    %2904 = vmatpush1.msra.mxu0 0.0
    %2905 = vmatprep.subr.mxu0 0.0
    %2906 = vmatpush1.msra.mxu0 0.0
    %2907 = vmatprep.subr.mxu0 0.0
    %2908 = vmatpush1.msra.mxu0 0.0
    %2909 = vmatprep.mubr.f32.mxu0 0.0
    %2910 = vmatmul.mubr.f32.gmra.mrb[0].mxu0 %v2843
    %v2911 = vpop.f32.mrb[0].mxu0
    %v2912 = vadd.f32 %v181, %v2911
    %v2913 = vpop.f32.mrb[0].mxu0
    %2914 = vdwg.mxu0
    %v2915 = vld [vmem:[%s9] sm:$0x1]
    %v2917 = vlaneseq
    %v2918 = vshrl.u32 %v2917, 7
    %v2919 = vsub.s32 0, %v2918
    %v2920 = vrot.slane %v2915, %v2919
    %v2922 = vadd.f32 %v2912, %v2920
    %v2923 = vmax.f32 %v2922, 0.0
    %v2925 = vsel %vm284, %v2923, 0
    %2927 = vmatprep.subr.mxu0 0.0
    %2928 = vmatpush1.msra.mxu0 %v185
    %2929 = vmatprep.subr.mxu0 0.0
    %2930 = vmatpush1.msra.mxu0 %v186
    %2931 = vmatprep.subr.mxu0 0.0
    %2932 = vmatpush1.msra.mxu0 %v187
    %2933 = vmatprep.subr.mxu0 0.0
    %2934 = vmatpush1.msra.mxu0 %v188
    %2935 = vmatprep.subr.mxu0 0.0
    %2936 = vmatpush1.msra.mxu0 0.0
    %2937 = vmatprep.subr.mxu0 0.0
    %2938 = vmatpush1.msra.mxu0 0.0
    %2939 = vmatprep.subr.mxu0 0.0
    %2940 = vmatpush1.msra.mxu0 0.0
    %2941 = vmatprep.subr.mxu0 0.0
    %2942 = vmatpush1.msra.mxu0 0.0
    %2943 = vmatprep.subr.mxu0 0.0
    %2944 = vmatpush1.msra.mxu0 0.0
    %2945 = vmatprep.subr.mxu0 0.0
    %2946 = vmatpush1.msra.mxu0 0.0
    %2947 = vmatprep.subr.mxu0 0.0
    %2948 = vmatpush1.msra.mxu0 0.0
    %2949 = vmatprep.subr.mxu0 0.0
    %2950 = vmatpush1.msra.mxu0 0.0
    %2951 = vmatprep.subr.mxu0 0.0
    %2952 = vmatpush1.msra.mxu0 0.0
    %2953 = vmatprep.subr.mxu0 0.0
    %2954 = vmatpush1.msra.mxu0 0.0
    %2955 = vmatprep.subr.mxu0 0.0
    %2956 = vmatpush1.msra.mxu0 0.0
    %2957 = vmatprep.subr.mxu0 0.0
    %2958 = vmatpush1.msra.mxu0 0.0
    %2959 = vmatprep.subr.mxu0 0.0
    %2960 = vmatpush1.msra.mxu0 0.0
    %2961 = vmatprep.subr.mxu0 0.0
    %2962 = vmatpush1.msra.mxu0 0.0
    %2963 = vmatprep.subr.mxu0 0.0
    %2964 = vmatpush1.msra.mxu0 0.0
    %2965 = vmatprep.subr.mxu0 0.0
    %2966 = vmatpush1.msra.mxu0 0.0
    %2967 = vmatprep.subr.mxu0 0.0
    %2968 = vmatpush1.msra.mxu0 0.0
    %2969 = vmatprep.subr.mxu0 0.0
    %2970 = vmatpush1.msra.mxu0 0.0
    %2971 = vmatprep.subr.mxu0 0.0
    %2972 = vmatpush1.msra.mxu0 0.0
    %2973 = vmatprep.subr.mxu0 0.0
    %2974 = vmatpush1.msra.mxu0 0.0
    %2975 = vmatprep.subr.mxu0 0.0
    %2976 = vmatpush1.msra.mxu0 0.0
    %2977 = vmatprep.subr.mxu0 0.0
    %2978 = vmatpush1.msra.mxu0 0.0
    %2979 = vmatprep.subr.mxu0 0.0
    %2980 = vmatpush1.msra.mxu0 0.0
    %2981 = vmatprep.subr.mxu0 0.0
    %2982 = vmatpush1.msra.mxu0 0.0
    %2983 = vmatprep.subr.mxu0 0.0
    %2984 = vmatpush1.msra.mxu0 0.0
    %2985 = vmatprep.subr.mxu0 0.0
    %2986 = vmatpush1.msra.mxu0 0.0
    %2987 = vmatprep.subr.mxu0 0.0
    %2988 = vmatpush1.msra.mxu0 0.0
    %2989 = vmatprep.subr.mxu0 0.0
    %2990 = vmatpush1.msra.mxu0 0.0
    %2991 = vmatprep.mubr.f32.mxu0 0.0
    %2992 = vmatmul.mubr.f32.gmra.mrb[0].mxu0 %v2925
    %v2993 = vpop.f32.mrb[0].mxu0
    %v2994 = vadd.f32 %v282, %v2993
    %v2995 = vpop.f32.mrb[0].mxu0
    %2996 = vdwg.mxu0
    %s2997 = sld [smem:[#allocation2]]
    %v2998 = vstv %s2997
    %v2999 = vmul.f32 %v2998, %v2841
    %s3000 = sld [smem:[#allocation4]]
    %v3001 = vstv %s3000
    %v3002 = vmul.f32 %v3001, %v2994
    %v3003 = vsub.f32 %v2999, %v3002
    %s3004 = sld [smem:[#allocation6]]
    %v3005 = vstv %s3004
    %v3006 = vmul.f32 %v3005, %v3003
    %s3007 = sld [smem:[#allocation7]]
    %v3008 = vstv %s3007
    %v3009 = vmul.f32 %v3008, %v2841
    %v3010 = vadd.f32 %v3006, %v3009
    %s3011 = sld [smem:[#allocation9]]
    %v3012 = vld [vmem:[%s12] sm:$0xff]
    %v3013 = vstv %s3011
    %v3014 = vmul.f32 %v3013, %v3012
    %v3015 = vadd.f32 %v3010, %v3014
    %3016 = vst.msk [vmem:[%s13] sm:$0xff] %vm191, %v3015
    // Predicated region
    $region74: #{tpu_custom_call.1} parent=1 // pred_check
      _
    $region75: #{tpu_custom_call.1} parent=1 // pred_check_branch
      %3018 = sbr.rel (0) target = $region77
    $region76: #{tpu_custom_call.1} parent=1 // pred_region
      _
    $region77: #{tpu_custom_call.1} parent=1 // pred_fallthru
      _
    // Predicated region
    $region78: #{tpu_custom_call.1} parent=1 // pred_check
      _
    $region79: #{tpu_custom_call.1} parent=1 // pred_check_branch
      %3020 = sbr.rel (0) target = $region81
    $region80: #{tpu_custom_call.1} parent=1 // pred_region
      _
    $region81: #{tpu_custom_call.1} parent=1 // pred_fallthru
      _
    %3021 = vsyncpa [#allocation3], 1
    %3022 = vsyncpa [#allocation5], 1
    %3023 = vsyncpa [#allocation8], 1

</llo_original>
